<compile_context>
chip_gen: v6e
topology: v6e:2x2x1
jax: 0.10.0
libtpu: 0.0.40
codegen_flags: <defaults>
</compile_context>

<pallas_src>
import jax
import jax.numpy as jnp
from jax import lax
from jax.experimental import pallas as pl
from jax.experimental.pallas import tpu as pltpu

GROUPS = 32
EPS = 1e-5


def _silu(v):
    return v * jax.nn.sigmoid(v)


def residual_block_kernel(x_ref, t_ref,
                          g1_ref, be1_ref, gm1_ref, w1_ref, b1_ref,
                          tw_ref, tb_ref,
                          g2_ref, be2_ref, gm2_ref, w2_ref, b2_ref,
                          ws_ref, wsb_ref,
                          out_ref,
                          pad1_ref, pad2_ref):
    bb, H, W, cin = x_ref.shape
    cout = w1_ref.shape[1]
    HW = H * W
    M = bb * HW

    x3 = x_ref[...].astype(jnp.float32).reshape(bb, HW, cin)

    def group_norm_silu(v3, gmat_ref, gamma_ref, beta_ref, c):
        """GroupNorm(32, c) + SiLU on a (bb, H*W, c) slab, per-image stats.

        Sums are f32 VPU/XLU reductions (no selector matmuls); the only MXU
        work is the tiny (bb, c) @ (c, c) group-membership aggregation.
        Variance uses mean-centered values (no E[x^2] - mean^2 cancellation).
        """
        n = (c // GROUPS) * HW
        s1 = jnp.sum(v3, axis=1)                                        # (bb, c)
        mean = jnp.dot(s1, gmat_ref[...],
                       preferred_element_type=jnp.float32) * (1.0 / n)  # (bb, c)
        d = v3 - mean[:, None, :]
        s2 = jnp.sum(d * d, axis=1)                                     # (bb, c)
        var = jnp.dot(s2, gmat_ref[...],
                      preferred_element_type=jnp.float32) * (1.0 / n)
        scale = lax.rsqrt(var + EPS) * gamma_ref[...]                   # (bb, c)
        return _silu(d * scale[:, None, :] + beta_ref[...])

    def conv3x3(pad_ref, act3, w_ref, c):
        """3x3 conv (pad=1) as one im2col matmul (M, 9c) @ (9c, cout), bf16 taps.

        bf16 pad scratch; the interior sits at W-offset 2 so the packed-bf16
        store is sublane-aligned.  One dense memset for the zero border; the
        interior is fully rewritten every grid step (megacore-safe).
        """
        pad_ref[...] = jnp.zeros_like(pad_ref)
        pad_ref[:, 1:H + 1, 2:W + 2, :] = (
            act3.astype(jnp.bfloat16).reshape(bb, H, W, c))
        cols = [pad_ref[:, dy:dy + H, dx + 1:dx + 1 + W, :].reshape(M, c)
                for dy in range(3) for dx in range(3)]
        col = jnp.concatenate(cols, axis=1)                             # (M, 9c) bf16
        y = jnp.dot(col, w_ref[...], preferred_element_type=jnp.float32)
        return y.reshape(bb, HW, cout)

    # ---- branch 1: GroupNorm -> SiLU -> Conv3x3 ----
    a1 = group_norm_silu(x3, gm1_ref, g1_ref, be1_ref, cin)
    h = conv3x3(pad1_ref, a1, w1_ref, cin) + b1_ref[...]                # (bb, HW, cout)

    # ---- time embedding: SiLU -> Linear, broadcast over (H, W) on the VPU ----
    t_row = _silu(t_ref[...].reshape(bb, t_ref.shape[2]).astype(jnp.float32))
    temb = jnp.dot(t_row.astype(jnp.bfloat16), tw_ref[...],
                   preferred_element_type=jnp.float32) + tb_ref[...]    # (bb, cout)
    h = h + temb[:, None, :]

    # ---- branch 2: GroupNorm -> SiLU -> Dropout(identity) -> Conv3x3 ----
    # TODO(synk): nn.Dropout uses eval-mode semantics (identity); training-mode
    # RNG dropout (pltpu.prng_seed / prng_random_bits) is not implemented.
    a2 = group_norm_silu(h, gm2_ref, g2_ref, be2_ref, cout)
    h2 = conv3x3(pad2_ref, a2, w2_ref, cout) + b2_ref[...]

    # ---- shortcut: 1x1 conv ----
    sc = jnp.dot(x3.reshape(M, cin).astype(jnp.bfloat16), ws_ref[...],
                 preferred_element_type=jnp.float32).reshape(bb, HW, cout)
    res = h2 + sc + wsb_ref[...]                                        # (bb, HW, cout)

    # ---- lane-dense store: one (bb, H, W*cout) slab per grid step ----
    # Explicit slice + lane-concat relayout (keeps to vanilla slice/concat ops
    # rather than a general sublane->lane reshape); the store itself is dense,
    # W*cout lanes wide, so the writeback DMA is lane-dense too.
    res4 = res.reshape(bb, H, W, cout)
    out_ref[...] = jnp.concatenate(
        [res4[:, :, w, :] for w in range(W)], axis=-1).astype(out_ref.dtype)


def _vmem_estimate_bytes(bb, H, W, cin, cout):
    """Rough per-step VMEM need: im2col column + bf16 pads + live f32 slabs +
    double-buffered x/out blocks."""
    c = max(cin, cout)
    M = bb * H * W
    col = M * 9 * c * 2                                     # bf16 im2col column
    pads = bb * (H + 2) * (W + 4) * (cin + cout) * 2        # bf16 pad scratch
    acts = 4 * M * c * 4                                    # live f32 activations
    io = 2 * bb * H * W * (cin + cout) * 4                  # double-buffered x/out
    return col + pads + acts + io


def _pick_bb(B, H, W, cin, cout, m_target=256, vmem_budget=24 << 20):
    """Batch-block size: grow M = bb*H*W toward the 256-wide v6e/v7x MXU, but
    keep >= 2 grid steps when the batch allows (v7x has two TensorCores and a
    1-step grid also disables DMA/compute pipelining), and respect a VMEM
    budget that fits v7x's 64 MiB physical VMEM."""
    bb = 1
    while (B % (2 * bb) == 0
           and 2 * bb <= B // 2
           and bb * H * W < m_target
           and _vmem_estimate_bytes(2 * bb, H, W, cin, cout) <= vmem_budget):
        bb *= 2
    return bb


def residual_block(x_nchw, t, params, bb=None):
    B, Cin, H, W = x_nchw.shape
    Cout = params["b1"].shape[-1]
    Tc = t.shape[1]

    if bb is None:
        bb = _pick_bb(B, H, W, Cin, Cout)
    assert B % bb == 0

    x = jnp.transpose(x_nchw, (0, 2, 3, 1))                  # NHWC
    t3 = t.reshape(B, 1, Tc)

    def full_spec(shape):
        return pl.BlockSpec(shape, lambda b, _n=len(shape): (0,) * _n)

    # NOTE: constant weight/bias blocks are left with the default pipelining;
    # single-buffering them (pl.Buffered(1)) is a further VMEM saving at real
    # channel counts.
    in_specs = [
        pl.BlockSpec((bb, H, W, Cin), lambda b: (b, 0, 0, 0)),   # x
        pl.BlockSpec((bb, 1, Tc), lambda b: (b, 0, 0)),          # t
        full_spec((1, Cin)), full_spec((1, Cin)), full_spec((Cin, Cin)),
        full_spec((9 * Cin, Cout)), full_spec((1, Cout)),
        full_spec((Tc, Cout)), full_spec((1, Cout)),
        full_spec((1, Cout)), full_spec((1, Cout)), full_spec((Cout, Cout)),
        full_spec((9 * Cout, Cout)), full_spec((1, Cout)),
        full_spec((Cin, Cout)), full_spec((1, Cout)),
    ]

    vmem_limit = int(min(56 << 20,
                         max(32 << 20,
                             2 * _vmem_estimate_bytes(bb, H, W, Cin, Cout))))

    out_flat = pl.pallas_call(
        residual_block_kernel,
        out_shape=jax.ShapeDtypeStruct((B, H, W * Cout), x.dtype),   # lane-dense
        grid_spec=pltpu.PrefetchScalarGridSpec(
            num_scalar_prefetch=0,
            grid=(B // bb,),
            in_specs=in_specs,
            out_specs=pl.BlockSpec((bb, H, W * Cout), lambda b: (b, 0, 0)),
            scratch_shapes=[
                pltpu.VMEM((bb, H + 2, W + 4, Cin), jnp.bfloat16),
                pltpu.VMEM((bb, H + 2, W + 4, Cout), jnp.bfloat16),
            ]),
        compiler_params=pltpu.CompilerParams(
            dimension_semantics=("parallel",),
            vmem_limit_bytes=vmem_limit),
    )(x, t3,
      params["g1"], params["be1"], params["A1"], params["w1_k"], params["b1"],
      params["tw_k"], params["tb"],
      params["g2"], params["be2"], params["A2"], params["w2_k"], params["b2"],
      params["ws_k"], params["wsb"])

    out_nhwc = out_flat.reshape(B, H, W, Cout)
    return jnp.transpose(out_nhwc, (0, 3, 1, 2))              # back to NCHW


def init_params(key, cin, cout, tc):
    ks = jax.random.split(key, 12)

    def conv_w(k, co, ci, kh, kw):
        fan_in = ci * kh * kw
        return jax.random.normal(k, (co, ci, kh, kw), jnp.float32) / jnp.sqrt(fan_in)

    w1_oihw = conv_w(ks[0], cout, cin, 3, 3)
    b1 = 0.02 * jax.random.normal(ks[1], (cout,), jnp.float32)
    w2_oihw = conv_w(ks[2], cout, cout, 3, 3)
    b2 = 0.02 * jax.random.normal(ks[3], (cout,), jnp.float32)
    tw = jax.random.normal(ks[4], (tc, cout), jnp.float32) / jnp.sqrt(tc)
    tb = 0.02 * jax.random.normal(ks[5], (cout,), jnp.float32)
    ws_oihw = conv_w(ks[6], cout, cin, 1, 1)
    wsb = 0.02 * jax.random.normal(ks[7], (cout,), jnp.float32)
    g1 = 1.0 + 0.05 * jax.random.normal(ks[8], (cin,), jnp.float32)
    be1 = 0.05 * jax.random.normal(ks[9], (cin,), jnp.float32)
    g2 = 1.0 + 0.05 * jax.random.normal(ks[10], (cout,), jnp.float32)
    be2 = 0.05 * jax.random.normal(ks[11], (cout,), jnp.float32)

    def group_mat(c):
        gid = jnp.arange(c) // (c // GROUPS)
        return (gid[:, None] == gid[None, :]).astype(jnp.float32)

    def im2col_w(w_oihw):
        # (Cout, Cin, 3, 3) -> (3, 3, Cin, Cout) -> (9*Cin, Cout), tap-major,
        # matching the kernel's concat order k = dy*3 + dx with Cin innermost.
        co, ci = w_oihw.shape[0], w_oihw.shape[1]
        return jnp.transpose(w_oihw, (2, 3, 1, 0)).reshape(9 * ci, co)

    return {
        # kernel-layout params (matmul weights pre-cast to bf16)
        "g1": g1[None, :], "be1": be1[None, :], "A1": group_mat(cin),
        "w1_k": im2col_w(w1_oihw).astype(jnp.bfloat16), "b1": b1[None, :],
        "tw_k": tw.astype(jnp.bfloat16), "tb": tb[None, :],
        "g2": g2[None, :], "be2": be2[None, :], "A2": group_mat(cout),
        "w2_k": im2col_w(w2_oihw).astype(jnp.bfloat16), "b2": b2[None, :],
        "ws_k": jnp.transpose(ws_oihw[:, :, 0, 0], (1, 0)).astype(jnp.bfloat16),
        "wsb": wsb[None, :],
        # reference-layout params (f32)
        "w1_oihw": w1_oihw, "w2_oihw": w2_oihw, "ws_oihw": ws_oihw,
        "tw": tw, "b1_v": b1, "b2_v": b2, "tb_v": tb, "wsb_v": wsb,
        "g1_v": g1, "be1_v": be1, "g2_v": g2, "be2_v": be2,
    }


def ref_forward(x, t, p):
    """Pure-JAX reference mirroring the PyTorch module (NCHW, f32)."""
    def gn(v, gamma, beta):
        B, C, H, W = v.shape
        vg = v.reshape(B, GROUPS, C // GROUPS, H, W)
        mean = vg.mean(axis=(2, 3, 4), keepdims=True)
        var = vg.var(axis=(2, 3, 4), keepdims=True)
        vn = ((vg - mean) / jnp.sqrt(var + EPS)).reshape(B, C, H, W)
        return vn * gamma[None, :, None, None] + beta[None, :, None, None]

    def conv(v, w, b, pad):
        y = lax.conv_general_dilated(v, w, (1, 1), ((pad, pad), (pad, pad)),
                                     dimension_numbers=("NCHW", "OIHW", "NCHW"))
        return y + b[None, :, None, None]

    h = conv(_silu(gn(x, p["g1_v"], p["be1_v"])), p["w1_oihw"], p["b1_v"], 1)
    temb = _silu(t) @ p["tw"] + p["tb_v"]
    h = h + temb[:, :, None, None]
    h = conv(_silu(gn(h, p["g2_v"], p["be2_v"])), p["w2_oihw"], p["b2_v"], 1)
    sc = conv(x, p["ws_oihw"], p["wsb_v"], 0)
    return h + sc


if __name__ == "__main__":
    # GroupNorm(32, C) requires C to be a multiple of 32, hence Cin=32, Cout=64.
    B, Cin, Cout, Tc, H, W = 2, 32, 64, 32, 8, 8
    key = jax.random.PRNGKey(0)
    kx, kt, kp = jax.random.split(key, 3)
    x = jax.random.normal(kx, (B, Cin, H, W), jnp.float32)
    t = jax.random.normal(kt, (B, Tc), jnp.float32)
    params = init_params(kp, Cin, Cout, Tc)

    out = jax.block_until_ready(residual_block(x, t, params))
    ref = jax.block_until_ready(ref_forward(x, t, params))

    assert out.shape == (B, Cout, H, W)
    max_err = float(jnp.max(jnp.abs(out - ref)))
    if not max_err < 5e-2:
        raise AssertionError(f"kernel/reference mismatch: max abs err = {max_err}")
    print("KERNEL_OK")
</pallas_src>

<mosaic_0001>
module attributes {stable_mosaic.version = 11 : i64} {
  func.func @residual_block_kernel(%arg0: i32, %arg1: memref<1x8x8x32xf32, #tpu.memory_space<vmem>>, %arg2: memref<1x1x32xf32, #tpu.memory_space<vmem>>, %arg3: memref<1x32xf32, #tpu.memory_space<vmem>>, %arg4: memref<1x32xf32, #tpu.memory_space<vmem>>, %arg5: memref<32x32xf32, #tpu.memory_space<vmem>>, %arg6: memref<288x64xbf16, #tpu.memory_space<vmem>>, %arg7: memref<1x64xf32, #tpu.memory_space<vmem>>, %arg8: memref<32x64xbf16, #tpu.memory_space<vmem>>, %arg9: memref<1x64xf32, #tpu.memory_space<vmem>>, %arg10: memref<1x64xf32, #tpu.memory_space<vmem>>, %arg11: memref<1x64xf32, #tpu.memory_space<vmem>>, %arg12: memref<64x64xf32, #tpu.memory_space<vmem>>, %arg13: memref<576x64xbf16, #tpu.memory_space<vmem>>, %arg14: memref<1x64xf32, #tpu.memory_space<vmem>>, %arg15: memref<32x64xbf16, #tpu.memory_space<vmem>>, %arg16: memref<1x64xf32, #tpu.memory_space<vmem>>, %arg17: memref<1x8x512xf32, #tpu.memory_space<vmem>>, %arg18: memref<1x10x12x32xbf16, #tpu.memory_space<vmem>>, %arg19: memref<1x10x12x64xbf16, #tpu.memory_space<vmem>>) attributes {dimension_semantics = [#tpu.dimension_semantics<parallel>], iteration_bounds = array<i64: 2>, scalar_prefetch = 0 : i64, scratch_operands = 2 : i64, tpu.core_type = #tpu.core_type<tc>, window_params = [{transform_indices = @transform_0, window_bounds = array<i64: 1, 8, 8, 32>}, {transform_indices = @transform_1, window_bounds = array<i64: 1, 1, 32>}, {pipeline_mode = #tpu.pipeline_mode<synchronous>, transform_indices = @transform_2, window_bounds = array<i64: 1, 32>}, {pipeline_mode = #tpu.pipeline_mode<synchronous>, transform_indices = @transform_3, window_bounds = array<i64: 1, 32>}, {pipeline_mode = #tpu.pipeline_mode<synchronous>, transform_indices = @transform_4, window_bounds = array<i64: 32, 32>}, {pipeline_mode = #tpu.pipeline_mode<synchronous>, transform_indices = @transform_5, window_bounds = array<i64: 288, 64>}, {pipeline_mode = #tpu.pipeline_mode<synchronous>, transform_indices = @transform_6, window_bounds = array<i64: 1, 64>}, {pipeline_mode = #tpu.pipeline_mode<synchronous>, transform_indices = @transform_7, window_bounds = array<i64: 32, 64>}, {pipeline_mode = #tpu.pipeline_mode<synchronous>, transform_indices = @transform_8, window_bounds = array<i64: 1, 64>}, {pipeline_mode = #tpu.pipeline_mode<synchronous>, transform_indices = @transform_9, window_bounds = array<i64: 1, 64>}, {pipeline_mode = #tpu.pipeline_mode<synchronous>, transform_indices = @transform_10, window_bounds = array<i64: 1, 64>}, {pipeline_mode = #tpu.pipeline_mode<synchronous>, transform_indices = @transform_11, window_bounds = array<i64: 64, 64>}, {pipeline_mode = #tpu.pipeline_mode<synchronous>, transform_indices = @transform_12, window_bounds = array<i64: 576, 64>}, {pipeline_mode = #tpu.pipeline_mode<synchronous>, transform_indices = @transform_13, window_bounds = array<i64: 1, 64>}, {pipeline_mode = #tpu.pipeline_mode<synchronous>, transform_indices = @transform_14, window_bounds = array<i64: 32, 64>}, {pipeline_mode = #tpu.pipeline_mode<synchronous>, transform_indices = @transform_15, window_bounds = array<i64: 1, 64>}, {transform_indices = @transform_16, window_bounds = array<i64: 1, 8, 512>}]} {
    %c0 = arith.constant 0 : index
    %c0_0 = arith.constant 0 : index
    %c0_1 = arith.constant 0 : index
    %c0_2 = arith.constant 0 : index
    %0 = vector.load %arg1[%c0, %c0_0, %c0_1, %c0_2] : memref<1x8x8x32xf32, #tpu.memory_space<vmem>>, vector<1x8x8x32xf32>
    %1 = vector.shape_cast %0 : vector<1x8x8x32xf32> to vector<1x64x32xf32>
    %cst = arith.constant dense<0.000000e+00> : vector<1x32xf32>
    %2 = vector.multi_reduction <add>, %1, %cst [1] : vector<1x64x32xf32> to vector<1x32xf32>
    %c0_3 = arith.constant 0 : index
    %c0_4 = arith.constant 0 : index
    %3 = vector.load %arg5[%c0_3, %c0_4] : memref<32x32xf32, #tpu.memory_space<vmem>>, vector<32x32xf32>
    %cst_5 = arith.constant dense<0.000000e+00> : vector<1x32xf32>
    %4 = tpu.matmul %2, %3, %cst_5 {dimension_numbers = #tpu.dot_dimension_numbers<[1], [0], [0], [1], [0, 0, 1, 1], [], []>} : vector<1x32xf32>, vector<32x32xf32>, vector<1x32xf32> -> vector<1x32xf32>
    %cst_6 = arith.constant 1.562500e-02 : f32
    %5 = vector.broadcast %cst_6 : f32 to vector<1x32xf32>
    %6 = arith.mulf %4, %5 : vector<1x32xf32>
    %7 = vector.shape_cast %6 : vector<1x32xf32> to vector<1x1x32xf32>
    %8 = vector.broadcast %7 : vector<1x1x32xf32> to vector<1x64x32xf32>
    %9 = arith.subf %1, %8 : vector<1x64x32xf32>
    %10 = arith.mulf %9, %9 : vector<1x64x32xf32>
    %cst_7 = arith.constant dense<0.000000e+00> : vector<1x32xf32>
    %11 = vector.multi_reduction <add>, %10, %cst_7 [1] : vector<1x64x32xf32> to vector<1x32xf32>
    %c0_8 = arith.constant 0 : index
    %c0_9 = arith.constant 0 : index
    %12 = vector.load %arg5[%c0_8, %c0_9] : memref<32x32xf32, #tpu.memory_space<vmem>>, vector<32x32xf32>
    %cst_10 = arith.constant dense<0.000000e+00> : vector<1x32xf32>
    %13 = tpu.matmul %11, %12, %cst_10 {dimension_numbers = #tpu.dot_dimension_numbers<[1], [0], [0], [1], [0, 0, 1, 1], [], []>} : vector<1x32xf32>, vector<32x32xf32>, vector<1x32xf32> -> vector<1x32xf32>
    %cst_11 = arith.constant 1.562500e-02 : f32
    %14 = vector.broadcast %cst_11 : f32 to vector<1x32xf32>
    %15 = arith.mulf %13, %14 : vector<1x32xf32>
    %cst_12 = arith.constant 9.99999974E-6 : f32
    %16 = vector.broadcast %cst_12 : f32 to vector<1x32xf32>
    %17 = arith.addf %15, %16 : vector<1x32xf32>
    %18 = math.rsqrt %17 : vector<1x32xf32>
    %c0_13 = arith.constant 0 : index
    %c0_14 = arith.constant 0 : index
    %19 = vector.load %arg3[%c0_13, %c0_14] : memref<1x32xf32, #tpu.memory_space<vmem>>, vector<1x32xf32>
    %20 = arith.mulf %18, %19 : vector<1x32xf32>
    %21 = vector.shape_cast %20 : vector<1x32xf32> to vector<1x1x32xf32>
    %22 = vector.broadcast %21 : vector<1x1x32xf32> to vector<1x64x32xf32>
    %23 = arith.mulf %9, %22 : vector<1x64x32xf32>
    %c0_15 = arith.constant 0 : index
    %c0_16 = arith.constant 0 : index
    %24 = vector.load %arg4[%c0_15, %c0_16] : memref<1x32xf32, #tpu.memory_space<vmem>>, vector<1x32xf32>
    %25 = vector.shape_cast %24 : vector<1x32xf32> to vector<1x1x32xf32>
    %26 = vector.broadcast %25 : vector<1x1x32xf32> to vector<1x64x32xf32>
    %27 = arith.addf %23, %26 : vector<1x64x32xf32>
    %28 = arith.negf %27 : vector<1x64x32xf32>
    %29 = math.exp %28 : vector<1x64x32xf32>
    %cst_17 = arith.constant 1.000000e+00 : f32
    %30 = vector.broadcast %cst_17 : f32 to vector<1x64x32xf32>
    %31 = arith.addf %30, %29 : vector<1x64x32xf32>
    %32 = arith.divf %30, %31 : vector<1x64x32xf32>
    %33 = arith.mulf %27, %32 : vector<1x64x32xf32>
    %cst_18 = arith.constant 0.000000e+00 : bf16
    %34 = vector.broadcast %cst_18 : bf16 to vector<1x10x12x32xbf16>
    %c0_19 = arith.constant 0 : index
    %c0_20 = arith.constant 0 : index
    %c0_21 = arith.constant 0 : index
    %c0_22 = arith.constant 0 : index
    %35 = vector.load %arg18[%c0_19, %c0_20, %c0_21, %c0_22] : memref<1x10x12x32xbf16, #tpu.memory_space<vmem>>, vector<1x10x12x32xbf16>
    tpu.vector_store %arg18[%c0_19, %c0_20, %c0_21, %c0_22], %34 {strides = array<i32>} : memref<1x10x12x32xbf16, #tpu.memory_space<vmem>>, vector<1x10x12x32xbf16>,
    %36 = arith.truncf %33 : vector<1x64x32xf32> to vector<1x64x32xbf16>
    %37 = vector.shape_cast %36 : vector<1x64x32xbf16> to vector<1x8x8x32xbf16>
    %c0_23 = arith.constant 0 : index
    %c1 = arith.constant 1 : index
    %c2 = arith.constant 2 : index
    %c0_24 = arith.constant 0 : index
    %38 = vector.load %arg18[%c0_23, %c1, %c2, %c0_24] : memref<1x10x12x32xbf16, #tpu.memory_space<vmem>>, vector<1x8x8x32xbf16>
    tpu.vector_store %arg18[%c0_23, %c1, %c2, %c0_24], %37 {strides = array<i32>} : memref<1x10x12x32xbf16, #tpu.memory_space<vmem>>, vector<1x8x8x32xbf16>,
    %c0_25 = arith.constant 0 : index
    %c0_26 = arith.constant 0 : index
    %c1_27 = arith.constant 1 : index
    %c0_28 = arith.constant 0 : index
    %39 = vector.load %arg18[%c0_25, %c0_26, %c1_27, %c0_28] : memref<1x10x12x32xbf16, #tpu.memory_space<vmem>>, vector<1x8x8x32xbf16>
    %40 = vector.shape_cast %39 : vector<1x8x8x32xbf16> to vector<64x32xbf16>
    %c0_29 = arith.constant 0 : index
    %c0_30 = arith.constant 0 : index
    %c2_31 = arith.constant 2 : index
    %c0_32 = arith.constant 0 : index
    %41 = vector.load %arg18[%c0_29, %c0_30, %c2_31, %c0_32] : memref<1x10x12x32xbf16, #tpu.memory_space<vmem>>, vector<1x8x8x32xbf16>
    %42 = vector.shape_cast %41 : vector<1x8x8x32xbf16> to vector<64x32xbf16>
    %c0_33 = arith.constant 0 : index
    %c0_34 = arith.constant 0 : index
    %c3 = arith.constant 3 : index
    %c0_35 = arith.constant 0 : index
    %43 = vector.load %arg18[%c0_33, %c0_34, %c3, %c0_35] : memref<1x10x12x32xbf16, #tpu.memory_space<vmem>>, vector<1x8x8x32xbf16>
    %44 = vector.shape_cast %43 : vector<1x8x8x32xbf16> to vector<64x32xbf16>
    %c0_36 = arith.constant 0 : index
    %c1_37 = arith.constant 1 : index
    %c1_38 = arith.constant 1 : index
    %c0_39 = arith.constant 0 : index
    %45 = vector.load %arg18[%c0_36, %c1_37, %c1_38, %c0_39] : memref<1x10x12x32xbf16, #tpu.memory_space<vmem>>, vector<1x8x8x32xbf16>
    %46 = vector.shape_cast %45 : vector<1x8x8x32xbf16> to vector<64x32xbf16>
    %c0_40 = arith.constant 0 : index
    %c1_41 = arith.constant 1 : index
    %c2_42 = arith.constant 2 : index
    %c0_43 = arith.constant 0 : index
    %47 = vector.load %arg18[%c0_40, %c1_41, %c2_42, %c0_43] : memref<1x10x12x32xbf16, #tpu.memory_space<vmem>>, vector<1x8x8x32xbf16>
    %48 = vector.shape_cast %47 : vector<1x8x8x32xbf16> to vector<64x32xbf16>
    %c0_44 = arith.constant 0 : index
    %c1_45 = arith.constant 1 : index
    %c3_46 = arith.constant 3 : index
    %c0_47 = arith.constant 0 : index
    %49 = vector.load %arg18[%c0_44, %c1_45, %c3_46, %c0_47] : memref<1x10x12x32xbf16, #tpu.memory_space<vmem>>, vector<1x8x8x32xbf16>
    %50 = vector.shape_cast %49 : vector<1x8x8x32xbf16> to vector<64x32xbf16>
    %c0_48 = arith.constant 0 : index
    %c2_49 = arith.constant 2 : index
    %c1_50 = arith.constant 1 : index
    %c0_51 = arith.constant 0 : index
    %51 = vector.load %arg18[%c0_48, %c2_49, %c1_50, %c0_51] : memref<1x10x12x32xbf16, #tpu.memory_space<vmem>>, vector<1x8x8x32xbf16>
    %52 = vector.shape_cast %51 : vector<1x8x8x32xbf16> to vector<64x32xbf16>
    %c0_52 = arith.constant 0 : index
    %c2_53 = arith.constant 2 : index
    %c2_54 = arith.constant 2 : index
    %c0_55 = arith.constant 0 : index
    %53 = vector.load %arg18[%c0_52, %c2_53, %c2_54, %c0_55] : memref<1x10x12x32xbf16, #tpu.memory_space<vmem>>, vector<1x8x8x32xbf16>
    %54 = vector.shape_cast %53 : vector<1x8x8x32xbf16> to vector<64x32xbf16>
    %c0_56 = arith.constant 0 : index
    %c2_57 = arith.constant 2 : index
    %c3_58 = arith.constant 3 : index
    %c0_59 = arith.constant 0 : index
    %55 = vector.load %arg18[%c0_56, %c2_57, %c3_58, %c0_59] : memref<1x10x12x32xbf16, #tpu.memory_space<vmem>>, vector<1x8x8x32xbf16>
    %56 = vector.shape_cast %55 : vector<1x8x8x32xbf16> to vector<64x32xbf16>
    %57 = tpu.concatenate %40, %42, %44, %46, %48, %50, %52, %54, %56 in 1 : vector<64x32xbf16>, vector<64x32xbf16>, vector<64x32xbf16>, vector<64x32xbf16>, vector<64x32xbf16>, vector<64x32xbf16>, vector<64x32xbf16>, vector<64x32xbf16>, vector<64x32xbf16> -> vector<64x288xbf16>
    %c0_60 = arith.constant 0 : index
    %c0_61 = arith.constant 0 : index
    %58 = vector.load %arg6[%c0_60, %c0_61] : memref<288x64xbf16, #tpu.memory_space<vmem>>, vector<288x64xbf16>
    %cst_62 = arith.constant dense<0.000000e+00> : vector<64x64xf32>
    %59 = tpu.matmul %57, %58, %cst_62 {dimension_numbers = #tpu.dot_dimension_numbers<[1], [0], [0], [1], [0, 0, 1, 1], [], []>} : vector<64x288xbf16>, vector<288x64xbf16>, vector<64x64xf32> -> vector<64x64xf32>
    %60 = vector.shape_cast %59 : vector<64x64xf32> to vector<1x64x64xf32>
    %c0_63 = arith.constant 0 : index
    %c0_64 = arith.constant 0 : index
    %61 = vector.load %arg7[%c0_63, %c0_64] : memref<1x64xf32, #tpu.memory_space<vmem>>, vector<1x64xf32>
    %62 = vector.shape_cast %61 : vector<1x64xf32> to vector<1x1x64xf32>
    %63 = vector.broadcast %62 : vector<1x1x64xf32> to vector<1x64x64xf32>
    %64 = arith.addf %60, %63 : vector<1x64x64xf32>
    %c0_65 = arith.constant 0 : index
    %c0_66 = arith.constant 0 : index
    %c0_67 = arith.constant 0 : index
    %65 = vector.load %arg2[%c0_65, %c0_66, %c0_67] : memref<1x1x32xf32, #tpu.memory_space<vmem>>, vector<1x1x32xf32>
    %66 = vector.shape_cast %65 : vector<1x1x32xf32> to vector<1x32xf32>
    %67 = arith.negf %66 : vector<1x32xf32>
    %68 = math.exp %67 : vector<1x32xf32>
    %cst_68 = arith.constant 1.000000e+00 : f32
    %69 = vector.broadcast %cst_68 : f32 to vector<1x32xf32>
    %70 = arith.addf %69, %68 : vector<1x32xf32>
    %71 = arith.divf %69, %70 : vector<1x32xf32>
    %72 = arith.mulf %66, %71 : vector<1x32xf32>
    %73 = arith.truncf %72 : vector<1x32xf32> to vector<1x32xbf16>
    %c0_69 = arith.constant 0 : index
    %c0_70 = arith.constant 0 : index
    %74 = vector.load %arg8[%c0_69, %c0_70] : memref<32x64xbf16, #tpu.memory_space<vmem>>, vector<32x64xbf16>
    %cst_71 = arith.constant dense<0.000000e+00> : vector<1x64xf32>
    %75 = tpu.matmul %73, %74, %cst_71 {dimension_numbers = #tpu.dot_dimension_numbers<[1], [0], [0], [1], [0, 0, 1, 1], [], []>} : vector<1x32xbf16>, vector<32x64xbf16>, vector<1x64xf32> -> vector<1x64xf32>
    %c0_72 = arith.constant 0 : index
    %c0_73 = arith.constant 0 : index
    %76 = vector.load %arg9[%c0_72, %c0_73] : memref<1x64xf32, #tpu.memory_space<vmem>>, vector<1x64xf32>
    %77 = arith.addf %75, %76 : vector<1x64xf32>
    %78 = vector.shape_cast %77 : vector<1x64xf32> to vector<1x1x64xf32>
    %79 = vector.broadcast %78 : vector<1x1x64xf32> to vector<1x64x64xf32>
    %80 = arith.addf %64, %79 : vector<1x64x64xf32>
    %cst_74 = arith.constant dense<0.000000e+00> : vector<1x64xf32>
    %81 = vector.multi_reduction <add>, %80, %cst_74 [1] : vector<1x64x64xf32> to vector<1x64xf32>
    %c0_75 = arith.constant 0 : index
    %c0_76 = arith.constant 0 : index
    %82 = vector.load %arg12[%c0_75, %c0_76] : memref<64x64xf32, #tpu.memory_space<vmem>>, vector<64x64xf32>
    %cst_77 = arith.constant dense<0.000000e+00> : vector<1x64xf32>
    %83 = tpu.matmul %81, %82, %cst_77 {dimension_numbers = #tpu.dot_dimension_numbers<[1], [0], [0], [1], [0, 0, 1, 1], [], []>} : vector<1x64xf32>, vector<64x64xf32>, vector<1x64xf32> -> vector<1x64xf32>
    %cst_78 = arith.constant 7.812500e-03 : f32
    %84 = vector.broadcast %cst_78 : f32 to vector<1x64xf32>
    %85 = arith.mulf %83, %84 : vector<1x64xf32>
    %86 = vector.shape_cast %85 : vector<1x64xf32> to vector<1x1x64xf32>
    %87 = vector.broadcast %86 : vector<1x1x64xf32> to vector<1x64x64xf32>
    %88 = arith.subf %80, %87 : vector<1x64x64xf32>
    %89 = arith.mulf %88, %88 : vector<1x64x64xf32>
    %cst_79 = arith.constant dense<0.000000e+00> : vector<1x64xf32>
    %90 = vector.multi_reduction <add>, %89, %cst_79 [1] : vector<1x64x64xf32> to vector<1x64xf32>
    %c0_80 = arith.constant 0 : index
    %c0_81 = arith.constant 0 : index
    %91 = vector.load %arg12[%c0_80, %c0_81] : memref<64x64xf32, #tpu.memory_space<vmem>>, vector<64x64xf32>
    %cst_82 = arith.constant dense<0.000000e+00> : vector<1x64xf32>
    %92 = tpu.matmul %90, %91, %cst_82 {dimension_numbers = #tpu.dot_dimension_numbers<[1], [0], [0], [1], [0, 0, 1, 1], [], []>} : vector<1x64xf32>, vector<64x64xf32>, vector<1x64xf32> -> vector<1x64xf32>
    %cst_83 = arith.constant 7.812500e-03 : f32
    %93 = vector.broadcast %cst_83 : f32 to vector<1x64xf32>
    %94 = arith.mulf %92, %93 : vector<1x64xf32>
    %cst_84 = arith.constant 9.99999974E-6 : f32
    %95 = vector.broadcast %cst_84 : f32 to vector<1x64xf32>
    %96 = arith.addf %94, %95 : vector<1x64xf32>
    %97 = math.rsqrt %96 : vector<1x64xf32>
    %c0_85 = arith.constant 0 : index
    %c0_86 = arith.constant 0 : index
    %98 = vector.load %arg10[%c0_85, %c0_86] : memref<1x64xf32, #tpu.memory_space<vmem>>, vector<1x64xf32>
    %99 = arith.mulf %97, %98 : vector<1x64xf32>
    %100 = vector.shape_cast %99 : vector<1x64xf32> to vector<1x1x64xf32>
    %101 = vector.broadcast %100 : vector<1x1x64xf32> to vector<1x64x64xf32>
    %102 = arith.mulf %88, %101 : vector<1x64x64xf32>
    %c0_87 = arith.constant 0 : index
    %c0_88 = arith.constant 0 : index
    %103 = vector.load %arg11[%c0_87, %c0_88] : memref<1x64xf32, #tpu.memory_space<vmem>>, vector<1x64xf32>
    %104 = vector.shape_cast %103 : vector<1x64xf32> to vector<1x1x64xf32>
    %105 = vector.broadcast %104 : vector<1x1x64xf32> to vector<1x64x64xf32>
    %106 = arith.addf %102, %105 : vector<1x64x64xf32>
    %107 = arith.negf %106 : vector<1x64x64xf32>
    %108 = math.exp %107 : vector<1x64x64xf32>
    %cst_89 = arith.constant 1.000000e+00 : f32
    %109 = vector.broadcast %cst_89 : f32 to vector<1x64x64xf32>
    %110 = arith.addf %109, %108 : vector<1x64x64xf32>
    %111 = arith.divf %109, %110 : vector<1x64x64xf32>
    %112 = arith.mulf %106, %111 : vector<1x64x64xf32>
    %cst_90 = arith.constant 0.000000e+00 : bf16
    %113 = vector.broadcast %cst_90 : bf16 to vector<1x10x12x64xbf16>
    %c0_91 = arith.constant 0 : index
    %c0_92 = arith.constant 0 : index
    %c0_93 = arith.constant 0 : index
    %c0_94 = arith.constant 0 : index
    %114 = vector.load %arg19[%c0_91, %c0_92, %c0_93, %c0_94] : memref<1x10x12x64xbf16, #tpu.memory_space<vmem>>, vector<1x10x12x64xbf16>
    tpu.vector_store %arg19[%c0_91, %c0_92, %c0_93, %c0_94], %113 {strides = array<i32>} : memref<1x10x12x64xbf16, #tpu.memory_space<vmem>>, vector<1x10x12x64xbf16>,
    %115 = arith.truncf %112 : vector<1x64x64xf32> to vector<1x64x64xbf16>
    %116 = vector.shape_cast %115 : vector<1x64x64xbf16> to vector<1x8x8x64xbf16>
    %c0_95 = arith.constant 0 : index
    %c1_96 = arith.constant 1 : index
    %c2_97 = arith.constant 2 : index
    %c0_98 = arith.constant 0 : index
    %117 = vector.load %arg19[%c0_95, %c1_96, %c2_97, %c0_98] : memref<1x10x12x64xbf16, #tpu.memory_space<vmem>>, vector<1x8x8x64xbf16>
    tpu.vector_store %arg19[%c0_95, %c1_96, %c2_97, %c0_98], %116 {strides = array<i32>} : memref<1x10x12x64xbf16, #tpu.memory_space<vmem>>, vector<1x8x8x64xbf16>,
    %c0_99 = arith.constant 0 : index
    %c0_100 = arith.constant 0 : index
    %c1_101 = arith.constant 1 : index
    %c0_102 = arith.constant 0 : index
    %118 = vector.load %arg19[%c0_99, %c0_100, %c1_101, %c0_102] : memref<1x10x12x64xbf16, #tpu.memory_space<vmem>>, vector<1x8x8x64xbf16>
    %119 = vector.shape_cast %118 : vector<1x8x8x64xbf16> to vector<64x64xbf16>
    %c0_103 = arith.constant 0 : index
    %c0_104 = arith.constant 0 : index
    %c2_105 = arith.constant 2 : index
    %c0_106 = arith.constant 0 : index
    %120 = vector.load %arg19[%c0_103, %c0_104, %c2_105, %c0_106] : memref<1x10x12x64xbf16, #tpu.memory_space<vmem>>, vector<1x8x8x64xbf16>
    %121 = vector.shape_cast %120 : vector<1x8x8x64xbf16> to vector<64x64xbf16>
    %c0_107 = arith.constant 0 : index
    %c0_108 = arith.constant 0 : index
    %c3_109 = arith.constant 3 : index
    %c0_110 = arith.constant 0 : index
    %122 = vector.load %arg19[%c0_107, %c0_108, %c3_109, %c0_110] : memref<1x10x12x64xbf16, #tpu.memory_space<vmem>>, vector<1x8x8x64xbf16>
    %123 = vector.shape_cast %122 : vector<1x8x8x64xbf16> to vector<64x64xbf16>
    %c0_111 = arith.constant 0 : index
    %c1_112 = arith.constant 1 : index
    %c1_113 = arith.constant 1 : index
    %c0_114 = arith.constant 0 : index
    %124 = vector.load %arg19[%c0_111, %c1_112, %c1_113, %c0_114] : memref<1x10x12x64xbf16, #tpu.memory_space<vmem>>, vector<1x8x8x64xbf16>
    %125 = vector.shape_cast %124 : vector<1x8x8x64xbf16> to vector<64x64xbf16>
    %c0_115 = arith.constant 0 : index
    %c1_116 = arith.constant 1 : index
    %c2_117 = arith.constant 2 : index
    %c0_118 = arith.constant 0 : index
    %126 = vector.load %arg19[%c0_115, %c1_116, %c2_117, %c0_118] : memref<1x10x12x64xbf16, #tpu.memory_space<vmem>>, vector<1x8x8x64xbf16>
    %127 = vector.shape_cast %126 : vector<1x8x8x64xbf16> to vector<64x64xbf16>
    %c0_119 = arith.constant 0 : index
    %c1_120 = arith.constant 1 : index
    %c3_121 = arith.constant 3 : index
    %c0_122 = arith.constant 0 : index
    %128 = vector.load %arg19[%c0_119, %c1_120, %c3_121, %c0_122] : memref<1x10x12x64xbf16, #tpu.memory_space<vmem>>, vector<1x8x8x64xbf16>
    %129 = vector.shape_cast %128 : vector<1x8x8x64xbf16> to vector<64x64xbf16>
    %c0_123 = arith.constant 0 : index
    %c2_124 = arith.constant 2 : index
    %c1_125 = arith.constant 1 : index
    %c0_126 = arith.constant 0 : index
    %130 = vector.load %arg19[%c0_123, %c2_124, %c1_125, %c0_126] : memref<1x10x12x64xbf16, #tpu.memory_space<vmem>>, vector<1x8x8x64xbf16>
    %131 = vector.shape_cast %130 : vector<1x8x8x64xbf16> to vector<64x64xbf16>
    %c0_127 = arith.constant 0 : index
    %c2_128 = arith.constant 2 : index
    %c2_129 = arith.constant 2 : index
    %c0_130 = arith.constant 0 : index
    %132 = vector.load %arg19[%c0_127, %c2_128, %c2_129, %c0_130] : memref<1x10x12x64xbf16, #tpu.memory_space<vmem>>, vector<1x8x8x64xbf16>
    %133 = vector.shape_cast %132 : vector<1x8x8x64xbf16> to vector<64x64xbf16>
    %c0_131 = arith.constant 0 : index
    %c2_132 = arith.constant 2 : index
    %c3_133 = arith.constant 3 : index
    %c0_134 = arith.constant 0 : index
    %134 = vector.load %arg19[%c0_131, %c2_132, %c3_133, %c0_134] : memref<1x10x12x64xbf16, #tpu.memory_space<vmem>>, vector<1x8x8x64xbf16>
    %135 = vector.shape_cast %134 : vector<1x8x8x64xbf16> to vector<64x64xbf16>
    %136 = tpu.concatenate %119, %121, %123, %125, %127, %129, %131, %133, %135 in 1 : vector<64x64xbf16>, vector<64x64xbf16>, vector<64x64xbf16>, vector<64x64xbf16>, vector<64x64xbf16>, vector<64x64xbf16>, vector<64x64xbf16>, vector<64x64xbf16>, vector<64x64xbf16> -> vector<64x576xbf16>
    %c0_135 = arith.constant 0 : index
    %c0_136 = arith.constant 0 : index
    %137 = vector.load %arg13[%c0_135, %c0_136] : memref<576x64xbf16, #tpu.memory_space<vmem>>, vector<576x64xbf16>
    %cst_137 = arith.constant dense<0.000000e+00> : vector<64x64xf32>
    %138 = tpu.matmul %136, %137, %cst_137 {dimension_numbers = #tpu.dot_dimension_numbers<[1], [0], [0], [1], [0, 0, 1, 1], [], []>} : vector<64x576xbf16>, vector<576x64xbf16>, vector<64x64xf32> -> vector<64x64xf32>
    %139 = vector.shape_cast %138 : vector<64x64xf32> to vector<1x64x64xf32>
    %c0_138 = arith.constant 0 : index
    %c0_139 = arith.constant 0 : index
    %140 = vector.load %arg14[%c0_138, %c0_139] : memref<1x64xf32, #tpu.memory_space<vmem>>, vector<1x64xf32>
    %141 = vector.shape_cast %140 : vector<1x64xf32> to vector<1x1x64xf32>
    %142 = vector.broadcast %141 : vector<1x1x64xf32> to vector<1x64x64xf32>
    %143 = arith.addf %139, %142 : vector<1x64x64xf32>
    %144 = vector.shape_cast %1 : vector<1x64x32xf32> to vector<64x32xf32>
    %145 = arith.truncf %144 : vector<64x32xf32> to vector<64x32xbf16>
    %c0_140 = arith.constant 0 : index
    %c0_141 = arith.constant 0 : index
    %146 = vector.load %arg15[%c0_140, %c0_141] : memref<32x64xbf16, #tpu.memory_space<vmem>>, vector<32x64xbf16>
    %cst_142 = arith.constant dense<0.000000e+00> : vector<64x64xf32>
    %147 = tpu.matmul %145, %146, %cst_142 {dimension_numbers = #tpu.dot_dimension_numbers<[1], [0], [0], [1], [0, 0, 1, 1], [], []>} : vector<64x32xbf16>, vector<32x64xbf16>, vector<64x64xf32> -> vector<64x64xf32>
    %148 = vector.shape_cast %147 : vector<64x64xf32> to vector<1x64x64xf32>
    %149 = arith.addf %143, %148 : vector<1x64x64xf32>
    %c0_143 = arith.constant 0 : index
    %c0_144 = arith.constant 0 : index
    %150 = vector.load %arg16[%c0_143, %c0_144] : memref<1x64xf32, #tpu.memory_space<vmem>>, vector<1x64xf32>
    %151 = vector.shape_cast %150 : vector<1x64xf32> to vector<1x1x64xf32>
    %152 = vector.broadcast %151 : vector<1x1x64xf32> to vector<1x64x64xf32>
    %153 = arith.addf %149, %152 : vector<1x64x64xf32>
    %154 = vector.shape_cast %153 : vector<1x64x64xf32> to vector<1x8x8x64xf32>
    %155 = vector.extract_strided_slice %154 {offsets = [0, 0, 0, 0], sizes = [1, 8, 1, 64], strides = [1, 1, 1, 1]} : vector<1x8x8x64xf32> to vector<1x8x1x64xf32>
    %156 = vector.shape_cast %155 : vector<1x8x1x64xf32> to vector<1x8x64xf32>
    %157 = vector.extract_strided_slice %154 {offsets = [0, 0, 1, 0], sizes = [1, 8, 1, 64], strides = [1, 1, 1, 1]} : vector<1x8x8x64xf32> to vector<1x8x1x64xf32>
    %158 = vector.shape_cast %157 : vector<1x8x1x64xf32> to vector<1x8x64xf32>
    %159 = vector.extract_strided_slice %154 {offsets = [0, 0, 2, 0], sizes = [1, 8, 1, 64], strides = [1, 1, 1, 1]} : vector<1x8x8x64xf32> to vector<1x8x1x64xf32>
    %160 = vector.shape_cast %159 : vector<1x8x1x64xf32> to vector<1x8x64xf32>
    %161 = vector.extract_strided_slice %154 {offsets = [0, 0, 3, 0], sizes = [1, 8, 1, 64], strides = [1, 1, 1, 1]} : vector<1x8x8x64xf32> to vector<1x8x1x64xf32>
    %162 = vector.shape_cast %161 : vector<1x8x1x64xf32> to vector<1x8x64xf32>
    %163 = vector.extract_strided_slice %154 {offsets = [0, 0, 4, 0], sizes = [1, 8, 1, 64], strides = [1, 1, 1, 1]} : vector<1x8x8x64xf32> to vector<1x8x1x64xf32>
    %164 = vector.shape_cast %163 : vector<1x8x1x64xf32> to vector<1x8x64xf32>
    %165 = vector.extract_strided_slice %154 {offsets = [0, 0, 5, 0], sizes = [1, 8, 1, 64], strides = [1, 1, 1, 1]} : vector<1x8x8x64xf32> to vector<1x8x1x64xf32>
    %166 = vector.shape_cast %165 : vector<1x8x1x64xf32> to vector<1x8x64xf32>
    %167 = vector.extract_strided_slice %154 {offsets = [0, 0, 6, 0], sizes = [1, 8, 1, 64], strides = [1, 1, 1, 1]} : vector<1x8x8x64xf32> to vector<1x8x1x64xf32>
    %168 = vector.shape_cast %167 : vector<1x8x1x64xf32> to vector<1x8x64xf32>
    %169 = vector.extract_strided_slice %154 {offsets = [0, 0, 7, 0], sizes = [1, 8, 1, 64], strides = [1, 1, 1, 1]} : vector<1x8x8x64xf32> to vector<1x8x1x64xf32>
    %170 = vector.shape_cast %169 : vector<1x8x1x64xf32> to vector<1x8x64xf32>
    %171 = tpu.concatenate %156, %158, %160, %162, %164, %166, %168, %170 in 2 : vector<1x8x64xf32>, vector<1x8x64xf32>, vector<1x8x64xf32>, vector<1x8x64xf32>, vector<1x8x64xf32>, vector<1x8x64xf32>, vector<1x8x64xf32>, vector<1x8x64xf32> -> vector<1x8x512xf32>
    %c0_145 = arith.constant 0 : index
    %c0_146 = arith.constant 0 : index
    %c0_147 = arith.constant 0 : index
    %172 = vector.load %arg17[%c0_145, %c0_146, %c0_147] : memref<1x8x512xf32, #tpu.memory_space<vmem>>, vector<1x8x512xf32>
    tpu.vector_store %arg17[%c0_145, %c0_146, %c0_147], %171 {strides = array<i32>} : memref<1x8x512xf32, #tpu.memory_space<vmem>>, vector<1x8x512xf32>,
    return
  }
  func.func @transform_0(%arg0: i32) -> (i32, i32, i32, i32) {
    %c0_i32 = arith.constant 0 : i32
    %c0_i32_0 = arith.constant 0 : i32
    %c0_i32_1 = arith.constant 0 : i32
    %c0_i32_2 = arith.constant 0 : i32
    return %arg0, %c0_i32, %c0_i32_0, %c0_i32_1 : i32, i32, i32, i32
  }
  func.func @transform_1(%arg0: i32) -> (i32, i32, i32) {
    %c0_i32 = arith.constant 0 : i32
    %c0_i32_0 = arith.constant 0 : i32
    %c0_i32_1 = arith.constant 0 : i32
    return %arg0, %c0_i32, %c0_i32_0 : i32, i32, i32
  }
  func.func @transform_2(%arg0: i32) -> (i32, i32) {
    %c0_i32 = arith.constant 0 : i32
    %c0_i32_0 = arith.constant 0 : i32
    %c0_i32_1 = arith.constant 0 : i32
    return %c0_i32, %c0_i32_0 : i32, i32
  }
  func.func @transform_3(%arg0: i32) -> (i32, i32) {
    %c0_i32 = arith.constant 0 : i32
    %c0_i32_0 = arith.constant 0 : i32
    %c0_i32_1 = arith.constant 0 : i32
    return %c0_i32, %c0_i32_0 : i32, i32
  }
  func.func @transform_4(%arg0: i32) -> (i32, i32) {
    %c0_i32 = arith.constant 0 : i32
    %c0_i32_0 = arith.constant 0 : i32
    %c0_i32_1 = arith.constant 0 : i32
    return %c0_i32, %c0_i32_0 : i32, i32
  }
  func.func @transform_5(%arg0: i32) -> (i32, i32) {
    %c0_i32 = arith.constant 0 : i32
    %c0_i32_0 = arith.constant 0 : i32
    %c0_i32_1 = arith.constant 0 : i32
    return %c0_i32, %c0_i32_0 : i32, i32
  }
  func.func @transform_6(%arg0: i32) -> (i32, i32) {
    %c0_i32 = arith.constant 0 : i32
    %c0_i32_0 = arith.constant 0 : i32
    %c0_i32_1 = arith.constant 0 : i32
    return %c0_i32, %c0_i32_0 : i32, i32
  }
  func.func @transform_7(%arg0: i32) -> (i32, i32) {
    %c0_i32 = arith.constant 0 : i32
    %c0_i32_0 = arith.constant 0 : i32
    %c0_i32_1 = arith.constant 0 : i32
    return %c0_i32, %c0_i32_0 : i32, i32
  }
  func.func @transform_8(%arg0: i32) -> (i32, i32) {
    %c0_i32 = arith.constant 0 : i32
    %c0_i32_0 = arith.constant 0 : i32
    %c0_i32_1 = arith.constant 0 : i32
    return %c0_i32, %c0_i32_0 : i32, i32
  }
  func.func @transform_9(%arg0: i32) -> (i32, i32) {
    %c0_i32 = arith.constant 0 : i32
    %c0_i32_0 = arith.constant 0 : i32
    %c0_i32_1 = arith.constant 0 : i32
    return %c0_i32, %c0_i32_0 : i32, i32
  }
  func.func @transform_10(%arg0: i32) -> (i32, i32) {
    %c0_i32 = arith.constant 0 : i32
    %c0_i32_0 = arith.constant 0 : i32
    %c0_i32_1 = arith.constant 0 : i32
    return %c0_i32, %c0_i32_0 : i32, i32
  }
  func.func @transform_11(%arg0: i32) -> (i32, i32) {
    %c0_i32 = arith.constant 0 : i32
    %c0_i32_0 = arith.constant 0 : i32
    %c0_i32_1 = arith.constant 0 : i32
    return %c0_i32, %c0_i32_0 : i32, i32
  }
  func.func @transform_12(%arg0: i32) -> (i32, i32) {
    %c0_i32 = arith.constant 0 : i32
    %c0_i32_0 = arith.constant 0 : i32
    %c0_i32_1 = arith.constant 0 : i32
    return %c0_i32, %c0_i32_0 : i32, i32
  }
  func.func @transform_13(%arg0: i32) -> (i32, i32) {
    %c0_i32 = arith.constant 0 : i32
    %c0_i32_0 = arith.constant 0 : i32
    %c0_i32_1 = arith.constant 0 : i32
    return %c0_i32, %c0_i32_0 : i32, i32
  }
  func.func @transform_14(%arg0: i32) -> (i32, i32) {
    %c0_i32 = arith.constant 0 : i32
    %c0_i32_0 = arith.constant 0 : i32
    %c0_i32_1 = arith.constant 0 : i32
    return %c0_i32, %c0_i32_0 : i32, i32
  }
  func.func @transform_15(%arg0: i32) -> (i32, i32) {
    %c0_i32 = arith.constant 0 : i32
    %c0_i32_0 = arith.constant 0 : i32
    %c0_i32_1 = arith.constant 0 : i32
    return %c0_i32, %c0_i32_0 : i32, i32
  }
  func.func @transform_16(%arg0: i32) -> (i32, i32, i32) {
    %c0_i32 = arith.constant 0 : i32
    %c0_i32_0 = arith.constant 0 : i32
    %c0_i32_1 = arith.constant 0 : i32
    return %arg0, %c0_i32, %c0_i32_0 : i32, i32, i32
  }
}

</mosaic_0001>

<llo_original>
// kernel: tpu_custom_call.1
$region0: #{tpu_custom_call.1}
  #allocation0 [shape = 'u32[]', space=smem, size = 0x4, offset = 0x4, fixed_abs, tag = 'smem constant byte address 0x4 - core index']
  #allocation1 [shape = 'u32[144,128]{1,0:T(1,128)}', space=vmem, size = 0x12000, scoped, tag = 'internal scratch']
  #allocation2 [shape = 'bf16[1,10,12,32]{3,2,1,0:T(8,128)(2,1)}', space=vmem, size = 0xa000, scoped, tag = 'scratch operand']
  #allocation3 [shape = 'bf16[1,10,12,64]{3,2,1,0:T(8,128)(2,1)}', space=vmem, size = 0xa000, scoped, tag = 'scratch operand']
  %s0 = inlined_call_operand.vmem [shape: f32[2,8,8,32], index: 0, kind: input, shape index: {}]
  %s1 = inlined_call_operand.vmem [shape: f32[2,1,32], index: 1, kind: input, shape index: {}]
  %s2 = inlined_call_operand.vmem [shape: f32[1,32], index: 2, kind: input, shape index: {}]
  %s3 = inlined_call_operand.vmem [shape: f32[1,32], index: 3, kind: input, shape index: {}]
  %s4 = inlined_call_operand.vmem [shape: f32[32,32], index: 4, kind: input, shape index: {}]
  %s5 = inlined_call_operand.vmem [shape: bf16[288,64], index: 5, kind: input, shape index: {}]
  %s6 = inlined_call_operand.vmem [shape: f32[1,64], index: 6, kind: input, shape index: {}]
  %s7 = inlined_call_operand.vmem [shape: bf16[32,64], index: 7, kind: input, shape index: {}]
  %s8 = inlined_call_operand.vmem [shape: f32[1,64], index: 8, kind: input, shape index: {}]
  %s9 = inlined_call_operand.vmem [shape: f32[1,64], index: 9, kind: input, shape index: {}]
  %s10 = inlined_call_operand.vmem [shape: f32[1,64], index: 10, kind: input, shape index: {}]
  %s11 = inlined_call_operand.vmem [shape: f32[64,64], index: 11, kind: input, shape index: {}]
  %s12 = inlined_call_operand.vmem [shape: bf16[576,64], index: 12, kind: input, shape index: {}]
  %s13 = inlined_call_operand.vmem [shape: f32[1,64], index: 13, kind: input, shape index: {}]
  %s14 = inlined_call_operand.vmem [shape: bf16[32,64], index: 14, kind: input, shape index: {}]
  %s15 = inlined_call_operand.vmem [shape: f32[1,64], index: 15, kind: input, shape index: {}]
  %s16 = inlined_call_operand.hbm [shape: f32[2,8,512], index: 16, kind: output, shape index: {}]
  %s17 = sld [smem:[#allocation0]]
  $region97: #{tpu_custom_call.1} parent=0
    _
  %s19 = ssub.s32 1, %s17
  %s20 = scalar_select 0, %s19, %s17
  $region1: #{tpu_custom_call.1} parent=0
    #allocation4 [shape = 'u8[32768]{0}', space=vmem, size = 0x8000, scoped, tag = 'output window, operand 0']
    #allocation5 [shape = 's32[2]{0}', space=sflag, size = 0x8, scoped, tag = 'scoped memory for tpu_custom_call.1']
    %21 = vsyncpa [#allocation5], 0
    %s22 = scalar_lea.sflag [#allocation5], 1
    %23 = vsyncpa %s22, 0
    loop: start=0, step=1, limit=4
    $region2: #{tpu_custom_call.1} parent=1 // loop_pre_header
      _
    $region3: #{tpu_custom_call.1} parent=1 // loop_header
      %s25 = sphi 0, %s29
      %p26 = scmp.ge.s32.totalorder %s25, 4
      %s35 = sphi 0, %s37
      %s38 = sphi 0, %s35
      %s39 = sphi 0, %s38
      %s55 = sphi 0, %s39
      %s61 = sphi 0, %s63
      %s64 = sphi 0, %s61
      %s65 = sphi 0, %s64
      %s81 = sphi 0, %s65
      %s85 = sphi 0, %s85
      %s87 = sphi 0, %s85
      %s88 = sphi 0, %s87
      %s102 = sphi 0, %s88
      %s106 = sphi 0, %s106
      %s108 = sphi 0, %s106
      %s109 = sphi 0, %s108
      %s123 = sphi 0, %s109
      %s127 = sphi 0, %s127
      %s129 = sphi 0, %s127
      %s130 = sphi 0, %s129
      %s144 = sphi 0, %s130
      %s148 = sphi 0, %s148
      %s150 = sphi 0, %s148
      %s151 = sphi 0, %s150
      %s165 = sphi 0, %s151
      %s169 = sphi 0, %s169
      %s171 = sphi 0, %s169
      %s172 = sphi 0, %s171
      %s186 = sphi 0, %s172
      %s190 = sphi 0, %s190
      %s192 = sphi 0, %s190
      %s193 = sphi 0, %s192
      %s207 = sphi 0, %s193
      %s211 = sphi 0, %s211
      %s213 = sphi 0, %s211
      %s214 = sphi 0, %s213
      %s228 = sphi 0, %s214
      %s232 = sphi 0, %s232
      %s234 = sphi 0, %s232
      %s235 = sphi 0, %s234
      %s249 = sphi 0, %s235
      %s253 = sphi 0, %s253
      %s255 = sphi 0, %s253
      %s256 = sphi 0, %s255
      %s270 = sphi 0, %s256
      %s274 = sphi 0, %s274
      %s276 = sphi 0, %s274
      %s277 = sphi 0, %s276
      %s291 = sphi 0, %s277
      %s295 = sphi 0, %s295
      %s297 = sphi 0, %s295
      %s298 = sphi 0, %s297
      %s312 = sphi 0, %s298
      %s316 = sphi 0, %s316
      %s318 = sphi 0, %s316
      %s319 = sphi 0, %s318
      %s333 = sphi 0, %s319
      %s337 = sphi 0, %s337
      %s339 = sphi 0, %s337
      %s340 = sphi 0, %s339
      %s354 = sphi 0, %s340
      %s358 = sphi 0, %s358
      %s360 = sphi 0, %s358
      %s361 = sphi 0, %s360
      %s375 = sphi 0, %s361
      %s381 = sphi 0, %s383
      %s384 = sphi 0, %s381
      %s385 = sphi 0, %s384
      %s401 = sphi 0, %s385
    $region4: #{tpu_custom_call.1} parent=1 // loop_header_branch
      %28 = sbr.rel (%p26) target = $region8
    $region5: #{tpu_custom_call.1} parent=1 // loop_body
      %s30 = ssub.s32 %s25, 1
      %s31 = ssub.s32 %s25, 2
      %s32 = sadd.s32 %s25, 1
      %s33 = ssub.s32 %s25, %s32
      %p34 = scmp.eq.s32.totalorder %s33, 0
      %s36 = sadd.s32 %s35, 1
      %s37 = scalar_select %p34, %s35, %s36
      %p40 = pneg %p34
      %p41 = scmp.eq.s32.totalorder %s25, 1
      %p42 = por %p40, %p41
      %p43 = scmp.ne.s32.totalorder %s35, %s38
      %p44 = scmp.eq.s32.totalorder %s25, 0
      %p45 = por %p43, %p44
      %p46 = scmp.ne.s32.totalorder %s35, %s38
      %p47 = scmp.eq.s32.totalorder %s30, 1
      %p48 = por %p46, %p47
      %p49 = scmp.ne.s32.totalorder %s38, %s39
      %p50 = scmp.eq.s32.totalorder %s30, 0
      %p51 = por %p49, %p50
      %p52 = scmp.ne.s32.totalorder %s38, %s39
      %p53 = scmp.eq.s32.totalorder %s31, 1
      %p54 = por %p52, %p53
      %p56 = scmp.ne.s32.totalorder %s39, %s55
      %p57 = scmp.eq.s32.totalorder %s31, 0
      %p58 = por %p56, %p57
      %s59 = ssub.s32 %s25, %s32
      %p60 = scmp.eq.s32.totalorder %s59, 0
      %s62 = sadd.s32 %s61, 1
      %s63 = scalar_select %p60, %s61, %s62
      %p66 = pneg %p60
      %p67 = scmp.eq.s32.totalorder %s25, 1
      %p68 = por %p66, %p67
      %p69 = scmp.ne.s32.totalorder %s61, %s64
      %p70 = scmp.eq.s32.totalorder %s25, 0
      %p71 = por %p69, %p70
      %p72 = scmp.ne.s32.totalorder %s61, %s64
      %p73 = scmp.eq.s32.totalorder %s30, 1
      %p74 = por %p72, %p73
      %p75 = scmp.ne.s32.totalorder %s64, %s65
      %p76 = scmp.eq.s32.totalorder %s30, 0
      %p77 = por %p75, %p76
      %p78 = scmp.ne.s32.totalorder %s64, %s65
      %p79 = scmp.eq.s32.totalorder %s31, 1
      %p80 = por %p78, %p79
      %p82 = scmp.ne.s32.totalorder %s65, %s81
      %p83 = scmp.eq.s32.totalorder %s31, 0
      %p84 = por %p82, %p83
      %s86 = sadd.s32 %s85, 1
      %p89 = scmp.eq.s32.totalorder %s25, 1
      %p90 = scmp.ne.s32.totalorder %s85, %s87
      %p91 = scmp.eq.s32.totalorder %s25, 0
      %p92 = por %p90, %p91
      %p93 = scmp.ne.s32.totalorder %s85, %s87
      %p94 = scmp.eq.s32.totalorder %s30, 1
      %p95 = por %p93, %p94
      %p96 = scmp.ne.s32.totalorder %s87, %s88
      %p97 = scmp.eq.s32.totalorder %s30, 0
      %p98 = por %p96, %p97
      %p99 = scmp.ne.s32.totalorder %s87, %s88
      %p100 = scmp.eq.s32.totalorder %s31, 1
      %p101 = por %p99, %p100
      %p103 = scmp.ne.s32.totalorder %s88, %s102
      %p104 = scmp.eq.s32.totalorder %s31, 0
      %p105 = por %p103, %p104
      %s107 = sadd.s32 %s106, 1
      %p110 = scmp.eq.s32.totalorder %s25, 1
      %p111 = scmp.ne.s32.totalorder %s106, %s108
      %p112 = scmp.eq.s32.totalorder %s25, 0
      %p113 = por %p111, %p112
      %p114 = scmp.ne.s32.totalorder %s106, %s108
      %p115 = scmp.eq.s32.totalorder %s30, 1
      %p116 = por %p114, %p115
      %p117 = scmp.ne.s32.totalorder %s108, %s109
      %p118 = scmp.eq.s32.totalorder %s30, 0
      %p119 = por %p117, %p118
      %p120 = scmp.ne.s32.totalorder %s108, %s109
      %p121 = scmp.eq.s32.totalorder %s31, 1
      %p122 = por %p120, %p121
      %p124 = scmp.ne.s32.totalorder %s109, %s123
      %p125 = scmp.eq.s32.totalorder %s31, 0
      %p126 = por %p124, %p125
      %s128 = sadd.s32 %s127, 1
      %p131 = scmp.eq.s32.totalorder %s25, 1
      %p132 = scmp.ne.s32.totalorder %s127, %s129
      %p133 = scmp.eq.s32.totalorder %s25, 0
      %p134 = por %p132, %p133
      %p135 = scmp.ne.s32.totalorder %s127, %s129
      %p136 = scmp.eq.s32.totalorder %s30, 1
      %p137 = por %p135, %p136
      %p138 = scmp.ne.s32.totalorder %s129, %s130
      %p139 = scmp.eq.s32.totalorder %s30, 0
      %p140 = por %p138, %p139
      %p141 = scmp.ne.s32.totalorder %s129, %s130
      %p142 = scmp.eq.s32.totalorder %s31, 1
      %p143 = por %p141, %p142
      %p145 = scmp.ne.s32.totalorder %s130, %s144
      %p146 = scmp.eq.s32.totalorder %s31, 0
      %p147 = por %p145, %p146
      %s149 = sadd.s32 %s148, 1
      %p152 = scmp.eq.s32.totalorder %s25, 1
      %p153 = scmp.ne.s32.totalorder %s148, %s150
      %p154 = scmp.eq.s32.totalorder %s25, 0
      %p155 = por %p153, %p154
      %p156 = scmp.ne.s32.totalorder %s148, %s150
      %p157 = scmp.eq.s32.totalorder %s30, 1
      %p158 = por %p156, %p157
      %p159 = scmp.ne.s32.totalorder %s150, %s151
      %p160 = scmp.eq.s32.totalorder %s30, 0
      %p161 = por %p159, %p160
      %p162 = scmp.ne.s32.totalorder %s150, %s151
      %p163 = scmp.eq.s32.totalorder %s31, 1
      %p164 = por %p162, %p163
      %p166 = scmp.ne.s32.totalorder %s151, %s165
      %p167 = scmp.eq.s32.totalorder %s31, 0
      %p168 = por %p166, %p167
      %s170 = sadd.s32 %s169, 1
      %p173 = scmp.eq.s32.totalorder %s25, 1
      %p174 = scmp.ne.s32.totalorder %s169, %s171
      %p175 = scmp.eq.s32.totalorder %s25, 0
      %p176 = por %p174, %p175
      %p177 = scmp.ne.s32.totalorder %s169, %s171
      %p178 = scmp.eq.s32.totalorder %s30, 1
      %p179 = por %p177, %p178
      %p180 = scmp.ne.s32.totalorder %s171, %s172
      %p181 = scmp.eq.s32.totalorder %s30, 0
      %p182 = por %p180, %p181
      %p183 = scmp.ne.s32.totalorder %s171, %s172
      %p184 = scmp.eq.s32.totalorder %s31, 1
      %p185 = por %p183, %p184
      %p187 = scmp.ne.s32.totalorder %s172, %s186
      %p188 = scmp.eq.s32.totalorder %s31, 0
      %p189 = por %p187, %p188
      %s191 = sadd.s32 %s190, 1
      %p194 = scmp.eq.s32.totalorder %s25, 1
      %p195 = scmp.ne.s32.totalorder %s190, %s192
      %p196 = scmp.eq.s32.totalorder %s25, 0
      %p197 = por %p195, %p196
      %p198 = scmp.ne.s32.totalorder %s190, %s192
      %p199 = scmp.eq.s32.totalorder %s30, 1
      %p200 = por %p198, %p199
      %p201 = scmp.ne.s32.totalorder %s192, %s193
      %p202 = scmp.eq.s32.totalorder %s30, 0
      %p203 = por %p201, %p202
      %p204 = scmp.ne.s32.totalorder %s192, %s193
      %p205 = scmp.eq.s32.totalorder %s31, 1
      %p206 = por %p204, %p205
      %p208 = scmp.ne.s32.totalorder %s193, %s207
      %p209 = scmp.eq.s32.totalorder %s31, 0
      %p210 = por %p208, %p209
      %s212 = sadd.s32 %s211, 1
      %p215 = scmp.eq.s32.totalorder %s25, 1
      %p216 = scmp.ne.s32.totalorder %s211, %s213
      %p217 = scmp.eq.s32.totalorder %s25, 0
      %p218 = por %p216, %p217
      %p219 = scmp.ne.s32.totalorder %s211, %s213
      %p220 = scmp.eq.s32.totalorder %s30, 1
      %p221 = por %p219, %p220
      %p222 = scmp.ne.s32.totalorder %s213, %s214
      %p223 = scmp.eq.s32.totalorder %s30, 0
      %p224 = por %p222, %p223
      %p225 = scmp.ne.s32.totalorder %s213, %s214
      %p226 = scmp.eq.s32.totalorder %s31, 1
      %p227 = por %p225, %p226
      %p229 = scmp.ne.s32.totalorder %s214, %s228
      %p230 = scmp.eq.s32.totalorder %s31, 0
      %p231 = por %p229, %p230
      %s233 = sadd.s32 %s232, 1
      %p236 = scmp.eq.s32.totalorder %s25, 1
      %p237 = scmp.ne.s32.totalorder %s232, %s234
      %p238 = scmp.eq.s32.totalorder %s25, 0
      %p239 = por %p237, %p238
      %p240 = scmp.ne.s32.totalorder %s232, %s234
      %p241 = scmp.eq.s32.totalorder %s30, 1
      %p242 = por %p240, %p241
      %p243 = scmp.ne.s32.totalorder %s234, %s235
      %p244 = scmp.eq.s32.totalorder %s30, 0
      %p245 = por %p243, %p244
      %p246 = scmp.ne.s32.totalorder %s234, %s235
      %p247 = scmp.eq.s32.totalorder %s31, 1
      %p248 = por %p246, %p247
      %p250 = scmp.ne.s32.totalorder %s235, %s249
      %p251 = scmp.eq.s32.totalorder %s31, 0
      %p252 = por %p250, %p251
      %s254 = sadd.s32 %s253, 1
      %p257 = scmp.eq.s32.totalorder %s25, 1
      %p258 = scmp.ne.s32.totalorder %s253, %s255
      %p259 = scmp.eq.s32.totalorder %s25, 0
      %p260 = por %p258, %p259
      %p261 = scmp.ne.s32.totalorder %s253, %s255
      %p262 = scmp.eq.s32.totalorder %s30, 1
      %p263 = por %p261, %p262
      %p264 = scmp.ne.s32.totalorder %s255, %s256
      %p265 = scmp.eq.s32.totalorder %s30, 0
      %p266 = por %p264, %p265
      %p267 = scmp.ne.s32.totalorder %s255, %s256
      %p268 = scmp.eq.s32.totalorder %s31, 1
      %p269 = por %p267, %p268
      %p271 = scmp.ne.s32.totalorder %s256, %s270
      %p272 = scmp.eq.s32.totalorder %s31, 0
      %p273 = por %p271, %p272
      %s275 = sadd.s32 %s274, 1
      %p278 = scmp.eq.s32.totalorder %s25, 1
      %p279 = scmp.ne.s32.totalorder %s274, %s276
      %p280 = scmp.eq.s32.totalorder %s25, 0
      %p281 = por %p279, %p280
      %p282 = scmp.ne.s32.totalorder %s274, %s276
      %p283 = scmp.eq.s32.totalorder %s30, 1
      %p284 = por %p282, %p283
      %p285 = scmp.ne.s32.totalorder %s276, %s277
      %p286 = scmp.eq.s32.totalorder %s30, 0
      %p287 = por %p285, %p286
      %p288 = scmp.ne.s32.totalorder %s276, %s277
      %p289 = scmp.eq.s32.totalorder %s31, 1
      %p290 = por %p288, %p289
      %p292 = scmp.ne.s32.totalorder %s277, %s291
      %p293 = scmp.eq.s32.totalorder %s31, 0
      %p294 = por %p292, %p293
      %s296 = sadd.s32 %s295, 1
      %p299 = scmp.eq.s32.totalorder %s25, 1
      %p300 = scmp.ne.s32.totalorder %s295, %s297
      %p301 = scmp.eq.s32.totalorder %s25, 0
      %p302 = por %p300, %p301
      %p303 = scmp.ne.s32.totalorder %s295, %s297
      %p304 = scmp.eq.s32.totalorder %s30, 1
      %p305 = por %p303, %p304
      %p306 = scmp.ne.s32.totalorder %s297, %s298
      %p307 = scmp.eq.s32.totalorder %s30, 0
      %p308 = por %p306, %p307
      %p309 = scmp.ne.s32.totalorder %s297, %s298
      %p310 = scmp.eq.s32.totalorder %s31, 1
      %p311 = por %p309, %p310
      %p313 = scmp.ne.s32.totalorder %s298, %s312
      %p314 = scmp.eq.s32.totalorder %s31, 0
      %p315 = por %p313, %p314
      %s317 = sadd.s32 %s316, 1
      %p320 = scmp.eq.s32.totalorder %s25, 1
      %p321 = scmp.ne.s32.totalorder %s316, %s318
      %p322 = scmp.eq.s32.totalorder %s25, 0
      %p323 = por %p321, %p322
      %p324 = scmp.ne.s32.totalorder %s316, %s318
      %p325 = scmp.eq.s32.totalorder %s30, 1
      %p326 = por %p324, %p325
      %p327 = scmp.ne.s32.totalorder %s318, %s319
      %p328 = scmp.eq.s32.totalorder %s30, 0
      %p329 = por %p327, %p328
      %p330 = scmp.ne.s32.totalorder %s318, %s319
      %p331 = scmp.eq.s32.totalorder %s31, 1
      %p332 = por %p330, %p331
      %p334 = scmp.ne.s32.totalorder %s319, %s333
      %p335 = scmp.eq.s32.totalorder %s31, 0
      %p336 = por %p334, %p335
      %s338 = sadd.s32 %s337, 1
      %p341 = scmp.eq.s32.totalorder %s25, 1
      %p342 = scmp.ne.s32.totalorder %s337, %s339
      %p343 = scmp.eq.s32.totalorder %s25, 0
      %p344 = por %p342, %p343
      %p345 = scmp.ne.s32.totalorder %s337, %s339
      %p346 = scmp.eq.s32.totalorder %s30, 1
      %p347 = por %p345, %p346
      %p348 = scmp.ne.s32.totalorder %s339, %s340
      %p349 = scmp.eq.s32.totalorder %s30, 0
      %p350 = por %p348, %p349
      %p351 = scmp.ne.s32.totalorder %s339, %s340
      %p352 = scmp.eq.s32.totalorder %s31, 1
      %p353 = por %p351, %p352
      %p355 = scmp.ne.s32.totalorder %s340, %s354
      %p356 = scmp.eq.s32.totalorder %s31, 0
      %p357 = por %p355, %p356
      %s359 = sadd.s32 %s358, 1
      %p362 = scmp.eq.s32.totalorder %s25, 1
      %p363 = scmp.ne.s32.totalorder %s358, %s360
      %p364 = scmp.eq.s32.totalorder %s25, 0
      %p365 = por %p363, %p364
      %p366 = scmp.ne.s32.totalorder %s358, %s360
      %p367 = scmp.eq.s32.totalorder %s30, 1
      %p368 = por %p366, %p367
      %p369 = scmp.ne.s32.totalorder %s360, %s361
      %p370 = scmp.eq.s32.totalorder %s30, 0
      %p371 = por %p369, %p370
      %p372 = scmp.ne.s32.totalorder %s360, %s361
      %p373 = scmp.eq.s32.totalorder %s31, 1
      %p374 = por %p372, %p373
      %p376 = scmp.ne.s32.totalorder %s361, %s375
      %p377 = scmp.eq.s32.totalorder %s31, 0
      %p378 = por %p376, %p377
      %s379 = ssub.s32 %s25, %s32
      %p380 = scmp.eq.s32.totalorder %s379, 0
      %s382 = sadd.s32 %s381, 1
      %s383 = scalar_select %p380, %s381, %s382
      %p386 = pneg %p380
      %p387 = scmp.eq.s32.totalorder %s25, 1
      %p388 = por %p386, %p387
      %p389 = scmp.ne.s32.totalorder %s381, %s384
      %p390 = scmp.eq.s32.totalorder %s25, 0
      %p391 = por %p389, %p390
      %p392 = scmp.ne.s32.totalorder %s381, %s384
      %p393 = scmp.eq.s32.totalorder %s30, 1
      %p394 = por %p392, %p393
      %p395 = scmp.ne.s32.totalorder %s384, %s385
      %p396 = scmp.eq.s32.totalorder %s30, 0
      %p397 = por %p395, %p396
      %p398 = scmp.ne.s32.totalorder %s384, %s385
      %p399 = scmp.eq.s32.totalorder %s31, 1
      %p400 = por %p398, %p399
      %p402 = scmp.ne.s32.totalorder %s385, %s401
      %p403 = scmp.eq.s32.totalorder %s31, 0
      %p404 = por %p402, %p403
      %p405 = scmp.le.s32.totalorder 1, %s25
      %p406 = scmp.lt.s32.totalorder %s25, 3
      %p407 = pnand %p405, %p406
      %p408 = pneg %p407
      // Predicated region
      $region9: #{tpu_custom_call.1} parent=5 // pred_check
        _
      $region10: #{tpu_custom_call.1} parent=5 // pred_check_branch
        %410 = sbr.rel (%p407) target = $region12
      $region11: #{tpu_custom_call.1} parent=5 // pred_region
        %s411 = ssub.s32 %s25, 1
        // Predicated region
        $region13: #{tpu_custom_call.1} parent=11 // pred_check
          %p412 = pneg %p98
        $region14: #{tpu_custom_call.1} parent=11 // pred_check_branch
          %414 = sbr.rel (%p412) target = $region16
        $region15: #{tpu_custom_call.1} parent=11 // pred_region
          _
        $region16: #{tpu_custom_call.1} parent=11 // pred_fallthru
          _
        // Predicated region
        $region17: #{tpu_custom_call.1} parent=11 // pred_check
          %p415 = pneg %p119
        $region18: #{tpu_custom_call.1} parent=11 // pred_check_branch
          %417 = sbr.rel (%p415) target = $region20
        $region19: #{tpu_custom_call.1} parent=11 // pred_region
          _
        $region20: #{tpu_custom_call.1} parent=11 // pred_fallthru
          _
        // Predicated region
        $region21: #{tpu_custom_call.1} parent=11 // pred_check
          %p418 = pneg %p140
        $region22: #{tpu_custom_call.1} parent=11 // pred_check_branch
          %420 = sbr.rel (%p418) target = $region24
        $region23: #{tpu_custom_call.1} parent=11 // pred_region
          _
        $region24: #{tpu_custom_call.1} parent=11 // pred_fallthru
          _
        // Predicated region
        $region25: #{tpu_custom_call.1} parent=11 // pred_check
          %p421 = pneg %p161
        $region26: #{tpu_custom_call.1} parent=11 // pred_check_branch
          %423 = sbr.rel (%p421) target = $region28
        $region27: #{tpu_custom_call.1} parent=11 // pred_region
          _
        $region28: #{tpu_custom_call.1} parent=11 // pred_fallthru
          _
        // Predicated region
        $region29: #{tpu_custom_call.1} parent=11 // pred_check
          %p424 = pneg %p182
        $region30: #{tpu_custom_call.1} parent=11 // pred_check_branch
          %426 = sbr.rel (%p424) target = $region32
        $region31: #{tpu_custom_call.1} parent=11 // pred_region
          _
        $region32: #{tpu_custom_call.1} parent=11 // pred_fallthru
          _
        // Predicated region
        $region33: #{tpu_custom_call.1} parent=11 // pred_check
          %p427 = pneg %p203
        $region34: #{tpu_custom_call.1} parent=11 // pred_check_branch
          %429 = sbr.rel (%p427) target = $region36
        $region35: #{tpu_custom_call.1} parent=11 // pred_region
          _
        $region36: #{tpu_custom_call.1} parent=11 // pred_fallthru
          _
        // Predicated region
        $region37: #{tpu_custom_call.1} parent=11 // pred_check
          %p430 = pneg %p224
        $region38: #{tpu_custom_call.1} parent=11 // pred_check_branch
          %432 = sbr.rel (%p430) target = $region40
        $region39: #{tpu_custom_call.1} parent=11 // pred_region
          _
        $region40: #{tpu_custom_call.1} parent=11 // pred_fallthru
          _
        // Predicated region
        $region41: #{tpu_custom_call.1} parent=11 // pred_check
          %p433 = pneg %p245
        $region42: #{tpu_custom_call.1} parent=11 // pred_check_branch
          %435 = sbr.rel (%p433) target = $region44
        $region43: #{tpu_custom_call.1} parent=11 // pred_region
          _
        $region44: #{tpu_custom_call.1} parent=11 // pred_fallthru
          _
        // Predicated region
        $region45: #{tpu_custom_call.1} parent=11 // pred_check
          %p436 = pneg %p266
        $region46: #{tpu_custom_call.1} parent=11 // pred_check_branch
          %438 = sbr.rel (%p436) target = $region48
        $region47: #{tpu_custom_call.1} parent=11 // pred_region
          _
        $region48: #{tpu_custom_call.1} parent=11 // pred_fallthru
          _
        // Predicated region
        $region49: #{tpu_custom_call.1} parent=11 // pred_check
          %p439 = pneg %p287
        $region50: #{tpu_custom_call.1} parent=11 // pred_check_branch
          %441 = sbr.rel (%p439) target = $region52
        $region51: #{tpu_custom_call.1} parent=11 // pred_region
          _
        $region52: #{tpu_custom_call.1} parent=11 // pred_fallthru
          _
        // Predicated region
        $region53: #{tpu_custom_call.1} parent=11 // pred_check
          %p442 = pneg %p308
        $region54: #{tpu_custom_call.1} parent=11 // pred_check_branch
          %444 = sbr.rel (%p442) target = $region56
        $region55: #{tpu_custom_call.1} parent=11 // pred_region
          _
        $region56: #{tpu_custom_call.1} parent=11 // pred_fallthru
          _
        // Predicated region
        $region57: #{tpu_custom_call.1} parent=11 // pred_check
          %p445 = pneg %p329
        $region58: #{tpu_custom_call.1} parent=11 // pred_check_branch
          %447 = sbr.rel (%p445) target = $region60
        $region59: #{tpu_custom_call.1} parent=11 // pred_region
          _
        $region60: #{tpu_custom_call.1} parent=11 // pred_fallthru
          _
        // Predicated region
        $region61: #{tpu_custom_call.1} parent=11 // pred_check
          %p448 = pneg %p350
        $region62: #{tpu_custom_call.1} parent=11 // pred_check_branch
          %450 = sbr.rel (%p448) target = $region64
        $region63: #{tpu_custom_call.1} parent=11 // pred_region
          _
        $region64: #{tpu_custom_call.1} parent=11 // pred_fallthru
          _
        // Predicated region
        $region65: #{tpu_custom_call.1} parent=11 // pred_check
          %p451 = pneg %p371
        $region66: #{tpu_custom_call.1} parent=11 // pred_check_branch
          %453 = sbr.rel (%p451) target = $region68
        $region67: #{tpu_custom_call.1} parent=11 // pred_region
          _
        $region68: #{tpu_custom_call.1} parent=11 // pred_fallthru
          _
      $region12: #{tpu_custom_call.1} parent=5 // pred_fallthru
        _
      %p454 = scmp.lt.s32.totalorder %s25, 2
      // Predicated region
      $region69: #{tpu_custom_call.1} parent=5 // pred_check
        %p455 = pneg %p454
      $region70: #{tpu_custom_call.1} parent=5 // pred_check_branch
        %457 = sbr.rel (%p455) target = $region72
      $region71: #{tpu_custom_call.1} parent=5 // pred_region
        // Predicated region
        $region73: #{tpu_custom_call.1} parent=71 // pred_check
          %p458 = pneg %p45
        $region74: #{tpu_custom_call.1} parent=71 // pred_check_branch
          %460 = sbr.rel (%p458) target = $region76
        $region75: #{tpu_custom_call.1} parent=71 // pred_region
          %p461 = scmp.lt.s32.totalorder %s25, 1
          %s462 = scalar_select %p461, %s25, 1
          %s463 = smul.addr %s462, 8
          %s464 = smul.addr %s463, 8
          %s465 = scalar_lea.vmem %s0, %s464
        $region76: #{tpu_custom_call.1} parent=71 // pred_fallthru
          _
        // Predicated region
        $region77: #{tpu_custom_call.1} parent=71 // pred_check
          %p466 = pneg %p71
        $region78: #{tpu_custom_call.1} parent=71 // pred_check_branch
          %468 = sbr.rel (%p466) target = $region80
        $region79: #{tpu_custom_call.1} parent=71 // pred_region
          %p469 = scmp.lt.s32.totalorder %s25, 1
          %s470 = scalar_select %p469, %s25, 1
          %s471 = scalar_lea.vmem %s1, %s470
        $region80: #{tpu_custom_call.1} parent=71 // pred_fallthru
          _
      $region72: #{tpu_custom_call.1} parent=5 // pred_fallthru
        _
      %p472 = scmp.le.s32.totalorder 1, %s25
      %p473 = scmp.lt.s32.totalorder %s25, 3
      %p474 = pnand %p472, %p473
      %p475 = pneg %p474
      // Predicated region
      $region81: #{tpu_custom_call.1} parent=5 // pred_check
        _
      $region82: #{tpu_custom_call.1} parent=5 // pred_check_branch
        %477 = sbr.rel (%p474) target = $region84
      $region83: #{tpu_custom_call.1} parent=5 // pred_region
        %s478 = ssub.s32 %s25, 1
        %p479 = scmp.lt.s32.totalorder %s30, 1
        %s480 = scalar_select %p479, %s30, 1
        %s481 = smul.addr %s480, 8
        %s482 = smul.addr %s481, 8
        %s483 = scalar_lea.vmem %s0, %s482
        %p484 = pneg %p51
        %p485 = pneg %p48
        %p486 = scmp.lt.s32.totalorder %s30, 1
        %s487 = scalar_select %p486, %s30, 1
        %s488 = scalar_lea.vmem %s1, %s487
        %p489 = pneg %p77
        %p490 = pneg %p74
        %p491 = pneg %p98
        %p492 = pneg %p95
        %p493 = pneg %p119
        %p494 = pneg %p116
        %p495 = pneg %p140
        %p496 = pneg %p137
        %p497 = pneg %p161
        %p498 = pneg %p158
        %p499 = pneg %p182
        %p500 = pneg %p179
        %p501 = pneg %p203
        %p502 = pneg %p200
        %p503 = pneg %p224
        %p504 = pneg %p221
        %p505 = pneg %p245
        %p506 = pneg %p242
        %p507 = pneg %p266
        %p508 = pneg %p263
        %p509 = pneg %p287
        %p510 = pneg %p284
        %p511 = pneg %p308
        %p512 = pneg %p305
        %p513 = pneg %p329
        %p514 = pneg %p326
        %p515 = pneg %p350
        %p516 = pneg %p347
        %p517 = pneg %p371
        %p518 = pneg %p368
        %p519 = pneg %p397
        %p520 = pneg %p394
        %s521 = sand.u32 %s384, 1
        %s522 = scalar_lea.sflag [#allocation5], %s521
        %s523 = sand.u32 %s384, 1
        %s524 = smul.addr %s523, 32
        %s525 = scalar_lea.vmem [#allocation4], %s524
        %p526 = scmp.lt.s32.totalorder %s30, 1
        %s527 = scalar_select %p526, %s30, 1
        %s528 = smul.addr %s527, 8
        %s529 = smul.addr %s528, 8
        %s530 = scalar_lea.vmem %s0, %s529
        %p531 = scmp.lt.s32.totalorder %s30, 1
        %s532 = scalar_select %p531, %s30, 1
        %s533 = scalar_lea.vmem %s1, %s532
        %v535 = vld [vmem:[%s530] sm:$0xff]
        %v536 = vld [vmem:[%s530 + $0x8] sm:$0xff]
        %v537 = vld [vmem:[%s530 + $0x10] sm:$0xff]
        %v538 = vld [vmem:[%s530 + $0x18] sm:$0xff]
        %v539 = vld [vmem:[%s530 + $0x20] sm:$0xff]
        %v540 = vld [vmem:[%s530 + $0x28] sm:$0xff]
        %v541 = vld [vmem:[%s530 + $0x30] sm:$0xff]
        %v542 = vld [vmem:[%s530 + $0x38] sm:$0xff]
        %vm543 = vcmask 261120
        %v544 = vsel %vm543, %v535, 0.0
        %v545 = vsel %vm543, %v536, 0.0
        %v546 = vadd.f32 %v544, %v545
        %v547 = vsel %vm543, %v537, 0.0
        %v548 = vadd.f32 %v546, %v547
        %v549 = vsel %vm543, %v538, 0.0
        %v550 = vadd.f32 %v548, %v549
        %v551 = vsel %vm543, %v539, 0.0
        %v552 = vadd.f32 %v550, %v551
        %v553 = vsel %vm543, %v540, 0.0
        %v554 = vadd.f32 %v552, %v553
        %v555 = vsel %vm543, %v541, 0.0
        %v556 = vadd.f32 %v554, %v555
        %v557 = vsel %vm543, %v542, 0.0
        %v558 = vadd.f32 %v556, %v557
        %v559 = vrot.slane %v558, 4
        %v560 = vadd.f32 %v558, %v559
        %v561 = vrot.slane %v560, 2
        %v562 = vadd.f32 %v560, %v561
        %v563 = vrot.slane %v562, 1
        %v564 = vadd.f32 %v562, %v563
        %v565 = vld [vmem:[%s4] sm:$0xff]
        %v566 = vld [vmem:[%s4 + $0x8] sm:$0xff]
        %v567 = vld [vmem:[%s4 + $0x10] sm:$0xff]
        %v568 = vld [vmem:[%s4 + $0x18] sm:$0xff]
        %v570 = vsel %vm543, %v564, 0
        %572 = vmatprep.subr.mxu0 0.0
        %573 = vmatpush1.msra.mxu0 0.0
        %574 = vmatprep.subr.mxu0 0.0
        %575 = vmatpush1.msra.mxu0 0.0
        %576 = vmatprep.subr.mxu0 0.0
        %577 = vmatpush1.msra.mxu0 0.0
        %578 = vmatprep.subr.mxu0 0.0
        %579 = vmatpush1.msra.mxu0 0.0
        %580 = vmatprep.subr.mxu0 0.0
        %581 = vmatpush1.msra.mxu0 0.0
        %582 = vmatprep.subr.mxu0 0.0
        %583 = vmatpush1.msra.mxu0 0.0
        %584 = vmatprep.subr.mxu0 0.0
        %585 = vmatpush1.msra.mxu0 0.0
        %586 = vmatprep.subr.mxu0 0.0
        %587 = vmatpush1.msra.mxu0 0.0
        %588 = vmatprep.subr.mxu0 0.0
        %589 = vmatpush1.msra.mxu0 0.0
        %590 = vmatprep.subr.mxu0 0.0
        %591 = vmatpush1.msra.mxu0 0.0
        %592 = vmatprep.subr.mxu0 0.0
        %593 = vmatpush1.msra.mxu0 0.0
        %594 = vmatprep.subr.mxu0 0.0
        %595 = vmatpush1.msra.mxu0 0.0
        %596 = vmatprep.subr.mxu0 0.0
        %597 = vmatpush1.msra.mxu0 %v568
        %598 = vmatprep.subr.mxu0 0.0
        %599 = vmatpush1.msra.mxu0 %v567
        %600 = vmatprep.subr.mxu0 0.0
        %601 = vmatpush1.msra.mxu0 %v566
        %602 = vmatprep.subr.mxu0 0.0
        %603 = vmatpush1.msra.mxu0 %v565
        %604 = vmatprep.subr.mxu0 0.0
        %605 = vmatpush2.msra.mxu0 0.0
        %606 = vmatprep.subr.mxu0 0.0
        %607 = vmatpush2.msra.mxu0 0.0
        %608 = vmatprep.subr.mxu0 0.0
        %609 = vmatpush2.msra.mxu0 0.0
        %610 = vmatprep.subr.mxu0 0.0
        %611 = vmatpush2.msra.mxu0 0.0
        %612 = vmatprep.subr.mxu0 0.0
        %613 = vmatpush2.msra.mxu0 0.0
        %614 = vmatprep.subr.mxu0 0.0
        %615 = vmatpush2.msra.mxu0 0.0
        %616 = vmatprep.subr.mxu0 0.0
        %617 = vmatpush2.msra.mxu0 0.0
        %618 = vmatprep.subr.mxu0 0.0
        %619 = vmatpush2.msra.mxu0 0.0
        %620 = vmatprep.subr.mxu0 0.0
        %621 = vmatpush2.msra.mxu0 0.0
        %622 = vmatprep.subr.mxu0 0.0
        %623 = vmatpush2.msra.mxu0 0.0
        %624 = vmatprep.subr.mxu0 0.0
        %625 = vmatpush2.msra.mxu0 0.0
        %626 = vmatprep.subr.mxu0 0.0
        %627 = vmatpush2.msra.mxu0 0.0
        %628 = vmatprep.subr.mxu0 0.0
        %629 = vmatpush2.msra.mxu0 0.0
        %630 = vmatprep.subr.mxu0 0.0
        %631 = vmatpush2.msra.mxu0 0.0
        %632 = vmatprep.subr.mxu0 0.0
        %633 = vmatpush2.msra.mxu0 0.0
        %634 = vmatprep.subr.mxu0 0.0
        %635 = vmatpush2.msra.mxu0 0.0
        %636 = vmatprep.mubr.f32.mxu0 0.0
        %637 = vmatmul.mubr.f32.gmra.mxu0 %v570
        %v638 = vpop.f32.mrf.mxu0
        %v639 = vadd.f32 0.0, %v638
        %v640 = vpop.f32.mrf.mxu0
        %641 = vdwg.mxu0
        %v642 = vmul.f32 %v639, 0.015625
        %v643 = vlaneseq
        %v644 = vshrl.u32 %v643, 7
        %v645 = vsub.s32 0, %v644
        %v646 = vrot.slane %v642, %v645
        %v647 = vsub.f32 %v535, %v646
        %v648 = vsub.f32 %v536, %v646
        %v649 = vsub.f32 %v537, %v646
        %v650 = vsub.f32 %v538, %v646
        %v651 = vsub.f32 %v539, %v646
        %v652 = vsub.f32 %v540, %v646
        %v653 = vsub.f32 %v541, %v646
        %v654 = vsub.f32 %v542, %v646
        %v655 = vmul.f32 %v647, %v647
        %v656 = vmul.f32 %v648, %v648
        %v657 = vmul.f32 %v649, %v649
        %v658 = vmul.f32 %v650, %v650
        %v659 = vmul.f32 %v651, %v651
        %v660 = vmul.f32 %v652, %v652
        %v661 = vmul.f32 %v653, %v653
        %v662 = vmul.f32 %v654, %v654
        %v663 = vsel %vm543, %v655, 0.0
        %v664 = vsel %vm543, %v656, 0.0
        %v665 = vadd.f32 %v663, %v664
        %v666 = vsel %vm543, %v657, 0.0
        %v667 = vadd.f32 %v665, %v666
        %v668 = vsel %vm543, %v658, 0.0
        %v669 = vadd.f32 %v667, %v668
        %v670 = vsel %vm543, %v659, 0.0
        %v671 = vadd.f32 %v669, %v670
        %v672 = vsel %vm543, %v660, 0.0
        %v673 = vadd.f32 %v671, %v672
        %v674 = vsel %vm543, %v661, 0.0
        %v675 = vadd.f32 %v673, %v674
        %v676 = vsel %vm543, %v662, 0.0
        %v677 = vadd.f32 %v675, %v676
        %v678 = vrot.slane %v677, 4
        %v679 = vadd.f32 %v677, %v678
        %v680 = vrot.slane %v679, 2
        %v681 = vadd.f32 %v679, %v680
        %v682 = vrot.slane %v681, 1
        %v683 = vadd.f32 %v681, %v682
        %v685 = vsel %vm543, %v683, 0
        %687 = vmatprep.subr.mxu0 0.0
        %688 = vmatpush1.msra.mxu0 0.0
        %689 = vmatprep.subr.mxu0 0.0
        %690 = vmatpush1.msra.mxu0 0.0
        %691 = vmatprep.subr.mxu0 0.0
        %692 = vmatpush1.msra.mxu0 0.0
        %693 = vmatprep.subr.mxu0 0.0
        %694 = vmatpush1.msra.mxu0 0.0
        %695 = vmatprep.subr.mxu0 0.0
        %696 = vmatpush1.msra.mxu0 0.0
        %697 = vmatprep.subr.mxu0 0.0
        %698 = vmatpush1.msra.mxu0 0.0
        %699 = vmatprep.subr.mxu0 0.0
        %700 = vmatpush1.msra.mxu0 0.0
        %701 = vmatprep.subr.mxu0 0.0
        %702 = vmatpush1.msra.mxu0 0.0
        %703 = vmatprep.subr.mxu0 0.0
        %704 = vmatpush1.msra.mxu0 0.0
        %705 = vmatprep.subr.mxu0 0.0
        %706 = vmatpush1.msra.mxu0 0.0
        %707 = vmatprep.subr.mxu0 0.0
        %708 = vmatpush1.msra.mxu0 0.0
        %709 = vmatprep.subr.mxu0 0.0
        %710 = vmatpush1.msra.mxu0 0.0
        %711 = vmatprep.subr.mxu0 0.0
        %712 = vmatpush1.msra.mxu0 %v568
        %713 = vmatprep.subr.mxu0 0.0
        %714 = vmatpush1.msra.mxu0 %v567
        %715 = vmatprep.subr.mxu0 0.0
        %716 = vmatpush1.msra.mxu0 %v566
        %717 = vmatprep.subr.mxu0 0.0
        %718 = vmatpush1.msra.mxu0 %v565
        %719 = vmatprep.subr.mxu0 0.0
        %720 = vmatpush2.msra.mxu0 0.0
        %721 = vmatprep.subr.mxu0 0.0
        %722 = vmatpush2.msra.mxu0 0.0
        %723 = vmatprep.subr.mxu0 0.0
        %724 = vmatpush2.msra.mxu0 0.0
        %725 = vmatprep.subr.mxu0 0.0
        %726 = vmatpush2.msra.mxu0 0.0
        %727 = vmatprep.subr.mxu0 0.0
        %728 = vmatpush2.msra.mxu0 0.0
        %729 = vmatprep.subr.mxu0 0.0
        %730 = vmatpush2.msra.mxu0 0.0
        %731 = vmatprep.subr.mxu0 0.0
        %732 = vmatpush2.msra.mxu0 0.0
        %733 = vmatprep.subr.mxu0 0.0
        %734 = vmatpush2.msra.mxu0 0.0
        %735 = vmatprep.subr.mxu0 0.0
        %736 = vmatpush2.msra.mxu0 0.0
        %737 = vmatprep.subr.mxu0 0.0
        %738 = vmatpush2.msra.mxu0 0.0
        %739 = vmatprep.subr.mxu0 0.0
        %740 = vmatpush2.msra.mxu0 0.0
        %741 = vmatprep.subr.mxu0 0.0
        %742 = vmatpush2.msra.mxu0 0.0
        %743 = vmatprep.subr.mxu0 0.0
        %744 = vmatpush2.msra.mxu0 0.0
        %745 = vmatprep.subr.mxu0 0.0
        %746 = vmatpush2.msra.mxu0 0.0
        %747 = vmatprep.subr.mxu0 0.0
        %748 = vmatpush2.msra.mxu0 0.0
        %749 = vmatprep.subr.mxu0 0.0
        %750 = vmatpush2.msra.mxu0 0.0
        %751 = vmatprep.mubr.f32.mxu0 0.0
        %752 = vmatmul.mubr.f32.gmra.mxu0 %v685
        %v753 = vpop.f32.mrf.mxu0
        %v754 = vadd.f32 0.0, %v753
        %v755 = vpop.f32.mrf.mxu0
        %756 = vdwg.mxu0
        %v757 = vmul.f32 %v754, 0.015625
        %v758 = vadd.f32 %v757, 1e-05
        %v759 = vrsqrt.pop %v758
        %v760 = vld [vmem:[%s2] sm:$0x1]
        %v761 = vmul.f32 %v759, %v760
        %v762 = vlaneseq
        %v763 = vshrl.u32 %v762, 7
        %v764 = vsub.s32 0, %v763
        %v765 = vrot.slane %v761, %v764
        %v766 = vmul.f32 %v647, %v765
        %v767 = vmul.f32 %v648, %v765
        %v768 = vmul.f32 %v649, %v765
        %v769 = vmul.f32 %v650, %v765
        %v770 = vmul.f32 %v651, %v765
        %v771 = vmul.f32 %v652, %v765
        %v772 = vmul.f32 %v653, %v765
        %v773 = vmul.f32 %v654, %v765
        %v774 = vld [vmem:[%s3] sm:$0x1]
        %v776 = vlaneseq
        %v777 = vshrl.u32 %v776, 7
        %v778 = vsub.s32 0, %v777
        %v779 = vrot.slane %v774, %v778
        %v781 = vadd.f32 %v766, %v779
        %v782 = vadd.f32 %v767, %v779
        %v783 = vadd.f32 %v768, %v779
        %v784 = vadd.f32 %v769, %v779
        %v785 = vadd.f32 %v770, %v779
        %v786 = vadd.f32 %v771, %v779
        %v787 = vadd.f32 %v772, %v779
        %v788 = vadd.f32 %v773, %v779
        %v789 = vxor.u32 %v781, 2147483648
        %v790 = vxor.u32 %v782, 2147483648
        %v791 = vxor.u32 %v783, 2147483648
        %v792 = vxor.u32 %v784, 2147483648
        %v793 = vxor.u32 %v785, 2147483648
        %v794 = vxor.u32 %v786, 2147483648
        %v795 = vxor.u32 %v787, 2147483648
        %v796 = vxor.u32 %v788, 2147483648
        %v797 = vmul.f32 %v789, 1.442695
        %v798 = vpow.pop %v797
        %v799 = vmul.f32 %v790, 1.442695
        %v800 = vpow.pop %v799
        %v801 = vmul.f32 %v791, 1.442695
        %v802 = vpow.pop %v801
        %v803 = vmul.f32 %v792, 1.442695
        %v804 = vpow.pop %v803
        %v805 = vmul.f32 %v793, 1.442695
        %v806 = vpow.pop %v805
        %v807 = vmul.f32 %v794, 1.442695
        %v808 = vpow.pop %v807
        %v809 = vmul.f32 %v795, 1.442695
        %v810 = vpow.pop %v809
        %v811 = vmul.f32 %v796, 1.442695
        %v812 = vpow.pop %v811
        %v813 = vadd.f32 %v798, 1.0
        %v814 = vadd.f32 %v800, 1.0
        %v815 = vadd.f32 %v802, 1.0
        %v816 = vadd.f32 %v804, 1.0
        %v817 = vadd.f32 %v806, 1.0
        %v818 = vadd.f32 %v808, 1.0
        %v819 = vadd.f32 %v810, 1.0
        %v820 = vadd.f32 %v812, 1.0
        %v821 = vrcp.pop %v813
        %v822 = vmul.f32 1.0, %v821
        %v823 = vrcp.pop %v814
        %v824 = vmul.f32 1.0, %v823
        %v825 = vrcp.pop %v815
        %v826 = vmul.f32 1.0, %v825
        %v827 = vrcp.pop %v816
        %v828 = vmul.f32 1.0, %v827
        %v829 = vrcp.pop %v817
        %v830 = vmul.f32 1.0, %v829
        %v831 = vrcp.pop %v818
        %v832 = vmul.f32 1.0, %v831
        %v833 = vrcp.pop %v819
        %v834 = vmul.f32 1.0, %v833
        %v835 = vrcp.pop %v820
        %v836 = vmul.f32 1.0, %v835
        %v837 = vmul.f32 %v781, %v822
        %v838 = vmul.f32 %v782, %v824
        %v839 = vmul.f32 %v783, %v826
        %v840 = vmul.f32 %v784, %v828
        %v841 = vmul.f32 %v785, %v830
        %v842 = vmul.f32 %v786, %v832
        %v843 = vmul.f32 %v787, %v834
        %v844 = vmul.f32 %v788, %v836
        %vm845 = vcmask 257024
        %846 = vst.msk [vmem:[#allocation2] sm:$0xf] %vm845, 0
        %vm847 = vcmask 254976
        %848 = vst.msk [vmem:[#allocation2 + $0x4] sm:$0x3] %vm847, 0
        %849 = vst.msk [vmem:[#allocation2 + $0x8] sm:$0xf] %vm845, 0
        %850 = vst.msk [vmem:[#allocation2 + $0xc] sm:$0x3] %vm847, 0
        %851 = vst.msk [vmem:[#allocation2 + $0x10] sm:$0xf] %vm845, 0
        %852 = vst.msk [vmem:[#allocation2 + $0x14] sm:$0x3] %vm847, 0
        %853 = vst.msk [vmem:[#allocation2 + $0x18] sm:$0xf] %vm845, 0
        %854 = vst.msk [vmem:[#allocation2 + $0x1c] sm:$0x3] %vm847, 0
        %855 = vst.msk [vmem:[#allocation2 + $0x20] sm:$0xf] %vm845, 0
        %856 = vst.msk [vmem:[#allocation2 + $0x24] sm:$0x3] %vm847, 0
        %857 = vst.msk [vmem:[#allocation2 + $0x28] sm:$0xf] %vm845, 0
        %858 = vst.msk [vmem:[#allocation2 + $0x2c] sm:$0x3] %vm847, 0
        %859 = vst.msk [vmem:[#allocation2 + $0x30] sm:$0xf] %vm845, 0
        %860 = vst.msk [vmem:[#allocation2 + $0x34] sm:$0x3] %vm847, 0
        %861 = vst.msk [vmem:[#allocation2 + $0x38] sm:$0xf] %vm845, 0
        %862 = vst.msk [vmem:[#allocation2 + $0x3c] sm:$0x3] %vm847, 0
        %863 = vst.msk [vmem:[#allocation2 + $0x40] sm:$0xf] %vm845, 0
        %864 = vst.msk [vmem:[#allocation2 + $0x44] sm:$0x3] %vm847, 0
        %865 = vst.msk [vmem:[#allocation2 + $0x48] sm:$0xf] %vm845, 0
        %866 = vst.msk [vmem:[#allocation2 + $0x4c] sm:$0x3] %vm847, 0
        %v867 = vpack.c.bf16 %v838, %v837
        %v868 = vpack.c.bf16 %v840, %v839
        %v869 = vpack.c.bf16 %v842, %v841
        %v870 = vpack.c.bf16 %v844, %v843
        %v875 = vunpack.c.l.b16 %v867
        %v876 = vunpack.c.h.b16 %v867
        %v877 = vunpack.c.l.b16 %v868
        %v878 = vunpack.c.h.b16 %v868
        %v879 = vunpack.c.l.b16 %v869
        %v880 = vunpack.c.h.b16 %v869
        %v881 = vunpack.c.l.b16 %v870
        %v882 = vunpack.c.h.b16 %v870
        %v883 = vpack.c.b16 %v875, %v875
        %v884 = vpack.c.b16 %v876, %v876
        %v885 = vpack.c.b16 %v877, %v877
        %v886 = vpack.c.b16 %v878, %v878
        %v887 = vpack.c.b16 %v879, %v879
        %v888 = vpack.c.b16 %v880, %v880
        %v889 = vpack.c.b16 %v881, %v881
        %v890 = vpack.c.b16 %v882, %v882
        %v891 = vrot.slane %v883, 7
        %v892 = vrot.slane %v891, 4
        %v893 = vrot.slane %v884, 7
        %v894 = vrot.slane %v893, 4
        %v895 = vrot.slane %v885, 7
        %v896 = vrot.slane %v895, 4
        %v897 = vrot.slane %v886, 7
        %v898 = vrot.slane %v897, 4
        %v899 = vrot.slane %v887, 7
        %v900 = vrot.slane %v899, 4
        %v901 = vrot.slane %v888, 7
        %v902 = vrot.slane %v901, 4
        %v903 = vrot.slane %v889, 7
        %v904 = vrot.slane %v903, 4
        %v905 = vrot.slane %v890, 7
        %v906 = vrot.slane %v905, 4
        %s923 = scalar_lea.vmem [#allocation2], 8
        %vm924 = vcmask 257025
        %925 = vst.msk [vmem:[%s923] sm:$0xe] %vm924, %v891
        %vm926 = vcmask 253952
        %927 = vst.msk [vmem:[%s923 + $0x4] sm:$0x1] %vm926, %v892
        %928 = vst.msk [vmem:[%s923 + $0x8] sm:$0xe] %vm924, %v893
        %929 = vst.msk [vmem:[%s923 + $0xc] sm:$0x1] %vm926, %v894
        %930 = vst.msk [vmem:[%s923 + $0x10] sm:$0xe] %vm924, %v895
        %931 = vst.msk [vmem:[%s923 + $0x14] sm:$0x1] %vm926, %v896
        %932 = vst.msk [vmem:[%s923 + $0x18] sm:$0xe] %vm924, %v897
        %933 = vst.msk [vmem:[%s923 + $0x1c] sm:$0x1] %vm926, %v898
        %934 = vst.msk [vmem:[%s923 + $0x20] sm:$0xe] %vm924, %v899
        %935 = vst.msk [vmem:[%s923 + $0x24] sm:$0x1] %vm926, %v900
        %936 = vst.msk [vmem:[%s923 + $0x28] sm:$0xe] %vm924, %v901
        %937 = vst.msk [vmem:[%s923 + $0x2c] sm:$0x1] %vm926, %v902
        %938 = vst.msk [vmem:[%s923 + $0x30] sm:$0xe] %vm924, %v903
        %939 = vst.msk [vmem:[%s923 + $0x34] sm:$0x1] %vm926, %v904
        %940 = vst.msk [vmem:[%s923 + $0x38] sm:$0xe] %vm924, %v905
        %941 = vst.msk [vmem:[%s923 + $0x3c] sm:$0x1] %vm926, %v906
        %v942 = vld [vmem:[#allocation2] sm:$0xf]
        %v943 = vld [vmem:[#allocation2 + $0x4] sm:$0x1]
        %v944 = vld [vmem:[#allocation2 + $0x8] sm:$0xf]
        %v945 = vld [vmem:[#allocation2 + $0xc] sm:$0x1]
        %v946 = vld [vmem:[#allocation2 + $0x10] sm:$0xf]
        %v947 = vld [vmem:[#allocation2 + $0x14] sm:$0x1]
        %v948 = vld [vmem:[#allocation2 + $0x18] sm:$0xf]
        %v949 = vld [vmem:[#allocation2 + $0x1c] sm:$0x1]
        %v950 = vld [vmem:[#allocation2 + $0x20] sm:$0xf]
        %v951 = vld [vmem:[#allocation2 + $0x24] sm:$0x1]
        %v952 = vld [vmem:[#allocation2 + $0x28] sm:$0xf]
        %v953 = vld [vmem:[#allocation2 + $0x2c] sm:$0x1]
        %v954 = vld [vmem:[#allocation2 + $0x30] sm:$0xf]
        %v955 = vld [vmem:[#allocation2 + $0x34] sm:$0x1]
        %v956 = vld [vmem:[#allocation2 + $0x38] sm:$0xf]
        %v957 = vld [vmem:[#allocation2 + $0x3c] sm:$0x1]
        %vm958 = vsmask.f32 3328
        %vm959 = vsmask.f32 7440
        %vm960 = vmor %vm958, %vm959
        %v962 = vshrl.u32 %v942, 16
        %v964 = vrot.slane %v962, 4
        %v965 = vshll.u32 %v942, 16
        %v967 = vrot.slane %v965, 5
        %v968 = vor.u32 %v964, %v967
        %v969 = vrot.slane %v968, 4
        %v971 = vshll.u32 %v943, 16
        %v973 = vrot.slane %v971, 5
        %v974 = vsel %vm960, %v969, %v973
        %v976 = vshrl.u32 %v944, 16
        %v978 = vrot.slane %v976, 4
        %v979 = vshll.u32 %v944, 16
        %v981 = vrot.slane %v979, 5
        %v982 = vor.u32 %v978, %v981
        %v983 = vrot.slane %v982, 4
        %v985 = vshll.u32 %v945, 16
        %v987 = vrot.slane %v985, 5
        %v988 = vsel %vm960, %v983, %v987
        %v990 = vshrl.u32 %v946, 16
        %v992 = vrot.slane %v990, 4
        %v993 = vshll.u32 %v946, 16
        %v995 = vrot.slane %v993, 5
        %v996 = vor.u32 %v992, %v995
        %v997 = vrot.slane %v996, 4
        %v999 = vshll.u32 %v947, 16
        %v1001 = vrot.slane %v999, 5
        %v1002 = vsel %vm960, %v997, %v1001
        %v1004 = vshrl.u32 %v948, 16
        %v1006 = vrot.slane %v1004, 4
        %v1007 = vshll.u32 %v948, 16
        %v1009 = vrot.slane %v1007, 5
        %v1010 = vor.u32 %v1006, %v1009
        %v1011 = vrot.slane %v1010, 4
        %v1013 = vshll.u32 %v949, 16
        %v1015 = vrot.slane %v1013, 5
        %v1016 = vsel %vm960, %v1011, %v1015
        %v1018 = vshrl.u32 %v950, 16
        %v1020 = vrot.slane %v1018, 4
        %v1021 = vshll.u32 %v950, 16
        %v1023 = vrot.slane %v1021, 5
        %v1024 = vor.u32 %v1020, %v1023
        %v1025 = vrot.slane %v1024, 4
        %v1027 = vshll.u32 %v951, 16
        %v1029 = vrot.slane %v1027, 5
        %v1030 = vsel %vm960, %v1025, %v1029
        %v1032 = vshrl.u32 %v952, 16
        %v1034 = vrot.slane %v1032, 4
        %v1035 = vshll.u32 %v952, 16
        %v1037 = vrot.slane %v1035, 5
        %v1038 = vor.u32 %v1034, %v1037
        %v1039 = vrot.slane %v1038, 4
        %v1041 = vshll.u32 %v953, 16
        %v1043 = vrot.slane %v1041, 5
        %v1044 = vsel %vm960, %v1039, %v1043
        %v1046 = vshrl.u32 %v954, 16
        %v1048 = vrot.slane %v1046, 4
        %v1049 = vshll.u32 %v954, 16
        %v1051 = vrot.slane %v1049, 5
        %v1052 = vor.u32 %v1048, %v1051
        %v1053 = vrot.slane %v1052, 4
        %v1055 = vshll.u32 %v955, 16
        %v1057 = vrot.slane %v1055, 5
        %v1058 = vsel %vm960, %v1053, %v1057
        %v1060 = vshrl.u32 %v956, 16
        %v1062 = vrot.slane %v1060, 4
        %v1063 = vshll.u32 %v956, 16
        %v1065 = vrot.slane %v1063, 5
        %v1066 = vor.u32 %v1062, %v1065
        %v1067 = vrot.slane %v1066, 4
        %v1069 = vshll.u32 %v957, 16
        %v1071 = vrot.slane %v1069, 5
        %v1072 = vsel %vm960, %v1067, %v1071
        %v1073 = vld [vmem:[#allocation2] sm:$0xe]
        %v1074 = vld [vmem:[#allocation2 + $0x8] sm:$0xe]
        %v1075 = vld [vmem:[#allocation2 + $0x10] sm:$0xe]
        %v1076 = vld [vmem:[#allocation2 + $0x18] sm:$0xe]
        %v1077 = vld [vmem:[#allocation2 + $0x20] sm:$0xe]
        %v1078 = vld [vmem:[#allocation2 + $0x28] sm:$0xe]
        %v1079 = vld [vmem:[#allocation2 + $0x30] sm:$0xe]
        %v1080 = vld [vmem:[#allocation2 + $0x38] sm:$0xe]
        %vm1097 = vcmask 1042432
        %vm1098 = vcmask 1046532
        %vm1099 = vmor %vm1097, %vm1098
        %v1100 = vrot.slane %v1073, 5
        %v1101 = vrot.slane %v1100, 4
        %v1102 = vrot.slane %v943, 5
        %v1103 = vsel %vm1099, %v1101, %v1102
        %v1104 = vrot.slane %v1074, 5
        %v1105 = vrot.slane %v1104, 4
        %v1106 = vrot.slane %v945, 5
        %v1107 = vsel %vm1099, %v1105, %v1106
        %v1108 = vrot.slane %v1075, 5
        %v1109 = vrot.slane %v1108, 4
        %v1110 = vrot.slane %v947, 5
        %v1111 = vsel %vm1099, %v1109, %v1110
        %v1112 = vrot.slane %v1076, 5
        %v1113 = vrot.slane %v1112, 4
        %v1114 = vrot.slane %v949, 5
        %v1115 = vsel %vm1099, %v1113, %v1114
        %v1116 = vrot.slane %v1077, 5
        %v1117 = vrot.slane %v1116, 4
        %v1118 = vrot.slane %v951, 5
        %v1119 = vsel %vm1099, %v1117, %v1118
        %v1120 = vrot.slane %v1078, 5
        %v1121 = vrot.slane %v1120, 4
        %v1122 = vrot.slane %v953, 5
        %v1123 = vsel %vm1099, %v1121, %v1122
        %v1124 = vrot.slane %v1079, 5
        %v1125 = vrot.slane %v1124, 4
        %v1126 = vrot.slane %v955, 5
        %v1127 = vsel %vm1099, %v1125, %v1126
        %v1128 = vrot.slane %v1080, 5
        %v1129 = vrot.slane %v1128, 4
        %v1130 = vrot.slane %v957, 5
        %v1131 = vsel %vm1099, %v1129, %v1130
        %v1132 = vld [vmem:[#allocation2 + $0x4] sm:$0x3]
        %v1133 = vld [vmem:[#allocation2 + $0xc] sm:$0x3]
        %v1134 = vld [vmem:[#allocation2 + $0x14] sm:$0x3]
        %v1135 = vld [vmem:[#allocation2 + $0x1c] sm:$0x3]
        %v1136 = vld [vmem:[#allocation2 + $0x24] sm:$0x3]
        %v1137 = vld [vmem:[#allocation2 + $0x2c] sm:$0x3]
        %v1138 = vld [vmem:[#allocation2 + $0x34] sm:$0x3]
        %v1139 = vld [vmem:[#allocation2 + $0x3c] sm:$0x3]
        %vm1140 = vsmask.f32 2304
        %vm1141 = vsmask.f32 6416
        %vm1142 = vmor %vm1140, %vm1141
        %v1144 = vshrl.u32 %v1073, 16
        %v1146 = vrot.slane %v1144, 5
        %v1147 = vshll.u32 %v1073, 16
        %v1149 = vrot.slane %v1147, 6
        %v1150 = vor.u32 %v1146, %v1149
        %v1151 = vrot.slane %v1150, 4
        %v1153 = vshrl.u32 %v1132, 16
        %v1155 = vrot.slane %v1153, 5
        %v1156 = vshll.u32 %v1132, 16
        %v1158 = vrot.slane %v1156, 6
        %v1159 = vor.u32 %v1155, %v1158
        %v1160 = vsel %vm1142, %v1151, %v1159
        %v1162 = vshrl.u32 %v1074, 16
        %v1164 = vrot.slane %v1162, 5
        %v1165 = vshll.u32 %v1074, 16
        %v1167 = vrot.slane %v1165, 6
        %v1168 = vor.u32 %v1164, %v1167
        %v1169 = vrot.slane %v1168, 4
        %v1171 = vshrl.u32 %v1133, 16
        %v1173 = vrot.slane %v1171, 5
        %v1174 = vshll.u32 %v1133, 16
        %v1176 = vrot.slane %v1174, 6
        %v1177 = vor.u32 %v1173, %v1176
        %v1178 = vsel %vm1142, %v1169, %v1177
        %v1180 = vshrl.u32 %v1075, 16
        %v1182 = vrot.slane %v1180, 5
        %v1183 = vshll.u32 %v1075, 16
        %v1185 = vrot.slane %v1183, 6
        %v1186 = vor.u32 %v1182, %v1185
        %v1187 = vrot.slane %v1186, 4
        %v1189 = vshrl.u32 %v1134, 16
        %v1191 = vrot.slane %v1189, 5
        %v1192 = vshll.u32 %v1134, 16
        %v1194 = vrot.slane %v1192, 6
        %v1195 = vor.u32 %v1191, %v1194
        %v1196 = vsel %vm1142, %v1187, %v1195
        %v1198 = vshrl.u32 %v1076, 16
        %v1200 = vrot.slane %v1198, 5
        %v1201 = vshll.u32 %v1076, 16
        %v1203 = vrot.slane %v1201, 6
        %v1204 = vor.u32 %v1200, %v1203
        %v1205 = vrot.slane %v1204, 4
        %v1207 = vshrl.u32 %v1135, 16
        %v1209 = vrot.slane %v1207, 5
        %v1210 = vshll.u32 %v1135, 16
        %v1212 = vrot.slane %v1210, 6
        %v1213 = vor.u32 %v1209, %v1212
        %v1214 = vsel %vm1142, %v1205, %v1213
        %v1216 = vshrl.u32 %v1077, 16
        %v1218 = vrot.slane %v1216, 5
        %v1219 = vshll.u32 %v1077, 16
        %v1221 = vrot.slane %v1219, 6
        %v1222 = vor.u32 %v1218, %v1221
        %v1223 = vrot.slane %v1222, 4
        %v1225 = vshrl.u32 %v1136, 16
        %v1227 = vrot.slane %v1225, 5
        %v1228 = vshll.u32 %v1136, 16
        %v1230 = vrot.slane %v1228, 6
        %v1231 = vor.u32 %v1227, %v1230
        %v1232 = vsel %vm1142, %v1223, %v1231
        %v1234 = vshrl.u32 %v1078, 16
        %v1236 = vrot.slane %v1234, 5
        %v1237 = vshll.u32 %v1078, 16
        %v1239 = vrot.slane %v1237, 6
        %v1240 = vor.u32 %v1236, %v1239
        %v1241 = vrot.slane %v1240, 4
        %v1243 = vshrl.u32 %v1137, 16
        %v1245 = vrot.slane %v1243, 5
        %v1246 = vshll.u32 %v1137, 16
        %v1248 = vrot.slane %v1246, 6
        %v1249 = vor.u32 %v1245, %v1248
        %v1250 = vsel %vm1142, %v1241, %v1249
        %v1252 = vshrl.u32 %v1079, 16
        %v1254 = vrot.slane %v1252, 5
        %v1255 = vshll.u32 %v1079, 16
        %v1257 = vrot.slane %v1255, 6
        %v1258 = vor.u32 %v1254, %v1257
        %v1259 = vrot.slane %v1258, 4
        %v1261 = vshrl.u32 %v1138, 16
        %v1263 = vrot.slane %v1261, 5
        %v1264 = vshll.u32 %v1138, 16
        %v1266 = vrot.slane %v1264, 6
        %v1267 = vor.u32 %v1263, %v1266
        %v1268 = vsel %vm1142, %v1259, %v1267
        %v1270 = vshrl.u32 %v1080, 16
        %v1272 = vrot.slane %v1270, 5
        %v1273 = vshll.u32 %v1080, 16
        %v1275 = vrot.slane %v1273, 6
        %v1276 = vor.u32 %v1272, %v1275
        %v1277 = vrot.slane %v1276, 4
        %v1279 = vshrl.u32 %v1139, 16
        %v1281 = vrot.slane %v1279, 5
        %v1282 = vshll.u32 %v1139, 16
        %v1284 = vrot.slane %v1282, 6
        %v1285 = vor.u32 %v1281, %v1284
        %v1286 = vsel %vm1142, %v1277, %v1285
        %v1287 = vld [vmem:[%s923] sm:$0xf]
        %v1288 = vld [vmem:[%s923 + $0x4] sm:$0x1]
        %v1289 = vld [vmem:[%s923 + $0x8] sm:$0xf]
        %v1290 = vld [vmem:[%s923 + $0xc] sm:$0x1]
        %v1291 = vld [vmem:[%s923 + $0x10] sm:$0xf]
        %v1292 = vld [vmem:[%s923 + $0x14] sm:$0x1]
        %v1293 = vld [vmem:[%s923 + $0x18] sm:$0xf]
        %v1294 = vld [vmem:[%s923 + $0x1c] sm:$0x1]
        %v1295 = vld [vmem:[%s923 + $0x20] sm:$0xf]
        %v1296 = vld [vmem:[%s923 + $0x24] sm:$0x1]
        %v1297 = vld [vmem:[%s923 + $0x28] sm:$0xf]
        %v1298 = vld [vmem:[%s923 + $0x2c] sm:$0x1]
        %v1299 = vld [vmem:[%s923 + $0x30] sm:$0xf]
        %v1300 = vld [vmem:[%s923 + $0x34] sm:$0x1]
        %v1301 = vld [vmem:[%s923 + $0x38] sm:$0xf]
        %v1302 = vld [vmem:[%s923 + $0x3c] sm:$0x1]
        %v1304 = vshrl.u32 %v1287, 16
        %v1306 = vrot.slane %v1304, 4
        %v1307 = vshll.u32 %v1287, 16
        %v1309 = vrot.slane %v1307, 5
        %v1310 = vor.u32 %v1306, %v1309
        %v1311 = vrot.slane %v1310, 4
        %v1313 = vshll.u32 %v1288, 16
        %v1315 = vrot.slane %v1313, 5
        %v1316 = vsel %vm960, %v1311, %v1315
        %v1318 = vshrl.u32 %v1289, 16
        %v1320 = vrot.slane %v1318, 4
        %v1321 = vshll.u32 %v1289, 16
        %v1323 = vrot.slane %v1321, 5
        %v1324 = vor.u32 %v1320, %v1323
        %v1325 = vrot.slane %v1324, 4
        %v1327 = vshll.u32 %v1290, 16
        %v1329 = vrot.slane %v1327, 5
        %v1330 = vsel %vm960, %v1325, %v1329
        %v1332 = vshrl.u32 %v1291, 16
        %v1334 = vrot.slane %v1332, 4
        %v1335 = vshll.u32 %v1291, 16
        %v1337 = vrot.slane %v1335, 5
        %v1338 = vor.u32 %v1334, %v1337
        %v1339 = vrot.slane %v1338, 4
        %v1341 = vshll.u32 %v1292, 16
        %v1343 = vrot.slane %v1341, 5
        %v1344 = vsel %vm960, %v1339, %v1343
        %v1346 = vshrl.u32 %v1293, 16
        %v1348 = vrot.slane %v1346, 4
        %v1349 = vshll.u32 %v1293, 16
        %v1351 = vrot.slane %v1349, 5
        %v1352 = vor.u32 %v1348, %v1351
        %v1353 = vrot.slane %v1352, 4
        %v1355 = vshll.u32 %v1294, 16
        %v1357 = vrot.slane %v1355, 5
        %v1358 = vsel %vm960, %v1353, %v1357
        %v1360 = vshrl.u32 %v1295, 16
        %v1362 = vrot.slane %v1360, 4
        %v1363 = vshll.u32 %v1295, 16
        %v1365 = vrot.slane %v1363, 5
        %v1366 = vor.u32 %v1362, %v1365
        %v1367 = vrot.slane %v1366, 4
        %v1369 = vshll.u32 %v1296, 16
        %v1371 = vrot.slane %v1369, 5
        %v1372 = vsel %vm960, %v1367, %v1371
        %v1374 = vshrl.u32 %v1297, 16
        %v1376 = vrot.slane %v1374, 4
        %v1377 = vshll.u32 %v1297, 16
        %v1379 = vrot.slane %v1377, 5
        %v1380 = vor.u32 %v1376, %v1379
        %v1381 = vrot.slane %v1380, 4
        %v1383 = vshll.u32 %v1298, 16
        %v1385 = vrot.slane %v1383, 5
        %v1386 = vsel %vm960, %v1381, %v1385
        %v1388 = vshrl.u32 %v1299, 16
        %v1390 = vrot.slane %v1388, 4
        %v1391 = vshll.u32 %v1299, 16
        %v1393 = vrot.slane %v1391, 5
        %v1394 = vor.u32 %v1390, %v1393
        %v1395 = vrot.slane %v1394, 4
        %v1397 = vshll.u32 %v1300, 16
        %v1399 = vrot.slane %v1397, 5
        %v1400 = vsel %vm960, %v1395, %v1399
        %v1402 = vshrl.u32 %v1301, 16
        %v1404 = vrot.slane %v1402, 4
        %v1405 = vshll.u32 %v1301, 16
        %v1407 = vrot.slane %v1405, 5
        %v1408 = vor.u32 %v1404, %v1407
        %v1409 = vrot.slane %v1408, 4
        %v1411 = vshll.u32 %v1302, 16
        %v1413 = vrot.slane %v1411, 5
        %v1414 = vsel %vm960, %v1409, %v1413
        %v1415 = vld [vmem:[%s923] sm:$0xe]
        %v1416 = vld [vmem:[%s923 + $0x8] sm:$0xe]
        %v1417 = vld [vmem:[%s923 + $0x10] sm:$0xe]
        %v1418 = vld [vmem:[%s923 + $0x18] sm:$0xe]
        %v1419 = vld [vmem:[%s923 + $0x20] sm:$0xe]
        %v1420 = vld [vmem:[%s923 + $0x28] sm:$0xe]
        %v1421 = vld [vmem:[%s923 + $0x30] sm:$0xe]
        %v1422 = vld [vmem:[%s923 + $0x38] sm:$0xe]
        %v1439 = vrot.slane %v1415, 5
        %v1440 = vrot.slane %v1439, 4
        %v1441 = vrot.slane %v1288, 5
        %v1442 = vsel %vm1099, %v1440, %v1441
        %v1443 = vrot.slane %v1416, 5
        %v1444 = vrot.slane %v1443, 4
        %v1445 = vrot.slane %v1290, 5
        %v1446 = vsel %vm1099, %v1444, %v1445
        %v1447 = vrot.slane %v1417, 5
        %v1448 = vrot.slane %v1447, 4
        %v1449 = vrot.slane %v1292, 5
        %v1450 = vsel %vm1099, %v1448, %v1449
        %v1451 = vrot.slane %v1418, 5
        %v1452 = vrot.slane %v1451, 4
        %v1453 = vrot.slane %v1294, 5
        %v1454 = vsel %vm1099, %v1452, %v1453
        %v1455 = vrot.slane %v1419, 5
        %v1456 = vrot.slane %v1455, 4
        %v1457 = vrot.slane %v1296, 5
        %v1458 = vsel %vm1099, %v1456, %v1457
        %v1459 = vrot.slane %v1420, 5
        %v1460 = vrot.slane %v1459, 4
        %v1461 = vrot.slane %v1298, 5
        %v1462 = vsel %vm1099, %v1460, %v1461
        %v1463 = vrot.slane %v1421, 5
        %v1464 = vrot.slane %v1463, 4
        %v1465 = vrot.slane %v1300, 5
        %v1466 = vsel %vm1099, %v1464, %v1465
        %v1467 = vrot.slane %v1422, 5
        %v1468 = vrot.slane %v1467, 4
        %v1469 = vrot.slane %v1302, 5
        %v1470 = vsel %vm1099, %v1468, %v1469
        %v1471 = vld [vmem:[%s923 + $0x4] sm:$0x3]
        %v1472 = vld [vmem:[%s923 + $0xc] sm:$0x3]
        %v1473 = vld [vmem:[%s923 + $0x14] sm:$0x3]
        %v1474 = vld [vmem:[%s923 + $0x1c] sm:$0x3]
        %v1475 = vld [vmem:[%s923 + $0x24] sm:$0x3]
        %v1476 = vld [vmem:[%s923 + $0x2c] sm:$0x3]
        %v1477 = vld [vmem:[%s923 + $0x34] sm:$0x3]
        %v1478 = vld [vmem:[%s923 + $0x3c] sm:$0x3]
        %v1480 = vshrl.u32 %v1415, 16
        %v1482 = vrot.slane %v1480, 5
        %v1483 = vshll.u32 %v1415, 16
        %v1485 = vrot.slane %v1483, 6
        %v1486 = vor.u32 %v1482, %v1485
        %v1487 = vrot.slane %v1486, 4
        %v1489 = vshrl.u32 %v1471, 16
        %v1491 = vrot.slane %v1489, 5
        %v1492 = vshll.u32 %v1471, 16
        %v1494 = vrot.slane %v1492, 6
        %v1495 = vor.u32 %v1491, %v1494
        %v1496 = vsel %vm1142, %v1487, %v1495
        %v1498 = vshrl.u32 %v1416, 16
        %v1500 = vrot.slane %v1498, 5
        %v1501 = vshll.u32 %v1416, 16
        %v1503 = vrot.slane %v1501, 6
        %v1504 = vor.u32 %v1500, %v1503
        %v1505 = vrot.slane %v1504, 4
        %v1507 = vshrl.u32 %v1472, 16
        %v1509 = vrot.slane %v1507, 5
        %v1510 = vshll.u32 %v1472, 16
        %v1512 = vrot.slane %v1510, 6
        %v1513 = vor.u32 %v1509, %v1512
        %v1514 = vsel %vm1142, %v1505, %v1513
        %v1516 = vshrl.u32 %v1417, 16
        %v1518 = vrot.slane %v1516, 5
        %v1519 = vshll.u32 %v1417, 16
        %v1521 = vrot.slane %v1519, 6
        %v1522 = vor.u32 %v1518, %v1521
        %v1523 = vrot.slane %v1522, 4
        %v1525 = vshrl.u32 %v1473, 16
        %v1527 = vrot.slane %v1525, 5
        %v1528 = vshll.u32 %v1473, 16
        %v1530 = vrot.slane %v1528, 6
        %v1531 = vor.u32 %v1527, %v1530
        %v1532 = vsel %vm1142, %v1523, %v1531
        %v1534 = vshrl.u32 %v1418, 16
        %v1536 = vrot.slane %v1534, 5
        %v1537 = vshll.u32 %v1418, 16
        %v1539 = vrot.slane %v1537, 6
        %v1540 = vor.u32 %v1536, %v1539
        %v1541 = vrot.slane %v1540, 4
        %v1543 = vshrl.u32 %v1474, 16
        %v1545 = vrot.slane %v1543, 5
        %v1546 = vshll.u32 %v1474, 16
        %v1548 = vrot.slane %v1546, 6
        %v1549 = vor.u32 %v1545, %v1548
        %v1550 = vsel %vm1142, %v1541, %v1549
        %v1552 = vshrl.u32 %v1419, 16
        %v1554 = vrot.slane %v1552, 5
        %v1555 = vshll.u32 %v1419, 16
        %v1557 = vrot.slane %v1555, 6
        %v1558 = vor.u32 %v1554, %v1557
        %v1559 = vrot.slane %v1558, 4
        %v1561 = vshrl.u32 %v1475, 16
        %v1563 = vrot.slane %v1561, 5
        %v1564 = vshll.u32 %v1475, 16
        %v1566 = vrot.slane %v1564, 6
        %v1567 = vor.u32 %v1563, %v1566
        %v1568 = vsel %vm1142, %v1559, %v1567
        %v1570 = vshrl.u32 %v1420, 16
        %v1572 = vrot.slane %v1570, 5
        %v1573 = vshll.u32 %v1420, 16
        %v1575 = vrot.slane %v1573, 6
        %v1576 = vor.u32 %v1572, %v1575
        %v1577 = vrot.slane %v1576, 4
        %v1579 = vshrl.u32 %v1476, 16
        %v1581 = vrot.slane %v1579, 5
        %v1582 = vshll.u32 %v1476, 16
        %v1584 = vrot.slane %v1582, 6
        %v1585 = vor.u32 %v1581, %v1584
        %v1586 = vsel %vm1142, %v1577, %v1585
        %v1588 = vshrl.u32 %v1421, 16
        %v1590 = vrot.slane %v1588, 5
        %v1591 = vshll.u32 %v1421, 16
        %v1593 = vrot.slane %v1591, 6
        %v1594 = vor.u32 %v1590, %v1593
        %v1595 = vrot.slane %v1594, 4
        %v1597 = vshrl.u32 %v1477, 16
        %v1599 = vrot.slane %v1597, 5
        %v1600 = vshll.u32 %v1477, 16
        %v1602 = vrot.slane %v1600, 6
        %v1603 = vor.u32 %v1599, %v1602
        %v1604 = vsel %vm1142, %v1595, %v1603
        %v1606 = vshrl.u32 %v1422, 16
        %v1608 = vrot.slane %v1606, 5
        %v1609 = vshll.u32 %v1422, 16
        %v1611 = vrot.slane %v1609, 6
        %v1612 = vor.u32 %v1608, %v1611
        %v1613 = vrot.slane %v1612, 4
        %v1615 = vshrl.u32 %v1478, 16
        %v1617 = vrot.slane %v1615, 5
        %v1618 = vshll.u32 %v1478, 16
        %v1620 = vrot.slane %v1618, 6
        %v1621 = vor.u32 %v1617, %v1620
        %v1622 = vsel %vm1142, %v1613, %v1621
        %s1623 = scalar_lea.vmem [#allocation2], 16
        %v1624 = vld [vmem:[%s1623] sm:$0xf]
        %v1625 = vld [vmem:[%s1623 + $0x4] sm:$0x1]
        %v1626 = vld [vmem:[%s1623 + $0x8] sm:$0xf]
        %v1627 = vld [vmem:[%s1623 + $0xc] sm:$0x1]
        %v1628 = vld [vmem:[%s1623 + $0x10] sm:$0xf]
        %v1629 = vld [vmem:[%s1623 + $0x14] sm:$0x1]
        %v1630 = vld [vmem:[%s1623 + $0x18] sm:$0xf]
        %v1631 = vld [vmem:[%s1623 + $0x1c] sm:$0x1]
        %v1632 = vld [vmem:[%s1623 + $0x20] sm:$0xf]
        %v1633 = vld [vmem:[%s1623 + $0x24] sm:$0x1]
        %v1634 = vld [vmem:[%s1623 + $0x28] sm:$0xf]
        %v1635 = vld [vmem:[%s1623 + $0x2c] sm:$0x1]
        %v1636 = vld [vmem:[%s1623 + $0x30] sm:$0xf]
        %v1637 = vld [vmem:[%s1623 + $0x34] sm:$0x1]
        %v1638 = vld [vmem:[%s1623 + $0x38] sm:$0xf]
        %v1639 = vld [vmem:[%s1623 + $0x3c] sm:$0x1]
        %v1641 = vshrl.u32 %v1624, 16
        %v1643 = vrot.slane %v1641, 4
        %v1644 = vshll.u32 %v1624, 16
        %v1646 = vrot.slane %v1644, 5
        %v1647 = vor.u32 %v1643, %v1646
        %v1648 = vrot.slane %v1647, 4
        %v1650 = vshll.u32 %v1625, 16
        %v1652 = vrot.slane %v1650, 5
        %v1653 = vsel %vm960, %v1648, %v1652
        %v1655 = vshrl.u32 %v1626, 16
        %v1657 = vrot.slane %v1655, 4
        %v1658 = vshll.u32 %v1626, 16
        %v1660 = vrot.slane %v1658, 5
        %v1661 = vor.u32 %v1657, %v1660
        %v1662 = vrot.slane %v1661, 4
        %v1664 = vshll.u32 %v1627, 16
        %v1666 = vrot.slane %v1664, 5
        %v1667 = vsel %vm960, %v1662, %v1666
        %v1669 = vshrl.u32 %v1628, 16
        %v1671 = vrot.slane %v1669, 4
        %v1672 = vshll.u32 %v1628, 16
        %v1674 = vrot.slane %v1672, 5
        %v1675 = vor.u32 %v1671, %v1674
        %v1676 = vrot.slane %v1675, 4
        %v1678 = vshll.u32 %v1629, 16
        %v1680 = vrot.slane %v1678, 5
        %v1681 = vsel %vm960, %v1676, %v1680
        %v1683 = vshrl.u32 %v1630, 16
        %v1685 = vrot.slane %v1683, 4
        %v1686 = vshll.u32 %v1630, 16
        %v1688 = vrot.slane %v1686, 5
        %v1689 = vor.u32 %v1685, %v1688
        %v1690 = vrot.slane %v1689, 4
        %v1692 = vshll.u32 %v1631, 16
        %v1694 = vrot.slane %v1692, 5
        %v1695 = vsel %vm960, %v1690, %v1694
        %v1697 = vshrl.u32 %v1632, 16
        %v1699 = vrot.slane %v1697, 4
        %v1700 = vshll.u32 %v1632, 16
        %v1702 = vrot.slane %v1700, 5
        %v1703 = vor.u32 %v1699, %v1702
        %v1704 = vrot.slane %v1703, 4
        %v1706 = vshll.u32 %v1633, 16
        %v1708 = vrot.slane %v1706, 5
        %v1709 = vsel %vm960, %v1704, %v1708
        %v1711 = vshrl.u32 %v1634, 16
        %v1713 = vrot.slane %v1711, 4
        %v1714 = vshll.u32 %v1634, 16
        %v1716 = vrot.slane %v1714, 5
        %v1717 = vor.u32 %v1713, %v1716
        %v1718 = vrot.slane %v1717, 4
        %v1720 = vshll.u32 %v1635, 16
        %v1722 = vrot.slane %v1720, 5
        %v1723 = vsel %vm960, %v1718, %v1722
        %v1725 = vshrl.u32 %v1636, 16
        %v1727 = vrot.slane %v1725, 4
        %v1728 = vshll.u32 %v1636, 16
        %v1730 = vrot.slane %v1728, 5
        %v1731 = vor.u32 %v1727, %v1730
        %v1732 = vrot.slane %v1731, 4
        %v1734 = vshll.u32 %v1637, 16
        %v1736 = vrot.slane %v1734, 5
        %v1737 = vsel %vm960, %v1732, %v1736
        %v1739 = vshrl.u32 %v1638, 16
        %v1741 = vrot.slane %v1739, 4
        %v1742 = vshll.u32 %v1638, 16
        %v1744 = vrot.slane %v1742, 5
        %v1745 = vor.u32 %v1741, %v1744
        %v1746 = vrot.slane %v1745, 4
        %v1748 = vshll.u32 %v1639, 16
        %v1750 = vrot.slane %v1748, 5
        %v1751 = vsel %vm960, %v1746, %v1750
        %v1752 = vld [vmem:[%s1623] sm:$0xe]
        %v1753 = vld [vmem:[%s1623 + $0x8] sm:$0xe]
        %v1754 = vld [vmem:[%s1623 + $0x10] sm:$0xe]
        %v1755 = vld [vmem:[%s1623 + $0x18] sm:$0xe]
        %v1756 = vld [vmem:[%s1623 + $0x20] sm:$0xe]
        %v1757 = vld [vmem:[%s1623 + $0x28] sm:$0xe]
        %v1758 = vld [vmem:[%s1623 + $0x30] sm:$0xe]
        %v1759 = vld [vmem:[%s1623 + $0x38] sm:$0xe]
        %v1776 = vrot.slane %v1752, 5
        %v1777 = vrot.slane %v1776, 4
        %v1778 = vrot.slane %v1625, 5
        %v1779 = vsel %vm1099, %v1777, %v1778
        %v1780 = vrot.slane %v1753, 5
        %v1781 = vrot.slane %v1780, 4
        %v1782 = vrot.slane %v1627, 5
        %v1783 = vsel %vm1099, %v1781, %v1782
        %v1784 = vrot.slane %v1754, 5
        %v1785 = vrot.slane %v1784, 4
        %v1786 = vrot.slane %v1629, 5
        %v1787 = vsel %vm1099, %v1785, %v1786
        %v1788 = vrot.slane %v1755, 5
        %v1789 = vrot.slane %v1788, 4
        %v1790 = vrot.slane %v1631, 5
        %v1791 = vsel %vm1099, %v1789, %v1790
        %v1792 = vrot.slane %v1756, 5
        %v1793 = vrot.slane %v1792, 4
        %v1794 = vrot.slane %v1633, 5
        %v1795 = vsel %vm1099, %v1793, %v1794
        %v1796 = vrot.slane %v1757, 5
        %v1797 = vrot.slane %v1796, 4
        %v1798 = vrot.slane %v1635, 5
        %v1799 = vsel %vm1099, %v1797, %v1798
        %v1800 = vrot.slane %v1758, 5
        %v1801 = vrot.slane %v1800, 4
        %v1802 = vrot.slane %v1637, 5
        %v1803 = vsel %vm1099, %v1801, %v1802
        %v1804 = vrot.slane %v1759, 5
        %v1805 = vrot.slane %v1804, 4
        %v1806 = vrot.slane %v1639, 5
        %v1807 = vsel %vm1099, %v1805, %v1806
        %v1808 = vld [vmem:[%s1623 + $0x4] sm:$0x3]
        %v1809 = vld [vmem:[%s1623 + $0xc] sm:$0x3]
        %v1810 = vld [vmem:[%s1623 + $0x14] sm:$0x3]
        %v1811 = vld [vmem:[%s1623 + $0x1c] sm:$0x3]
        %v1812 = vld [vmem:[%s1623 + $0x24] sm:$0x3]
        %v1813 = vld [vmem:[%s1623 + $0x2c] sm:$0x3]
        %v1814 = vld [vmem:[%s1623 + $0x34] sm:$0x3]
        %v1815 = vld [vmem:[%s1623 + $0x3c] sm:$0x3]
        %v1817 = vshrl.u32 %v1752, 16
        %v1819 = vrot.slane %v1817, 5
        %v1820 = vshll.u32 %v1752, 16
        %v1822 = vrot.slane %v1820, 6
        %v1823 = vor.u32 %v1819, %v1822
        %v1824 = vrot.slane %v1823, 4
        %v1826 = vshrl.u32 %v1808, 16
        %v1828 = vrot.slane %v1826, 5
        %v1829 = vshll.u32 %v1808, 16
        %v1831 = vrot.slane %v1829, 6
        %v1832 = vor.u32 %v1828, %v1831
        %v1833 = vsel %vm1142, %v1824, %v1832
        %v1835 = vshrl.u32 %v1753, 16
        %v1837 = vrot.slane %v1835, 5
        %v1838 = vshll.u32 %v1753, 16
        %v1840 = vrot.slane %v1838, 6
        %v1841 = vor.u32 %v1837, %v1840
        %v1842 = vrot.slane %v1841, 4
        %v1844 = vshrl.u32 %v1809, 16
        %v1846 = vrot.slane %v1844, 5
        %v1847 = vshll.u32 %v1809, 16
        %v1849 = vrot.slane %v1847, 6
        %v1850 = vor.u32 %v1846, %v1849
        %v1851 = vsel %vm1142, %v1842, %v1850
        %v1853 = vshrl.u32 %v1754, 16
        %v1855 = vrot.slane %v1853, 5
        %v1856 = vshll.u32 %v1754, 16
        %v1858 = vrot.slane %v1856, 6
        %v1859 = vor.u32 %v1855, %v1858
        %v1860 = vrot.slane %v1859, 4
        %v1862 = vshrl.u32 %v1810, 16
        %v1864 = vrot.slane %v1862, 5
        %v1865 = vshll.u32 %v1810, 16
        %v1867 = vrot.slane %v1865, 6
        %v1868 = vor.u32 %v1864, %v1867
        %v1869 = vsel %vm1142, %v1860, %v1868
        %v1871 = vshrl.u32 %v1755, 16
        %v1873 = vrot.slane %v1871, 5
        %v1874 = vshll.u32 %v1755, 16
        %v1876 = vrot.slane %v1874, 6
        %v1877 = vor.u32 %v1873, %v1876
        %v1878 = vrot.slane %v1877, 4
        %v1880 = vshrl.u32 %v1811, 16
        %v1882 = vrot.slane %v1880, 5
        %v1883 = vshll.u32 %v1811, 16
        %v1885 = vrot.slane %v1883, 6
        %v1886 = vor.u32 %v1882, %v1885
        %v1887 = vsel %vm1142, %v1878, %v1886
        %v1889 = vshrl.u32 %v1756, 16
        %v1891 = vrot.slane %v1889, 5
        %v1892 = vshll.u32 %v1756, 16
        %v1894 = vrot.slane %v1892, 6
        %v1895 = vor.u32 %v1891, %v1894
        %v1896 = vrot.slane %v1895, 4
        %v1898 = vshrl.u32 %v1812, 16
        %v1900 = vrot.slane %v1898, 5
        %v1901 = vshll.u32 %v1812, 16
        %v1903 = vrot.slane %v1901, 6
        %v1904 = vor.u32 %v1900, %v1903
        %v1905 = vsel %vm1142, %v1896, %v1904
        %v1907 = vshrl.u32 %v1757, 16
        %v1909 = vrot.slane %v1907, 5
        %v1910 = vshll.u32 %v1757, 16
        %v1912 = vrot.slane %v1910, 6
        %v1913 = vor.u32 %v1909, %v1912
        %v1914 = vrot.slane %v1913, 4
        %v1916 = vshrl.u32 %v1813, 16
        %v1918 = vrot.slane %v1916, 5
        %v1919 = vshll.u32 %v1813, 16
        %v1921 = vrot.slane %v1919, 6
        %v1922 = vor.u32 %v1918, %v1921
        %v1923 = vsel %vm1142, %v1914, %v1922
        %v1925 = vshrl.u32 %v1758, 16
        %v1927 = vrot.slane %v1925, 5
        %v1928 = vshll.u32 %v1758, 16
        %v1930 = vrot.slane %v1928, 6
        %v1931 = vor.u32 %v1927, %v1930
        %v1932 = vrot.slane %v1931, 4
        %v1934 = vshrl.u32 %v1814, 16
        %v1936 = vrot.slane %v1934, 5
        %v1937 = vshll.u32 %v1814, 16
        %v1939 = vrot.slane %v1937, 6
        %v1940 = vor.u32 %v1936, %v1939
        %v1941 = vsel %vm1142, %v1932, %v1940
        %v1943 = vshrl.u32 %v1759, 16
        %v1945 = vrot.slane %v1943, 5
        %v1946 = vshll.u32 %v1759, 16
        %v1948 = vrot.slane %v1946, 6
        %v1949 = vor.u32 %v1945, %v1948
        %v1950 = vrot.slane %v1949, 4
        %v1952 = vshrl.u32 %v1815, 16
        %v1954 = vrot.slane %v1952, 5
        %v1955 = vshll.u32 %v1815, 16
        %v1957 = vrot.slane %v1955, 6
        %v1958 = vor.u32 %v1954, %v1957
        %v1959 = vsel %vm1142, %v1950, %v1958
        %v1960 = vunpack.c.l.b16 %v974
        %v1961 = vunpack.c.l.b16 %v988
        %v1962 = vunpack.c.l.b16 %v1002
        %v1963 = vunpack.c.l.b16 %v1016
        %v1964 = vunpack.c.l.b16 %v1030
        %v1965 = vunpack.c.l.b16 %v1044
        %v1966 = vunpack.c.l.b16 %v1058
        %v1967 = vunpack.c.l.b16 %v1072
        %v1968 = vpack.c.b16 %v1961, %v1960
        %v1969 = vpack.c.b16 %v1963, %v1962
        %v1970 = vpack.c.b16 %v1965, %v1964
        %v1971 = vpack.c.b16 %v1967, %v1966
        %v1972 = vunpack.c.l.b16 %v1103
        %v1973 = vunpack.c.l.b16 %v1107
        %v1974 = vunpack.c.l.b16 %v1111
        %v1975 = vunpack.c.l.b16 %v1115
        %v1976 = vunpack.c.l.b16 %v1119
        %v1977 = vunpack.c.l.b16 %v1123
        %v1978 = vunpack.c.l.b16 %v1127
        %v1979 = vunpack.c.l.b16 %v1131
        %v1980 = vpack.c.b16 %v1973, %v1972
        %v1981 = vpack.c.b16 %v1975, %v1974
        %v1982 = vpack.c.b16 %v1977, %v1976
        %v1983 = vpack.c.b16 %v1979, %v1978
        %1984 = vrot.lane.b32.xlu0 %v1980, 32
        %v1985 = vpop.permute.xlu0 %1984
        %1986 = vrot.lane.b32.xlu0 %v1981, 32
        %v1987 = vpop.permute.xlu0 %1986
        %1988 = vrot.lane.b32.xlu0 %v1982, 32
        %v1989 = vpop.permute.xlu0 %1988
        %1990 = vrot.lane.b32.xlu0 %v1983, 32
        %v1991 = vpop.permute.xlu0 %1990
        %v1992 = vunpack.c.l.b16 %v1160
        %v1993 = vunpack.c.l.b16 %v1178
        %v1994 = vunpack.c.l.b16 %v1196
        %v1995 = vunpack.c.l.b16 %v1214
        %v1996 = vunpack.c.l.b16 %v1232
        %v1997 = vunpack.c.l.b16 %v1250
        %v1998 = vunpack.c.l.b16 %v1268
        %v1999 = vunpack.c.l.b16 %v1286
        %v2000 = vpack.c.b16 %v1993, %v1992
        %v2001 = vpack.c.b16 %v1995, %v1994
        %v2002 = vpack.c.b16 %v1997, %v1996
        %v2003 = vpack.c.b16 %v1999, %v1998
        %2004 = vrot.lane.b32.xlu0 %v2000, 64
        %v2005 = vpop.permute.xlu0 %2004
        %2006 = vrot.lane.b32.xlu0 %v2001, 64
        %v2007 = vpop.permute.xlu0 %2006
        %2008 = vrot.lane.b32.xlu0 %v2002, 64
        %v2009 = vpop.permute.xlu0 %2008
        %2010 = vrot.lane.b32.xlu0 %v2003, 64
        %v2011 = vpop.permute.xlu0 %2010
        %v2012 = vunpack.c.l.b16 %v1316
        %v2013 = vunpack.c.l.b16 %v1330
        %v2014 = vunpack.c.l.b16 %v1344
        %v2015 = vunpack.c.l.b16 %v1358
        %v2016 = vunpack.c.l.b16 %v1372
        %v2017 = vunpack.c.l.b16 %v1386
        %v2018 = vunpack.c.l.b16 %v1400
        %v2019 = vunpack.c.l.b16 %v1414
        %v2020 = vpack.c.b16 %v2013, %v2012
        %v2021 = vpack.c.b16 %v2015, %v2014
        %v2022 = vpack.c.b16 %v2017, %v2016
        %v2023 = vpack.c.b16 %v2019, %v2018
        %2024 = vrot.lane.b32.xlu0 %v2020, 96
        %v2025 = vpop.permute.xlu0 %2024
        %2026 = vrot.lane.b32.xlu0 %v2021, 96
        %v2027 = vpop.permute.xlu0 %2026
        %2028 = vrot.lane.b32.xlu0 %v2022, 96
        %v2029 = vpop.permute.xlu0 %2028
        %2030 = vrot.lane.b32.xlu0 %v2023, 96
        %v2031 = vpop.permute.xlu0 %2030
        %v2032 = vunpack.c.l.b16 %v1442
        %v2033 = vunpack.c.l.b16 %v1446
        %v2034 = vunpack.c.l.b16 %v1450
        %v2035 = vunpack.c.l.b16 %v1454
        %v2036 = vunpack.c.l.b16 %v1458
        %v2037 = vunpack.c.l.b16 %v1462
        %v2038 = vunpack.c.l.b16 %v1466
        %v2039 = vunpack.c.l.b16 %v1470
        %v2040 = vpack.c.b16 %v2033, %v2032
        %v2041 = vpack.c.b16 %v2035, %v2034
        %v2042 = vpack.c.b16 %v2037, %v2036
        %v2043 = vpack.c.b16 %v2039, %v2038
        %v2044 = vunpack.c.l.b16 %v1496
        %v2045 = vunpack.c.l.b16 %v1514
        %v2046 = vunpack.c.l.b16 %v1532
        %v2047 = vunpack.c.l.b16 %v1550
        %v2048 = vunpack.c.l.b16 %v1568
        %v2049 = vunpack.c.l.b16 %v1586
        %v2050 = vunpack.c.l.b16 %v1604
        %v2051 = vunpack.c.l.b16 %v1622
        %v2052 = vpack.c.b16 %v2045, %v2044
        %v2053 = vpack.c.b16 %v2047, %v2046
        %v2054 = vpack.c.b16 %v2049, %v2048
        %v2055 = vpack.c.b16 %v2051, %v2050
        %2056 = vrot.lane.b32.xlu0 %v2052, 32
        %v2057 = vpop.permute.xlu0 %2056
        %2058 = vrot.lane.b32.xlu0 %v2053, 32
        %v2059 = vpop.permute.xlu0 %2058
        %2060 = vrot.lane.b32.xlu0 %v2054, 32
        %v2061 = vpop.permute.xlu0 %2060
        %2062 = vrot.lane.b32.xlu0 %v2055, 32
        %v2063 = vpop.permute.xlu0 %2062
        %v2064 = vunpack.c.l.b16 %v1653
        %v2065 = vunpack.c.l.b16 %v1667
        %v2066 = vunpack.c.l.b16 %v1681
        %v2067 = vunpack.c.l.b16 %v1695
        %v2068 = vunpack.c.l.b16 %v1709
        %v2069 = vunpack.c.l.b16 %v1723
        %v2070 = vunpack.c.l.b16 %v1737
        %v2071 = vunpack.c.l.b16 %v1751
        %v2072 = vpack.c.b16 %v2065, %v2064
        %v2073 = vpack.c.b16 %v2067, %v2066
        %v2074 = vpack.c.b16 %v2069, %v2068
        %v2075 = vpack.c.b16 %v2071, %v2070
        %2076 = vrot.lane.b32.xlu0 %v2072, 64
        %v2077 = vpop.permute.xlu0 %2076
        %2078 = vrot.lane.b32.xlu0 %v2073, 64
        %v2079 = vpop.permute.xlu0 %2078
        %2080 = vrot.lane.b32.xlu0 %v2074, 64
        %v2081 = vpop.permute.xlu0 %2080
        %2082 = vrot.lane.b32.xlu0 %v2075, 64
        %v2083 = vpop.permute.xlu0 %2082
        %v2084 = vunpack.c.l.b16 %v1779
        %v2085 = vunpack.c.l.b16 %v1783
        %v2086 = vunpack.c.l.b16 %v1787
        %v2087 = vunpack.c.l.b16 %v1791
        %v2088 = vunpack.c.l.b16 %v1795
        %v2089 = vunpack.c.l.b16 %v1799
        %v2090 = vunpack.c.l.b16 %v1803
        %v2091 = vunpack.c.l.b16 %v1807
        %v2092 = vpack.c.b16 %v2085, %v2084
        %v2093 = vpack.c.b16 %v2087, %v2086
        %v2094 = vpack.c.b16 %v2089, %v2088
        %v2095 = vpack.c.b16 %v2091, %v2090
        %2096 = vrot.lane.b32.xlu0 %v2092, 96
        %v2097 = vpop.permute.xlu0 %2096
        %2098 = vrot.lane.b32.xlu0 %v2093, 96
        %v2099 = vpop.permute.xlu0 %2098
        %2100 = vrot.lane.b32.xlu0 %v2094, 96
        %v2101 = vpop.permute.xlu0 %2100
        %2102 = vrot.lane.b32.xlu0 %v2095, 96
        %v2103 = vpop.permute.xlu0 %2102
        %v2104 = vunpack.c.l.b16 %v1833
        %v2105 = vunpack.c.l.b16 %v1851
        %v2106 = vunpack.c.l.b16 %v1869
        %v2107 = vunpack.c.l.b16 %v1887
        %v2108 = vunpack.c.l.b16 %v1905
        %v2109 = vunpack.c.l.b16 %v1923
        %v2110 = vunpack.c.l.b16 %v1941
        %v2111 = vunpack.c.l.b16 %v1959
        %v2112 = vpack.c.b16 %v2105, %v2104
        %v2113 = vpack.c.b16 %v2107, %v2106
        %v2114 = vpack.c.b16 %v2109, %v2108
        %v2115 = vpack.c.b16 %v2111, %v2110
        %v2118 = vsel %vm543, %v1968, %v1985
        %v2121 = vsel %vm543, %v1969, %v1987
        %v2124 = vsel %vm543, %v1970, %v1989
        %v2127 = vsel %vm543, %v1971, %v1991
        %vm2128 = vcmask 523264
        %v2130 = vsel %vm2128, %v2118, %v2005
        %v2132 = vsel %vm2128, %v2121, %v2007
        %v2134 = vsel %vm2128, %v2124, %v2009
        %v2136 = vsel %vm2128, %v2127, %v2011
        %vm2137 = vcmask 785408
        %v2139 = vsel %vm2137, %v2130, %v2025
        %v2142 = vsel %vm2137, %v2132, %v2027
        %v2145 = vsel %vm2137, %v2134, %v2029
        %v2148 = vsel %vm2137, %v2136, %v2031
        %v2152 = vsel %vm543, %v2040, %v2057
        %v2155 = vsel %vm543, %v2041, %v2059
        %v2158 = vsel %vm543, %v2042, %v2061
        %v2161 = vsel %vm543, %v2043, %v2063
        %v2163 = vsel %vm2128, %v2152, %v2077
        %v2165 = vsel %vm2128, %v2155, %v2079
        %v2167 = vsel %vm2128, %v2158, %v2081
        %v2169 = vsel %vm2128, %v2161, %v2083
        %v2171 = vsel %vm2137, %v2163, %v2097
        %v2174 = vsel %vm2137, %v2165, %v2099
        %v2177 = vsel %vm2137, %v2167, %v2101
        %v2180 = vsel %vm2137, %v2169, %v2103
        %v2182 = vld [vmem:[%s5] sm:$0xf]
        %v2183 = vld [vmem:[%s5 + $0x4] sm:$0xf]
        %v2184 = vld [vmem:[%s5 + $0x8] sm:$0xf]
        %v2185 = vld [vmem:[%s5 + $0xc] sm:$0xf]
        %v2186 = vld [vmem:[%s5 + $0x10] sm:$0xf]
        %v2187 = vld [vmem:[%s5 + $0x14] sm:$0xf]
        %v2188 = vld [vmem:[%s5 + $0x18] sm:$0xf]
        %v2189 = vld [vmem:[%s5 + $0x1c] sm:$0xf]
        %v2190 = vld [vmem:[%s5 + $0x20] sm:$0xf]
        %v2191 = vld [vmem:[%s5 + $0x24] sm:$0xf]
        %v2192 = vld [vmem:[%s5 + $0x28] sm:$0xf]
        %v2193 = vld [vmem:[%s5 + $0x2c] sm:$0xf]
        %v2194 = vld [vmem:[%s5 + $0x30] sm:$0xf]
        %v2195 = vld [vmem:[%s5 + $0x34] sm:$0xf]
        %v2196 = vld [vmem:[%s5 + $0x38] sm:$0xf]
        %v2197 = vld [vmem:[%s5 + $0x3c] sm:$0xf]
        %v2198 = vld [vmem:[%s5 + $0x40] sm:$0xf]
        %v2199 = vld [vmem:[%s5 + $0x44] sm:$0xf]
        %v2200 = vld [vmem:[%s5 + $0x48] sm:$0xf]
        %v2201 = vld [vmem:[%s5 + $0x4c] sm:$0xf]
        %v2202 = vld [vmem:[%s5 + $0x50] sm:$0xf]
        %v2203 = vld [vmem:[%s5 + $0x54] sm:$0xf]
        %v2204 = vld [vmem:[%s5 + $0x58] sm:$0xf]
        %v2205 = vld [vmem:[%s5 + $0x5c] sm:$0xf]
        %v2206 = vld [vmem:[%s5 + $0x60] sm:$0xf]
        %v2207 = vld [vmem:[%s5 + $0x64] sm:$0xf]
        %v2208 = vld [vmem:[%s5 + $0x68] sm:$0xf]
        %v2209 = vld [vmem:[%s5 + $0x6c] sm:$0xf]
        %v2210 = vld [vmem:[%s5 + $0x70] sm:$0xf]
        %v2211 = vld [vmem:[%s5 + $0x74] sm:$0xf]
        %v2212 = vld [vmem:[%s5 + $0x78] sm:$0xf]
        %v2213 = vld [vmem:[%s5 + $0x7c] sm:$0xf]
        %v2214 = vld [vmem:[%s5 + $0x80] sm:$0xf]
        %v2215 = vld [vmem:[%s5 + $0x84] sm:$0xf]
        %v2216 = vld [vmem:[%s5 + $0x88] sm:$0xf]
        %v2217 = vld [vmem:[%s5 + $0x8c] sm:$0xf]
        %v2254 = vunpack.c.l.b16 %v2182
        %v2255 = vunpack.c.l.b16 %v2183
        %v2256 = vunpack.c.l.b16 %v2184
        %v2257 = vunpack.c.l.b16 %v2185
        %v2258 = vunpack.c.l.b16 %v2186
        %v2259 = vunpack.c.l.b16 %v2187
        %v2260 = vunpack.c.l.b16 %v2188
        %v2261 = vunpack.c.l.b16 %v2189
        %v2262 = vunpack.c.l.b16 %v2190
        %v2263 = vunpack.c.l.b16 %v2191
        %v2264 = vunpack.c.l.b16 %v2192
        %v2265 = vunpack.c.l.b16 %v2193
        %v2266 = vunpack.c.l.b16 %v2194
        %v2267 = vunpack.c.l.b16 %v2195
        %v2268 = vunpack.c.l.b16 %v2196
        %v2269 = vunpack.c.l.b16 %v2197
        %v2270 = vunpack.c.l.b16 %v2198
        %v2271 = vunpack.c.l.b16 %v2199
        %v2272 = vunpack.c.l.b16 %v2200
        %v2273 = vunpack.c.l.b16 %v2201
        %v2274 = vunpack.c.l.b16 %v2202
        %v2275 = vunpack.c.l.b16 %v2203
        %v2276 = vunpack.c.l.b16 %v2204
        %v2277 = vunpack.c.l.b16 %v2205
        %v2278 = vunpack.c.l.b16 %v2206
        %v2279 = vunpack.c.l.b16 %v2207
        %v2280 = vunpack.c.l.b16 %v2208
        %v2281 = vunpack.c.l.b16 %v2209
        %v2282 = vunpack.c.l.b16 %v2210
        %v2283 = vunpack.c.l.b16 %v2211
        %v2284 = vunpack.c.l.b16 %v2212
        %v2285 = vunpack.c.l.b16 %v2213
        %v2286 = vunpack.c.l.b16 %v2214
        %v2287 = vunpack.c.l.b16 %v2215
        %v2288 = vunpack.c.l.b16 %v2216
        %v2289 = vunpack.c.l.b16 %v2217
        %v2290 = vpack.c.b16 %v2255, %v2254
        %v2291 = vpack.c.b16 %v2257, %v2256
        %v2292 = vpack.c.b16 %v2259, %v2258
        %v2293 = vpack.c.b16 %v2261, %v2260
        %v2294 = vpack.c.b16 %v2263, %v2262
        %v2295 = vpack.c.b16 %v2265, %v2264
        %v2296 = vpack.c.b16 %v2267, %v2266
        %v2297 = vpack.c.b16 %v2269, %v2268
        %v2298 = vpack.c.b16 %v2271, %v2270
        %v2299 = vpack.c.b16 %v2273, %v2272
        %v2300 = vpack.c.b16 %v2275, %v2274
        %v2301 = vpack.c.b16 %v2277, %v2276
        %v2302 = vpack.c.b16 %v2279, %v2278
        %v2303 = vpack.c.b16 %v2281, %v2280
        %v2304 = vpack.c.b16 %v2283, %v2282
        %v2305 = vpack.c.b16 %v2285, %v2284
        %v2306 = vpack.c.b16 %v2287, %v2286
        %v2307 = vpack.c.b16 %v2289, %v2288
        %v2327 = vsel %vm543, %v2112, 0
        %v2330 = vsel %vm543, %v2113, 0
        %v2333 = vsel %vm543, %v2114, 0
        %v2336 = vsel %vm543, %v2115, 0
        %2338 = vmatprep.subr.bf16.mxu0 0
        %2339 = vmatpush1.bf16.msra.mxu0 %v2297
        %2340 = vmatprep.subr.bf16.mxu0 0
        %2341 = vmatpush1.bf16.msra.mxu0 %v2296
        %2342 = vmatprep.subr.bf16.mxu0 0
        %2343 = vmatpush1.bf16.msra.mxu0 %v2295
        %2344 = vmatprep.subr.bf16.mxu0 0
        %2345 = vmatpush1.bf16.msra.mxu0 %v2294
        %2346 = vmatprep.subr.bf16.mxu0 0
        %2347 = vmatpush1.bf16.msra.mxu0 %v2293
        %2348 = vmatprep.subr.bf16.mxu0 0
        %2349 = vmatpush1.bf16.msra.mxu0 %v2292
        %2350 = vmatprep.subr.bf16.mxu0 0
        %2351 = vmatpush1.bf16.msra.mxu0 %v2291
        %2352 = vmatprep.subr.bf16.mxu0 0
        %2353 = vmatpush1.bf16.msra.mxu0 %v2290
        %2354 = vmatprep.subr.bf16.mxu0 0
        %2355 = vmatpush2.bf16.msra.mxu0 %v2305
        %2356 = vmatprep.subr.bf16.mxu0 0
        %2357 = vmatpush2.bf16.msra.mxu0 %v2304
        %2358 = vmatprep.subr.bf16.mxu0 0
        %2359 = vmatpush2.bf16.msra.mxu0 %v2303
        %2360 = vmatprep.subr.bf16.mxu0 0
        %2361 = vmatpush2.bf16.msra.mxu0 %v2302
        %2362 = vmatprep.subr.bf16.mxu0 0
        %2363 = vmatpush2.bf16.msra.mxu0 %v2301
        %2364 = vmatprep.subr.bf16.mxu0 0
        %2365 = vmatpush2.bf16.msra.mxu0 %v2300
        %2366 = vmatprep.subr.bf16.mxu0 0
        %2367 = vmatpush2.bf16.msra.mxu0 %v2299
        %2368 = vmatprep.subr.bf16.mxu0 0
        %2369 = vmatpush2.bf16.msra.mxu0 %v2298
        %2370 = vmatprep.mubr.bf16.mxu0 %v2171
        %2371 = vmatmul.mubr.bf16.gmra.mxu0 %v2139
        %v2372 = vpop.f32.mrf.mxu0
        %v2373 = vadd.f32 0.0, %v2372
        %v2374 = vpop.f32.mrf.mxu0
        %v2375 = vpop.f32.mrf.mxu0
        %v2376 = vadd.f32 0.0, %v2375
        %v2377 = vpop.f32.mrf.mxu0
        %2378 = vmatprep.mubr.bf16.mxu0 %v2174
        %2379 = vmatmul.mubr.bf16.gmra.mxu0 %v2142
        %v2380 = vpop.f32.mrf.mxu0
        %v2381 = vadd.f32 0.0, %v2380
        %v2382 = vpop.f32.mrf.mxu0
        %v2383 = vpop.f32.mrf.mxu0
        %v2384 = vadd.f32 0.0, %v2383
        %v2385 = vpop.f32.mrf.mxu0
        %2386 = vmatprep.mubr.bf16.mxu0 %v2177
        %2387 = vmatmul.mubr.bf16.gmra.mxu0 %v2145
        %v2388 = vpop.f32.mrf.mxu0
        %v2389 = vadd.f32 0.0, %v2388
        %v2390 = vpop.f32.mrf.mxu0
        %v2391 = vpop.f32.mrf.mxu0
        %v2392 = vadd.f32 0.0, %v2391
        %v2393 = vpop.f32.mrf.mxu0
        %2394 = vmatprep.mubr.bf16.mxu0 %v2180
        %2395 = vmatmul.mubr.bf16.gmra.mxu0 %v2148
        %v2396 = vpop.f32.mrf.mxu0
        %v2397 = vadd.f32 0.0, %v2396
        %v2398 = vpop.f32.mrf.mxu0
        %v2399 = vpop.f32.mrf.mxu0
        %v2400 = vadd.f32 0.0, %v2399
        %v2401 = vpop.f32.mrf.mxu0
        %2402 = vdwg.mxu0
        %2403 = vmatprep.subr.bf16.mxu0 0
        %2404 = vmatpush1.bf16.msra.mxu0 0
        %2405 = vmatprep.subr.bf16.mxu0 0
        %2406 = vmatpush1.bf16.msra.mxu0 0
        %2407 = vmatprep.subr.bf16.mxu0 0
        %2408 = vmatpush1.bf16.msra.mxu0 0
        %2409 = vmatprep.subr.bf16.mxu0 0
        %2410 = vmatpush1.bf16.msra.mxu0 0
        %2411 = vmatprep.subr.bf16.mxu0 0
        %2412 = vmatpush1.bf16.msra.mxu0 0
        %2413 = vmatprep.subr.bf16.mxu0 0
        %2414 = vmatpush1.bf16.msra.mxu0 0
        %2415 = vmatprep.subr.bf16.mxu0 0
        %2416 = vmatpush1.bf16.msra.mxu0 %v2307
        %2417 = vmatprep.subr.bf16.mxu0 0
        %2418 = vmatpush1.bf16.msra.mxu0 %v2306
        %2419 = vmatprep.subr.bf16.mxu0 0
        %2420 = vmatpush2.bf16.msra.mxu0 0
        %2421 = vmatprep.subr.bf16.mxu0 0
        %2422 = vmatpush2.bf16.msra.mxu0 0
        %2423 = vmatprep.subr.bf16.mxu0 0
        %2424 = vmatpush2.bf16.msra.mxu0 0
        %2425 = vmatprep.subr.bf16.mxu0 0
        %2426 = vmatpush2.bf16.msra.mxu0 0
        %2427 = vmatprep.subr.bf16.mxu0 0
        %2428 = vmatpush2.bf16.msra.mxu0 0
        %2429 = vmatprep.subr.bf16.mxu0 0
        %2430 = vmatpush2.bf16.msra.mxu0 0
        %2431 = vmatprep.subr.bf16.mxu0 0
        %2432 = vmatpush2.bf16.msra.mxu0 0
        %2433 = vmatprep.subr.bf16.mxu0 0
        %2434 = vmatpush2.bf16.msra.mxu0 0
        %2435 = vmatprep.mubr.bf16.mxu0 0
        %2436 = vmatmul.mubr.bf16.gmra.mxu0 %v2327
        %v2437 = vpop.f32.mrf.mxu0
        %v2438 = vadd.f32 %v2373, %v2437
        %v2439 = vpop.f32.mrf.mxu0
        %v2440 = vpop.f32.mrf.mxu0
        %v2441 = vadd.f32 %v2376, %v2440
        %v2442 = vpop.f32.mrf.mxu0
        %2443 = vmatprep.mubr.bf16.mxu0 0
        %2444 = vmatmul.mubr.bf16.gmra.mxu0 %v2330
        %v2445 = vpop.f32.mrf.mxu0
        %v2446 = vadd.f32 %v2381, %v2445
        %v2447 = vpop.f32.mrf.mxu0
        %v2448 = vpop.f32.mrf.mxu0
        %v2449 = vadd.f32 %v2384, %v2448
        %v2450 = vpop.f32.mrf.mxu0
        %2451 = vmatprep.mubr.bf16.mxu0 0
        %2452 = vmatmul.mubr.bf16.gmra.mxu0 %v2333
        %v2453 = vpop.f32.mrf.mxu0
        %v2454 = vadd.f32 %v2389, %v2453
        %v2455 = vpop.f32.mrf.mxu0
        %v2456 = vpop.f32.mrf.mxu0
        %v2457 = vadd.f32 %v2392, %v2456
        %v2458 = vpop.f32.mrf.mxu0
        %2459 = vmatprep.mubr.bf16.mxu0 0
        %2460 = vmatmul.mubr.bf16.gmra.mxu0 %v2336
        %v2461 = vpop.f32.mrf.mxu0
        %v2462 = vadd.f32 %v2397, %v2461
        %v2463 = vpop.f32.mrf.mxu0
        %v2464 = vpop.f32.mrf.mxu0
        %v2465 = vadd.f32 %v2400, %v2464
        %v2466 = vpop.f32.mrf.mxu0
        %2467 = vdwg.mxu0
        %v2468 = vld [vmem:[%s6] sm:$0x1]
        %v2470 = vlaneseq
        %v2471 = vshrl.u32 %v2470, 7
        %v2472 = vsub.s32 0, %v2471
        %v2473 = vrot.slane %v2468, %v2472
        %v2475 = vadd.f32 %v2438, %v2473
        %v2476 = vadd.f32 %v2441, %v2473
        %v2477 = vadd.f32 %v2446, %v2473
        %v2478 = vadd.f32 %v2449, %v2473
        %v2479 = vadd.f32 %v2454, %v2473
        %v2480 = vadd.f32 %v2457, %v2473
        %v2481 = vadd.f32 %v2462, %v2473
        %v2482 = vadd.f32 %v2465, %v2473
        %v2483 = vld [vmem:[%s533] sm:$0x1]
        %v2484 = vxor.u32 %v2483, 2147483648
        %v2485 = vmul.f32 %v2484, 1.442695
        %v2486 = vpow.pop %v2485
        %v2487 = vadd.f32 %v2486, 1.0
        %v2488 = vrcp.pop %v2487
        %v2489 = vmul.f32 1.0, %v2488
        %v2490 = vmul.f32 %v2483, %v2489
        %v2491 = vpack.c.bf16 %v2490, %v2490
        %v2492 = vld [vmem:[%s7] sm:$0xf]
        %v2493 = vld [vmem:[%s7 + $0x4] sm:$0xf]
        %v2494 = vld [vmem:[%s7 + $0x8] sm:$0xf]
        %v2495 = vld [vmem:[%s7 + $0xc] sm:$0xf]
        %v2496 = vld [vmem:[%s8] sm:$0x1]
        %v2501 = vunpack.c.l.b16 %v2492
        %v2502 = vunpack.c.l.b16 %v2493
        %v2503 = vunpack.c.l.b16 %v2494
        %v2504 = vunpack.c.l.b16 %v2495
        %v2505 = vpack.c.b16 %v2502, %v2501
        %v2506 = vpack.c.b16 %v2504, %v2503
        %v2510 = vsel %vm543, %v2491, 0
        %2512 = vmatprep.subr.bf16.mxu0 0
        %2513 = vmatpush1.bf16.msra.mxu0 0
        %2514 = vmatprep.subr.bf16.mxu0 0
        %2515 = vmatpush1.bf16.msra.mxu0 0
        %2516 = vmatprep.subr.bf16.mxu0 0
        %2517 = vmatpush1.bf16.msra.mxu0 0
        %2518 = vmatprep.subr.bf16.mxu0 0
        %2519 = vmatpush1.bf16.msra.mxu0 0
        %2520 = vmatprep.subr.bf16.mxu0 0
        %2521 = vmatpush1.bf16.msra.mxu0 0
        %2522 = vmatprep.subr.bf16.mxu0 0
        %2523 = vmatpush1.bf16.msra.mxu0 0
        %2524 = vmatprep.subr.bf16.mxu0 0
        %2525 = vmatpush1.bf16.msra.mxu0 %v2506
        %2526 = vmatprep.subr.bf16.mxu0 0
        %2527 = vmatpush1.bf16.msra.mxu0 %v2505
        %2528 = vmatprep.subr.bf16.mxu0 0
        %2529 = vmatpush2.bf16.msra.mxu0 0
        %2530 = vmatprep.subr.bf16.mxu0 0
        %2531 = vmatpush2.bf16.msra.mxu0 0
        %2532 = vmatprep.subr.bf16.mxu0 0
        %2533 = vmatpush2.bf16.msra.mxu0 0
        %2534 = vmatprep.subr.bf16.mxu0 0
        %2535 = vmatpush2.bf16.msra.mxu0 0
        %2536 = vmatprep.subr.bf16.mxu0 0
        %2537 = vmatpush2.bf16.msra.mxu0 0
        %2538 = vmatprep.subr.bf16.mxu0 0
        %2539 = vmatpush2.bf16.msra.mxu0 0
        %2540 = vmatprep.subr.bf16.mxu0 0
        %2541 = vmatpush2.bf16.msra.mxu0 0
        %2542 = vmatprep.subr.bf16.mxu0 0
        %2543 = vmatpush2.bf16.msra.mxu0 0
        %2544 = vmatprep.mubr.bf16.mxu0 0
        %2545 = vmatmul.mubr.bf16.gmra.mxu0 %v2510
        %v2546 = vpop.f32.mrf.mxu0
        %v2547 = vadd.f32 %v2496, %v2546
        %v2548 = vpop.f32.mrf.mxu0
        %v2549 = vpop.f32.mrf.mxu0
        %v2550 = vpop.f32.mrf.mxu0
        %2551 = vdwg.mxu0
        %v2552 = vlaneseq
        %v2553 = vshrl.u32 %v2552, 7
        %v2554 = vsub.s32 0, %v2553
        %v2555 = vrot.slane %v2547, %v2554
        %v2556 = vadd.f32 %v2475, %v2555
        %v2557 = vadd.f32 %v2476, %v2555
        %v2558 = vadd.f32 %v2477, %v2555
        %v2559 = vadd.f32 %v2478, %v2555
        %v2560 = vadd.f32 %v2479, %v2555
        %v2561 = vadd.f32 %v2480, %v2555
        %v2562 = vadd.f32 %v2481, %v2555
        %v2563 = vadd.f32 %v2482, %v2555
        %v2564 = vsel %vm2128, %v2556, 0.0
        %v2565 = vsel %vm2128, %v2557, 0.0
        %v2566 = vadd.f32 %v2564, %v2565
        %v2567 = vsel %vm2128, %v2558, 0.0
        %v2568 = vadd.f32 %v2566, %v2567
        %v2569 = vsel %vm2128, %v2559, 0.0
        %v2570 = vadd.f32 %v2568, %v2569
        %v2571 = vsel %vm2128, %v2560, 0.0
        %v2572 = vadd.f32 %v2570, %v2571
        %v2573 = vsel %vm2128, %v2561, 0.0
        %v2574 = vadd.f32 %v2572, %v2573
        %v2575 = vsel %vm2128, %v2562, 0.0
        %v2576 = vadd.f32 %v2574, %v2575
        %v2577 = vsel %vm2128, %v2563, 0.0
        %v2578 = vadd.f32 %v2576, %v2577
        %v2579 = vrot.slane %v2578, 4
        %v2580 = vadd.f32 %v2578, %v2579
        %v2581 = vrot.slane %v2580, 2
        %v2582 = vadd.f32 %v2580, %v2581
        %v2583 = vrot.slane %v2582, 1
        %v2584 = vadd.f32 %v2582, %v2583
        %v2585 = vld [vmem:[%s11] sm:$0xff]
        %v2586 = vld [vmem:[%s11 + $0x8] sm:$0xff]
        %v2587 = vld [vmem:[%s11 + $0x10] sm:$0xff]
        %v2588 = vld [vmem:[%s11 + $0x18] sm:$0xff]
        %v2589 = vld [vmem:[%s11 + $0x20] sm:$0xff]
        %v2590 = vld [vmem:[%s11 + $0x28] sm:$0xff]
        %v2591 = vld [vmem:[%s11 + $0x30] sm:$0xff]
        %v2592 = vld [vmem:[%s11 + $0x38] sm:$0xff]
        %v2594 = vsel %vm2128, %v2584, 0
        %2596 = vmatprep.subr.mxu0 0.0
        %2597 = vmatpush1.msra.mxu0 0.0
        %2598 = vmatprep.subr.mxu0 0.0
        %2599 = vmatpush1.msra.mxu0 0.0
        %2600 = vmatprep.subr.mxu0 0.0
        %2601 = vmatpush1.msra.mxu0 0.0
        %2602 = vmatprep.subr.mxu0 0.0
        %2603 = vmatpush1.msra.mxu0 0.0
        %2604 = vmatprep.subr.mxu0 0.0
        %2605 = vmatpush1.msra.mxu0 0.0
        %2606 = vmatprep.subr.mxu0 0.0
        %2607 = vmatpush1.msra.mxu0 0.0
        %2608 = vmatprep.subr.mxu0 0.0
        %2609 = vmatpush1.msra.mxu0 0.0
        %2610 = vmatprep.subr.mxu0 0.0
        %2611 = vmatpush1.msra.mxu0 0.0
        %2612 = vmatprep.subr.mxu0 0.0
        %2613 = vmatpush1.msra.mxu0 %v2592
        %2614 = vmatprep.subr.mxu0 0.0
        %2615 = vmatpush1.msra.mxu0 %v2591
        %2616 = vmatprep.subr.mxu0 0.0
        %2617 = vmatpush1.msra.mxu0 %v2590
        %2618 = vmatprep.subr.mxu0 0.0
        %2619 = vmatpush1.msra.mxu0 %v2589
        %2620 = vmatprep.subr.mxu0 0.0
        %2621 = vmatpush1.msra.mxu0 %v2588
        %2622 = vmatprep.subr.mxu0 0.0
        %2623 = vmatpush1.msra.mxu0 %v2587
        %2624 = vmatprep.subr.mxu0 0.0
        %2625 = vmatpush1.msra.mxu0 %v2586
        %2626 = vmatprep.subr.mxu0 0.0
        %2627 = vmatpush1.msra.mxu0 %v2585
        %2628 = vmatprep.subr.mxu0 0.0
        %2629 = vmatpush2.msra.mxu0 0.0
        %2630 = vmatprep.subr.mxu0 0.0
        %2631 = vmatpush2.msra.mxu0 0.0
        %2632 = vmatprep.subr.mxu0 0.0
        %2633 = vmatpush2.msra.mxu0 0.0
        %2634 = vmatprep.subr.mxu0 0.0
        %2635 = vmatpush2.msra.mxu0 0.0
        %2636 = vmatprep.subr.mxu0 0.0
        %2637 = vmatpush2.msra.mxu0 0.0
        %2638 = vmatprep.subr.mxu0 0.0
        %2639 = vmatpush2.msra.mxu0 0.0
        %2640 = vmatprep.subr.mxu0 0.0
        %2641 = vmatpush2.msra.mxu0 0.0
        %2642 = vmatprep.subr.mxu0 0.0
        %2643 = vmatpush2.msra.mxu0 0.0
        %2644 = vmatprep.subr.mxu0 0.0
        %2645 = vmatpush2.msra.mxu0 0.0
        %2646 = vmatprep.subr.mxu0 0.0
        %2647 = vmatpush2.msra.mxu0 0.0
        %2648 = vmatprep.subr.mxu0 0.0
        %2649 = vmatpush2.msra.mxu0 0.0
        %2650 = vmatprep.subr.mxu0 0.0
        %2651 = vmatpush2.msra.mxu0 0.0
        %2652 = vmatprep.subr.mxu0 0.0
        %2653 = vmatpush2.msra.mxu0 0.0
        %2654 = vmatprep.subr.mxu0 0.0
        %2655 = vmatpush2.msra.mxu0 0.0
        %2656 = vmatprep.subr.mxu0 0.0
        %2657 = vmatpush2.msra.mxu0 0.0
        %2658 = vmatprep.subr.mxu0 0.0
        %2659 = vmatpush2.msra.mxu0 0.0
        %2660 = vmatprep.mubr.f32.mxu0 0.0
        %2661 = vmatmul.mubr.f32.gmra.mxu0 %v2594
        %v2662 = vpop.f32.mrf.mxu0
        %v2663 = vadd.f32 0.0, %v2662
        %v2664 = vpop.f32.mrf.mxu0
        %2665 = vdwg.mxu0
        %v2666 = vmul.f32 %v2663, 0.0078125
        %v2667 = vlaneseq
        %v2668 = vshrl.u32 %v2667, 7
        %v2669 = vsub.s32 0, %v2668
        %v2670 = vrot.slane %v2666, %v2669
        %v2671 = vsub.f32 %v2556, %v2670
        %v2672 = vsub.f32 %v2557, %v2670
        %v2673 = vsub.f32 %v2558, %v2670
        %v2674 = vsub.f32 %v2559, %v2670
        %v2675 = vsub.f32 %v2560, %v2670
        %v2676 = vsub.f32 %v2561, %v2670
        %v2677 = vsub.f32 %v2562, %v2670
        %v2678 = vsub.f32 %v2563, %v2670
        %v2679 = vmul.f32 %v2671, %v2671
        %v2680 = vmul.f32 %v2672, %v2672
        %v2681 = vmul.f32 %v2673, %v2673
        %v2682 = vmul.f32 %v2674, %v2674
        %v2683 = vmul.f32 %v2675, %v2675
        %v2684 = vmul.f32 %v2676, %v2676
        %v2685 = vmul.f32 %v2677, %v2677
        %v2686 = vmul.f32 %v2678, %v2678
        %v2687 = vsel %vm2128, %v2679, 0.0
        %v2688 = vsel %vm2128, %v2680, 0.0
        %v2689 = vadd.f32 %v2687, %v2688
        %v2690 = vsel %vm2128, %v2681, 0.0
        %v2691 = vadd.f32 %v2689, %v2690
        %v2692 = vsel %vm2128, %v2682, 0.0
        %v2693 = vadd.f32 %v2691, %v2692
        %v2694 = vsel %vm2128, %v2683, 0.0
        %v2695 = vadd.f32 %v2693, %v2694
        %v2696 = vsel %vm2128, %v2684, 0.0
        %v2697 = vadd.f32 %v2695, %v2696
        %v2698 = vsel %vm2128, %v2685, 0.0
        %v2699 = vadd.f32 %v2697, %v2698
        %v2700 = vsel %vm2128, %v2686, 0.0
        %v2701 = vadd.f32 %v2699, %v2700
        %v2702 = vrot.slane %v2701, 4
        %v2703 = vadd.f32 %v2701, %v2702
        %v2704 = vrot.slane %v2703, 2
        %v2705 = vadd.f32 %v2703, %v2704
        %v2706 = vrot.slane %v2705, 1
        %v2707 = vadd.f32 %v2705, %v2706
        %v2709 = vsel %vm2128, %v2707, 0
        %2711 = vmatprep.subr.mxu0 0.0
        %2712 = vmatpush1.msra.mxu0 0.0
        %2713 = vmatprep.subr.mxu0 0.0
        %2714 = vmatpush1.msra.mxu0 0.0
        %2715 = vmatprep.subr.mxu0 0.0
        %2716 = vmatpush1.msra.mxu0 0.0
        %2717 = vmatprep.subr.mxu0 0.0
        %2718 = vmatpush1.msra.mxu0 0.0
        %2719 = vmatprep.subr.mxu0 0.0
        %2720 = vmatpush1.msra.mxu0 0.0
        %2721 = vmatprep.subr.mxu0 0.0
        %2722 = vmatpush1.msra.mxu0 0.0
        %2723 = vmatprep.subr.mxu0 0.0
        %2724 = vmatpush1.msra.mxu0 0.0
        %2725 = vmatprep.subr.mxu0 0.0
        %2726 = vmatpush1.msra.mxu0 0.0
        %2727 = vmatprep.subr.mxu0 0.0
        %2728 = vmatpush1.msra.mxu0 %v2592
        %2729 = vmatprep.subr.mxu0 0.0
        %2730 = vmatpush1.msra.mxu0 %v2591
        %2731 = vmatprep.subr.mxu0 0.0
        %2732 = vmatpush1.msra.mxu0 %v2590
        %2733 = vmatprep.subr.mxu0 0.0
        %2734 = vmatpush1.msra.mxu0 %v2589
        %2735 = vmatprep.subr.mxu0 0.0
        %2736 = vmatpush1.msra.mxu0 %v2588
        %2737 = vmatprep.subr.mxu0 0.0
        %2738 = vmatpush1.msra.mxu0 %v2587
        %2739 = vmatprep.subr.mxu0 0.0
        %2740 = vmatpush1.msra.mxu0 %v2586
        %2741 = vmatprep.subr.mxu0 0.0
        %2742 = vmatpush1.msra.mxu0 %v2585
        %2743 = vmatprep.subr.mxu0 0.0
        %2744 = vmatpush2.msra.mxu0 0.0
        %2745 = vmatprep.subr.mxu0 0.0
        %2746 = vmatpush2.msra.mxu0 0.0
        %2747 = vmatprep.subr.mxu0 0.0
        %2748 = vmatpush2.msra.mxu0 0.0
        %2749 = vmatprep.subr.mxu0 0.0
        %2750 = vmatpush2.msra.mxu0 0.0
        %2751 = vmatprep.subr.mxu0 0.0
        %2752 = vmatpush2.msra.mxu0 0.0
        %2753 = vmatprep.subr.mxu0 0.0
        %2754 = vmatpush2.msra.mxu0 0.0
        %2755 = vmatprep.subr.mxu0 0.0
        %2756 = vmatpush2.msra.mxu0 0.0
        %2757 = vmatprep.subr.mxu0 0.0
        %2758 = vmatpush2.msra.mxu0 0.0
        %2759 = vmatprep.subr.mxu0 0.0
        %2760 = vmatpush2.msra.mxu0 0.0
        %2761 = vmatprep.subr.mxu0 0.0
        %2762 = vmatpush2.msra.mxu0 0.0
        %2763 = vmatprep.subr.mxu0 0.0
        %2764 = vmatpush2.msra.mxu0 0.0
        %2765 = vmatprep.subr.mxu0 0.0
        %2766 = vmatpush2.msra.mxu0 0.0
        %2767 = vmatprep.subr.mxu0 0.0
        %2768 = vmatpush2.msra.mxu0 0.0
        %2769 = vmatprep.subr.mxu0 0.0
        %2770 = vmatpush2.msra.mxu0 0.0
        %2771 = vmatprep.subr.mxu0 0.0
        %2772 = vmatpush2.msra.mxu0 0.0
        %2773 = vmatprep.subr.mxu0 0.0
        %2774 = vmatpush2.msra.mxu0 0.0
        %2775 = vmatprep.mubr.f32.mxu0 0.0
        %2776 = vmatmul.mubr.f32.gmra.mxu0 %v2709
        %v2777 = vpop.f32.mrf.mxu0
        %v2778 = vadd.f32 0.0, %v2777
        %v2779 = vpop.f32.mrf.mxu0
        %2780 = vdwg.mxu0
        %v2781 = vmul.f32 %v2778, 0.0078125
        %v2782 = vadd.f32 %v2781, 1e-05
        %v2783 = vrsqrt.pop %v2782
        %v2784 = vld [vmem:[%s9] sm:$0x1]
        %v2785 = vmul.f32 %v2783, %v2784
        %v2786 = vlaneseq
        %v2787 = vshrl.u32 %v2786, 7
        %v2788 = vsub.s32 0, %v2787
        %v2789 = vrot.slane %v2785, %v2788
        %v2790 = vmul.f32 %v2671, %v2789
        %v2791 = vmul.f32 %v2672, %v2789
        %v2792 = vmul.f32 %v2673, %v2789
        %v2793 = vmul.f32 %v2674, %v2789
        %v2794 = vmul.f32 %v2675, %v2789
        %v2795 = vmul.f32 %v2676, %v2789
        %v2796 = vmul.f32 %v2677, %v2789
        %v2797 = vmul.f32 %v2678, %v2789
        %v2798 = vld [vmem:[%s10] sm:$0x1]
        %v2800 = vlaneseq
        %v2801 = vshrl.u32 %v2800, 7
        %v2802 = vsub.s32 0, %v2801
        %v2803 = vrot.slane %v2798, %v2802
        %v2805 = vadd.f32 %v2790, %v2803
        %v2806 = vadd.f32 %v2791, %v2803
        %v2807 = vadd.f32 %v2792, %v2803
        %v2808 = vadd.f32 %v2793, %v2803
        %v2809 = vadd.f32 %v2794, %v2803
        %v2810 = vadd.f32 %v2795, %v2803
        %v2811 = vadd.f32 %v2796, %v2803
        %v2812 = vadd.f32 %v2797, %v2803
        %v2813 = vxor.u32 %v2805, 2147483648
        %v2814 = vxor.u32 %v2806, 2147483648
        %v2815 = vxor.u32 %v2807, 2147483648
        %v2816 = vxor.u32 %v2808, 2147483648
        %v2817 = vxor.u32 %v2809, 2147483648
        %v2818 = vxor.u32 %v2810, 2147483648
        %v2819 = vxor.u32 %v2811, 2147483648
        %v2820 = vxor.u32 %v2812, 2147483648
        %v2821 = vmul.f32 %v2813, 1.442695
        %v2822 = vpow.pop %v2821
        %v2823 = vmul.f32 %v2814, 1.442695
        %v2824 = vpow.pop %v2823
        %v2825 = vmul.f32 %v2815, 1.442695
        %v2826 = vpow.pop %v2825
        %v2827 = vmul.f32 %v2816, 1.442695
        %v2828 = vpow.pop %v2827
        %v2829 = vmul.f32 %v2817, 1.442695
        %v2830 = vpow.pop %v2829
        %v2831 = vmul.f32 %v2818, 1.442695
        %v2832 = vpow.pop %v2831
        %v2833 = vmul.f32 %v2819, 1.442695
        %v2834 = vpow.pop %v2833
        %v2835 = vmul.f32 %v2820, 1.442695
        %v2836 = vpow.pop %v2835
        %v2837 = vadd.f32 %v2822, 1.0
        %v2838 = vadd.f32 %v2824, 1.0
        %v2839 = vadd.f32 %v2826, 1.0
        %v2840 = vadd.f32 %v2828, 1.0
        %v2841 = vadd.f32 %v2830, 1.0
        %v2842 = vadd.f32 %v2832, 1.0
        %v2843 = vadd.f32 %v2834, 1.0
        %v2844 = vadd.f32 %v2836, 1.0
        %v2845 = vrcp.pop %v2837
        %v2846 = vmul.f32 1.0, %v2845
        %v2847 = vrcp.pop %v2838
        %v2848 = vmul.f32 1.0, %v2847
        %v2849 = vrcp.pop %v2839
        %v2850 = vmul.f32 1.0, %v2849
        %v2851 = vrcp.pop %v2840
        %v2852 = vmul.f32 1.0, %v2851
        %v2853 = vrcp.pop %v2841
        %v2854 = vmul.f32 1.0, %v2853
        %v2855 = vrcp.pop %v2842
        %v2856 = vmul.f32 1.0, %v2855
        %v2857 = vrcp.pop %v2843
        %v2858 = vmul.f32 1.0, %v2857
        %v2859 = vrcp.pop %v2844
        %v2860 = vmul.f32 1.0, %v2859
        %v2861 = vmul.f32 %v2805, %v2846
        %v2862 = vmul.f32 %v2806, %v2848
        %v2863 = vmul.f32 %v2807, %v2850
        %v2864 = vmul.f32 %v2808, %v2852
        %v2865 = vmul.f32 %v2809, %v2854
        %v2866 = vmul.f32 %v2810, %v2856
        %v2867 = vmul.f32 %v2811, %v2858
        %v2868 = vmul.f32 %v2812, %v2860
        %vm2869 = vcmask 519168
        %2870 = vst.msk [vmem:[#allocation3] sm:$0xf] %vm2869, 0
        %vm2871 = vcmask 517120
        %2872 = vst.msk [vmem:[#allocation3 + $0x4] sm:$0x3] %vm2871, 0
        %2873 = vst.msk [vmem:[#allocation3 + $0x8] sm:$0xf] %vm2869, 0
        %2874 = vst.msk [vmem:[#allocation3 + $0xc] sm:$0x3] %vm2871, 0
        %2875 = vst.msk [vmem:[#allocation3 + $0x10] sm:$0xf] %vm2869, 0
        %2876 = vst.msk [vmem:[#allocation3 + $0x14] sm:$0x3] %vm2871, 0
        %2877 = vst.msk [vmem:[#allocation3 + $0x18] sm:$0xf] %vm2869, 0
        %2878 = vst.msk [vmem:[#allocation3 + $0x1c] sm:$0x3] %vm2871, 0
        %2879 = vst.msk [vmem:[#allocation3 + $0x20] sm:$0xf] %vm2869, 0
        %2880 = vst.msk [vmem:[#allocation3 + $0x24] sm:$0x3] %vm2871, 0
        %2881 = vst.msk [vmem:[#allocation3 + $0x28] sm:$0xf] %vm2869, 0
        %2882 = vst.msk [vmem:[#allocation3 + $0x2c] sm:$0x3] %vm2871, 0
        %2883 = vst.msk [vmem:[#allocation3 + $0x30] sm:$0xf] %vm2869, 0
        %2884 = vst.msk [vmem:[#allocation3 + $0x34] sm:$0x3] %vm2871, 0
        %2885 = vst.msk [vmem:[#allocation3 + $0x38] sm:$0xf] %vm2869, 0
        %2886 = vst.msk [vmem:[#allocation3 + $0x3c] sm:$0x3] %vm2871, 0
        %2887 = vst.msk [vmem:[#allocation3 + $0x40] sm:$0xf] %vm2869, 0
        %2888 = vst.msk [vmem:[#allocation3 + $0x44] sm:$0x3] %vm2871, 0
        %2889 = vst.msk [vmem:[#allocation3 + $0x48] sm:$0xf] %vm2869, 0
        %2890 = vst.msk [vmem:[#allocation3 + $0x4c] sm:$0x3] %vm2871, 0
        %v2891 = vpack.c.bf16 %v2862, %v2861
        %v2892 = vpack.c.bf16 %v2864, %v2863
        %v2893 = vpack.c.bf16 %v2866, %v2865
        %v2894 = vpack.c.bf16 %v2868, %v2867
        %v2899 = vunpack.c.l.b16 %v2891
        %v2900 = vunpack.c.h.b16 %v2891
        %v2901 = vunpack.c.l.b16 %v2892
        %v2902 = vunpack.c.h.b16 %v2892
        %v2903 = vunpack.c.l.b16 %v2893
        %v2904 = vunpack.c.h.b16 %v2893
        %v2905 = vunpack.c.l.b16 %v2894
        %v2906 = vunpack.c.h.b16 %v2894
        %v2907 = vpack.c.b16 %v2899, %v2899
        %v2908 = vpack.c.b16 %v2900, %v2900
        %v2909 = vpack.c.b16 %v2901, %v2901
        %v2910 = vpack.c.b16 %v2902, %v2902
        %v2911 = vpack.c.b16 %v2903, %v2903
        %v2912 = vpack.c.b16 %v2904, %v2904
        %v2913 = vpack.c.b16 %v2905, %v2905
        %v2914 = vpack.c.b16 %v2906, %v2906
        %v2915 = vrot.slane %v2907, 7
        %v2916 = vrot.slane %v2915, 4
        %v2917 = vrot.slane %v2908, 7
        %v2918 = vrot.slane %v2917, 4
        %v2919 = vrot.slane %v2909, 7
        %v2920 = vrot.slane %v2919, 4
        %v2921 = vrot.slane %v2910, 7
        %v2922 = vrot.slane %v2921, 4
        %v2923 = vrot.slane %v2911, 7
        %v2924 = vrot.slane %v2923, 4
        %v2925 = vrot.slane %v2912, 7
        %v2926 = vrot.slane %v2925, 4
        %v2927 = vrot.slane %v2913, 7
        %v2928 = vrot.slane %v2927, 4
        %v2929 = vrot.slane %v2914, 7
        %v2930 = vrot.slane %v2929, 4
        %s2947 = scalar_lea.vmem [#allocation3], 8
        %vm2948 = vcmask 519169
        %2949 = vst.msk [vmem:[%s2947] sm:$0xe] %vm2948, %v2915
        %vm2950 = vcmask 516096
        %2951 = vst.msk [vmem:[%s2947 + $0x4] sm:$0x1] %vm2950, %v2916
        %2952 = vst.msk [vmem:[%s2947 + $0x8] sm:$0xe] %vm2948, %v2917
        %2953 = vst.msk [vmem:[%s2947 + $0xc] sm:$0x1] %vm2950, %v2918
        %2954 = vst.msk [vmem:[%s2947 + $0x10] sm:$0xe] %vm2948, %v2919
        %2955 = vst.msk [vmem:[%s2947 + $0x14] sm:$0x1] %vm2950, %v2920
        %2956 = vst.msk [vmem:[%s2947 + $0x18] sm:$0xe] %vm2948, %v2921
        %2957 = vst.msk [vmem:[%s2947 + $0x1c] sm:$0x1] %vm2950, %v2922
        %2958 = vst.msk [vmem:[%s2947 + $0x20] sm:$0xe] %vm2948, %v2923
        %2959 = vst.msk [vmem:[%s2947 + $0x24] sm:$0x1] %vm2950, %v2924
        %2960 = vst.msk [vmem:[%s2947 + $0x28] sm:$0xe] %vm2948, %v2925
        %2961 = vst.msk [vmem:[%s2947 + $0x2c] sm:$0x1] %vm2950, %v2926
        %2962 = vst.msk [vmem:[%s2947 + $0x30] sm:$0xe] %vm2948, %v2927
        %2963 = vst.msk [vmem:[%s2947 + $0x34] sm:$0x1] %vm2950, %v2928
        %2964 = vst.msk [vmem:[%s2947 + $0x38] sm:$0xe] %vm2948, %v2929
        %2965 = vst.msk [vmem:[%s2947 + $0x3c] sm:$0x1] %vm2950, %v2930
        %v2966 = vld [vmem:[#allocation3] sm:$0xf]
        %v2967 = vld [vmem:[#allocation3 + $0x4] sm:$0x1]
        %v2968 = vld [vmem:[#allocation3 + $0x8] sm:$0xf]
        %v2969 = vld [vmem:[#allocation3 + $0xc] sm:$0x1]
        %v2970 = vld [vmem:[#allocation3 + $0x10] sm:$0xf]
        %v2971 = vld [vmem:[#allocation3 + $0x14] sm:$0x1]
        %v2972 = vld [vmem:[#allocation3 + $0x18] sm:$0xf]
        %v2973 = vld [vmem:[#allocation3 + $0x1c] sm:$0x1]
        %v2974 = vld [vmem:[#allocation3 + $0x20] sm:$0xf]
        %v2975 = vld [vmem:[#allocation3 + $0x24] sm:$0x1]
        %v2976 = vld [vmem:[#allocation3 + $0x28] sm:$0xf]
        %v2977 = vld [vmem:[#allocation3 + $0x2c] sm:$0x1]
        %v2978 = vld [vmem:[#allocation3 + $0x30] sm:$0xf]
        %v2979 = vld [vmem:[#allocation3 + $0x34] sm:$0x1]
        %v2980 = vld [vmem:[#allocation3 + $0x38] sm:$0xf]
        %v2981 = vld [vmem:[#allocation3 + $0x3c] sm:$0x1]
        %v2983 = vshrl.u32 %v2966, 16
        %v2985 = vrot.slane %v2983, 4
        %v2986 = vshll.u32 %v2966, 16
        %v2988 = vrot.slane %v2986, 5
        %v2989 = vor.u32 %v2985, %v2988
        %v2990 = vrot.slane %v2989, 4
        %v2992 = vshll.u32 %v2967, 16
        %v2994 = vrot.slane %v2992, 5
        %v2995 = vsel %vm960, %v2990, %v2994
        %v2997 = vshrl.u32 %v2968, 16
        %v2999 = vrot.slane %v2997, 4
        %v3000 = vshll.u32 %v2968, 16
        %v3002 = vrot.slane %v3000, 5
        %v3003 = vor.u32 %v2999, %v3002
        %v3004 = vrot.slane %v3003, 4
        %v3006 = vshll.u32 %v2969, 16
        %v3008 = vrot.slane %v3006, 5
        %v3009 = vsel %vm960, %v3004, %v3008
        %v3011 = vshrl.u32 %v2970, 16
        %v3013 = vrot.slane %v3011, 4
        %v3014 = vshll.u32 %v2970, 16
        %v3016 = vrot.slane %v3014, 5
        %v3017 = vor.u32 %v3013, %v3016
        %v3018 = vrot.slane %v3017, 4
        %v3020 = vshll.u32 %v2971, 16
        %v3022 = vrot.slane %v3020, 5
        %v3023 = vsel %vm960, %v3018, %v3022
        %v3025 = vshrl.u32 %v2972, 16
        %v3027 = vrot.slane %v3025, 4
        %v3028 = vshll.u32 %v2972, 16
        %v3030 = vrot.slane %v3028, 5
        %v3031 = vor.u32 %v3027, %v3030
        %v3032 = vrot.slane %v3031, 4
        %v3034 = vshll.u32 %v2973, 16
        %v3036 = vrot.slane %v3034, 5
        %v3037 = vsel %vm960, %v3032, %v3036
        %v3039 = vshrl.u32 %v2974, 16
        %v3041 = vrot.slane %v3039, 4
        %v3042 = vshll.u32 %v2974, 16
        %v3044 = vrot.slane %v3042, 5
        %v3045 = vor.u32 %v3041, %v3044
        %v3046 = vrot.slane %v3045, 4
        %v3048 = vshll.u32 %v2975, 16
        %v3050 = vrot.slane %v3048, 5
        %v3051 = vsel %vm960, %v3046, %v3050
        %v3053 = vshrl.u32 %v2976, 16
        %v3055 = vrot.slane %v3053, 4
        %v3056 = vshll.u32 %v2976, 16
        %v3058 = vrot.slane %v3056, 5
        %v3059 = vor.u32 %v3055, %v3058
        %v3060 = vrot.slane %v3059, 4
        %v3062 = vshll.u32 %v2977, 16
        %v3064 = vrot.slane %v3062, 5
        %v3065 = vsel %vm960, %v3060, %v3064
        %v3067 = vshrl.u32 %v2978, 16
        %v3069 = vrot.slane %v3067, 4
        %v3070 = vshll.u32 %v2978, 16
        %v3072 = vrot.slane %v3070, 5
        %v3073 = vor.u32 %v3069, %v3072
        %v3074 = vrot.slane %v3073, 4
        %v3076 = vshll.u32 %v2979, 16
        %v3078 = vrot.slane %v3076, 5
        %v3079 = vsel %vm960, %v3074, %v3078
        %v3081 = vshrl.u32 %v2980, 16
        %v3083 = vrot.slane %v3081, 4
        %v3084 = vshll.u32 %v2980, 16
        %v3086 = vrot.slane %v3084, 5
        %v3087 = vor.u32 %v3083, %v3086
        %v3088 = vrot.slane %v3087, 4
        %v3090 = vshll.u32 %v2981, 16
        %v3092 = vrot.slane %v3090, 5
        %v3093 = vsel %vm960, %v3088, %v3092
        %v3094 = vld [vmem:[#allocation3] sm:$0xe]
        %v3095 = vld [vmem:[#allocation3 + $0x8] sm:$0xe]
        %v3096 = vld [vmem:[#allocation3 + $0x10] sm:$0xe]
        %v3097 = vld [vmem:[#allocation3 + $0x18] sm:$0xe]
        %v3098 = vld [vmem:[#allocation3 + $0x20] sm:$0xe]
        %v3099 = vld [vmem:[#allocation3 + $0x28] sm:$0xe]
        %v3100 = vld [vmem:[#allocation3 + $0x30] sm:$0xe]
        %v3101 = vld [vmem:[#allocation3 + $0x38] sm:$0xe]
        %v3118 = vrot.slane %v3094, 5
        %v3119 = vrot.slane %v3118, 4
        %v3120 = vrot.slane %v2967, 5
        %v3121 = vsel %vm1099, %v3119, %v3120
        %v3122 = vrot.slane %v3095, 5
        %v3123 = vrot.slane %v3122, 4
        %v3124 = vrot.slane %v2969, 5
        %v3125 = vsel %vm1099, %v3123, %v3124
        %v3126 = vrot.slane %v3096, 5
        %v3127 = vrot.slane %v3126, 4
        %v3128 = vrot.slane %v2971, 5
        %v3129 = vsel %vm1099, %v3127, %v3128
        %v3130 = vrot.slane %v3097, 5
        %v3131 = vrot.slane %v3130, 4
        %v3132 = vrot.slane %v2973, 5
        %v3133 = vsel %vm1099, %v3131, %v3132
        %v3134 = vrot.slane %v3098, 5
        %v3135 = vrot.slane %v3134, 4
        %v3136 = vrot.slane %v2975, 5
        %v3137 = vsel %vm1099, %v3135, %v3136
        %v3138 = vrot.slane %v3099, 5
        %v3139 = vrot.slane %v3138, 4
        %v3140 = vrot.slane %v2977, 5
        %v3141 = vsel %vm1099, %v3139, %v3140
        %v3142 = vrot.slane %v3100, 5
        %v3143 = vrot.slane %v3142, 4
        %v3144 = vrot.slane %v2979, 5
        %v3145 = vsel %vm1099, %v3143, %v3144
        %v3146 = vrot.slane %v3101, 5
        %v3147 = vrot.slane %v3146, 4
        %v3148 = vrot.slane %v2981, 5
        %v3149 = vsel %vm1099, %v3147, %v3148
        %v3150 = vld [vmem:[#allocation3 + $0x4] sm:$0x3]
        %v3151 = vld [vmem:[#allocation3 + $0xc] sm:$0x3]
        %v3152 = vld [vmem:[#allocation3 + $0x14] sm:$0x3]
        %v3153 = vld [vmem:[#allocation3 + $0x1c] sm:$0x3]
        %v3154 = vld [vmem:[#allocation3 + $0x24] sm:$0x3]
        %v3155 = vld [vmem:[#allocation3 + $0x2c] sm:$0x3]
        %v3156 = vld [vmem:[#allocation3 + $0x34] sm:$0x3]
        %v3157 = vld [vmem:[#allocation3 + $0x3c] sm:$0x3]
        %v3159 = vshrl.u32 %v3094, 16
        %v3161 = vrot.slane %v3159, 5
        %v3162 = vshll.u32 %v3094, 16
        %v3164 = vrot.slane %v3162, 6
        %v3165 = vor.u32 %v3161, %v3164
        %v3166 = vrot.slane %v3165, 4
        %v3168 = vshrl.u32 %v3150, 16
        %v3170 = vrot.slane %v3168, 5
        %v3171 = vshll.u32 %v3150, 16
        %v3173 = vrot.slane %v3171, 6
        %v3174 = vor.u32 %v3170, %v3173
        %v3175 = vsel %vm1142, %v3166, %v3174
        %v3177 = vshrl.u32 %v3095, 16
        %v3179 = vrot.slane %v3177, 5
        %v3180 = vshll.u32 %v3095, 16
        %v3182 = vrot.slane %v3180, 6
        %v3183 = vor.u32 %v3179, %v3182
        %v3184 = vrot.slane %v3183, 4
        %v3186 = vshrl.u32 %v3151, 16
        %v3188 = vrot.slane %v3186, 5
        %v3189 = vshll.u32 %v3151, 16
        %v3191 = vrot.slane %v3189, 6
        %v3192 = vor.u32 %v3188, %v3191
        %v3193 = vsel %vm1142, %v3184, %v3192
        %v3195 = vshrl.u32 %v3096, 16
        %v3197 = vrot.slane %v3195, 5
        %v3198 = vshll.u32 %v3096, 16
        %v3200 = vrot.slane %v3198, 6
        %v3201 = vor.u32 %v3197, %v3200
        %v3202 = vrot.slane %v3201, 4
        %v3204 = vshrl.u32 %v3152, 16
        %v3206 = vrot.slane %v3204, 5
        %v3207 = vshll.u32 %v3152, 16
        %v3209 = vrot.slane %v3207, 6
        %v3210 = vor.u32 %v3206, %v3209
        %v3211 = vsel %vm1142, %v3202, %v3210
        %v3213 = vshrl.u32 %v3097, 16
        %v3215 = vrot.slane %v3213, 5
        %v3216 = vshll.u32 %v3097, 16
        %v3218 = vrot.slane %v3216, 6
        %v3219 = vor.u32 %v3215, %v3218
        %v3220 = vrot.slane %v3219, 4
        %v3222 = vshrl.u32 %v3153, 16
        %v3224 = vrot.slane %v3222, 5
        %v3225 = vshll.u32 %v3153, 16
        %v3227 = vrot.slane %v3225, 6
        %v3228 = vor.u32 %v3224, %v3227
        %v3229 = vsel %vm1142, %v3220, %v3228
        %v3231 = vshrl.u32 %v3098, 16
        %v3233 = vrot.slane %v3231, 5
        %v3234 = vshll.u32 %v3098, 16
        %v3236 = vrot.slane %v3234, 6
        %v3237 = vor.u32 %v3233, %v3236
        %v3238 = vrot.slane %v3237, 4
        %v3240 = vshrl.u32 %v3154, 16
        %v3242 = vrot.slane %v3240, 5
        %v3243 = vshll.u32 %v3154, 16
        %v3245 = vrot.slane %v3243, 6
        %v3246 = vor.u32 %v3242, %v3245
        %v3247 = vsel %vm1142, %v3238, %v3246
        %v3249 = vshrl.u32 %v3099, 16
        %v3251 = vrot.slane %v3249, 5
        %v3252 = vshll.u32 %v3099, 16
        %v3254 = vrot.slane %v3252, 6
        %v3255 = vor.u32 %v3251, %v3254
        %v3256 = vrot.slane %v3255, 4
        %v3258 = vshrl.u32 %v3155, 16
        %v3260 = vrot.slane %v3258, 5
        %v3261 = vshll.u32 %v3155, 16
        %v3263 = vrot.slane %v3261, 6
        %v3264 = vor.u32 %v3260, %v3263
        %v3265 = vsel %vm1142, %v3256, %v3264
        %v3267 = vshrl.u32 %v3100, 16
        %v3269 = vrot.slane %v3267, 5
        %v3270 = vshll.u32 %v3100, 16
        %v3272 = vrot.slane %v3270, 6
        %v3273 = vor.u32 %v3269, %v3272
        %v3274 = vrot.slane %v3273, 4
        %v3276 = vshrl.u32 %v3156, 16
        %v3278 = vrot.slane %v3276, 5
        %v3279 = vshll.u32 %v3156, 16
        %v3281 = vrot.slane %v3279, 6
        %v3282 = vor.u32 %v3278, %v3281
        %v3283 = vsel %vm1142, %v3274, %v3282
        %v3285 = vshrl.u32 %v3101, 16
        %v3287 = vrot.slane %v3285, 5
        %v3288 = vshll.u32 %v3101, 16
        %v3290 = vrot.slane %v3288, 6
        %v3291 = vor.u32 %v3287, %v3290
        %v3292 = vrot.slane %v3291, 4
        %v3294 = vshrl.u32 %v3157, 16
        %v3296 = vrot.slane %v3294, 5
        %v3297 = vshll.u32 %v3157, 16
        %v3299 = vrot.slane %v3297, 6
        %v3300 = vor.u32 %v3296, %v3299
        %v3301 = vsel %vm1142, %v3292, %v3300
        %v3302 = vld [vmem:[%s2947] sm:$0xf]
        %v3303 = vld [vmem:[%s2947 + $0x4] sm:$0x1]
        %v3304 = vld [vmem:[%s2947 + $0x8] sm:$0xf]
        %v3305 = vld [vmem:[%s2947 + $0xc] sm:$0x1]
        %v3306 = vld [vmem:[%s2947 + $0x10] sm:$0xf]
        %v3307 = vld [vmem:[%s2947 + $0x14] sm:$0x1]
        %v3308 = vld [vmem:[%s2947 + $0x18] sm:$0xf]
        %v3309 = vld [vmem:[%s2947 + $0x1c] sm:$0x1]
        %v3310 = vld [vmem:[%s2947 + $0x20] sm:$0xf]
        %v3311 = vld [vmem:[%s2947 + $0x24] sm:$0x1]
        %v3312 = vld [vmem:[%s2947 + $0x28] sm:$0xf]
        %v3313 = vld [vmem:[%s2947 + $0x2c] sm:$0x1]
        %v3314 = vld [vmem:[%s2947 + $0x30] sm:$0xf]
        %v3315 = vld [vmem:[%s2947 + $0x34] sm:$0x1]
        %v3316 = vld [vmem:[%s2947 + $0x38] sm:$0xf]
        %v3317 = vld [vmem:[%s2947 + $0x3c] sm:$0x1]
        %v3319 = vshrl.u32 %v3302, 16
        %v3321 = vrot.slane %v3319, 4
        %v3322 = vshll.u32 %v3302, 16
        %v3324 = vrot.slane %v3322, 5
        %v3325 = vor.u32 %v3321, %v3324
        %v3326 = vrot.slane %v3325, 4
        %v3328 = vshll.u32 %v3303, 16
        %v3330 = vrot.slane %v3328, 5
        %v3331 = vsel %vm960, %v3326, %v3330
        %v3333 = vshrl.u32 %v3304, 16
        %v3335 = vrot.slane %v3333, 4
        %v3336 = vshll.u32 %v3304, 16
        %v3338 = vrot.slane %v3336, 5
        %v3339 = vor.u32 %v3335, %v3338
        %v3340 = vrot.slane %v3339, 4
        %v3342 = vshll.u32 %v3305, 16
        %v3344 = vrot.slane %v3342, 5
        %v3345 = vsel %vm960, %v3340, %v3344
        %v3347 = vshrl.u32 %v3306, 16
        %v3349 = vrot.slane %v3347, 4
        %v3350 = vshll.u32 %v3306, 16
        %v3352 = vrot.slane %v3350, 5
        %v3353 = vor.u32 %v3349, %v3352
        %v3354 = vrot.slane %v3353, 4
        %v3356 = vshll.u32 %v3307, 16
        %v3358 = vrot.slane %v3356, 5
        %v3359 = vsel %vm960, %v3354, %v3358
        %v3361 = vshrl.u32 %v3308, 16
        %v3363 = vrot.slane %v3361, 4
        %v3364 = vshll.u32 %v3308, 16
        %v3366 = vrot.slane %v3364, 5
        %v3367 = vor.u32 %v3363, %v3366
        %v3368 = vrot.slane %v3367, 4
        %v3370 = vshll.u32 %v3309, 16
        %v3372 = vrot.slane %v3370, 5
        %v3373 = vsel %vm960, %v3368, %v3372
        %v3375 = vshrl.u32 %v3310, 16
        %v3377 = vrot.slane %v3375, 4
        %v3378 = vshll.u32 %v3310, 16
        %v3380 = vrot.slane %v3378, 5
        %v3381 = vor.u32 %v3377, %v3380
        %v3382 = vrot.slane %v3381, 4
        %v3384 = vshll.u32 %v3311, 16
        %v3386 = vrot.slane %v3384, 5
        %v3387 = vsel %vm960, %v3382, %v3386
        %v3389 = vshrl.u32 %v3312, 16
        %v3391 = vrot.slane %v3389, 4
        %v3392 = vshll.u32 %v3312, 16
        %v3394 = vrot.slane %v3392, 5
        %v3395 = vor.u32 %v3391, %v3394
        %v3396 = vrot.slane %v3395, 4
        %v3398 = vshll.u32 %v3313, 16
        %v3400 = vrot.slane %v3398, 5
        %v3401 = vsel %vm960, %v3396, %v3400
        %v3403 = vshrl.u32 %v3314, 16
        %v3405 = vrot.slane %v3403, 4
        %v3406 = vshll.u32 %v3314, 16
        %v3408 = vrot.slane %v3406, 5
        %v3409 = vor.u32 %v3405, %v3408
        %v3410 = vrot.slane %v3409, 4
        %v3412 = vshll.u32 %v3315, 16
        %v3414 = vrot.slane %v3412, 5
        %v3415 = vsel %vm960, %v3410, %v3414
        %v3417 = vshrl.u32 %v3316, 16
        %v3419 = vrot.slane %v3417, 4
        %v3420 = vshll.u32 %v3316, 16
        %v3422 = vrot.slane %v3420, 5
        %v3423 = vor.u32 %v3419, %v3422
        %v3424 = vrot.slane %v3423, 4
        %v3426 = vshll.u32 %v3317, 16
        %v3428 = vrot.slane %v3426, 5
        %v3429 = vsel %vm960, %v3424, %v3428
        %v3430 = vld [vmem:[%s2947] sm:$0xe]
        %v3431 = vld [vmem:[%s2947 + $0x8] sm:$0xe]
        %v3432 = vld [vmem:[%s2947 + $0x10] sm:$0xe]
        %v3433 = vld [vmem:[%s2947 + $0x18] sm:$0xe]
        %v3434 = vld [vmem:[%s2947 + $0x20] sm:$0xe]
        %v3435 = vld [vmem:[%s2947 + $0x28] sm:$0xe]
        %v3436 = vld [vmem:[%s2947 + $0x30] sm:$0xe]
        %v3437 = vld [vmem:[%s2947 + $0x38] sm:$0xe]
        %v3454 = vrot.slane %v3430, 5
        %v3455 = vrot.slane %v3454, 4
        %v3456 = vrot.slane %v3303, 5
        %v3457 = vsel %vm1099, %v3455, %v3456
        %v3458 = vrot.slane %v3431, 5
        %v3459 = vrot.slane %v3458, 4
        %v3460 = vrot.slane %v3305, 5
        %v3461 = vsel %vm1099, %v3459, %v3460
        %v3462 = vrot.slane %v3432, 5
        %v3463 = vrot.slane %v3462, 4
        %v3464 = vrot.slane %v3307, 5
        %v3465 = vsel %vm1099, %v3463, %v3464
        %v3466 = vrot.slane %v3433, 5
        %v3467 = vrot.slane %v3466, 4
        %v3468 = vrot.slane %v3309, 5
        %v3469 = vsel %vm1099, %v3467, %v3468
        %v3470 = vrot.slane %v3434, 5
        %v3471 = vrot.slane %v3470, 4
        %v3472 = vrot.slane %v3311, 5
        %v3473 = vsel %vm1099, %v3471, %v3472
        %v3474 = vrot.slane %v3435, 5
        %v3475 = vrot.slane %v3474, 4
        %v3476 = vrot.slane %v3313, 5
        %v3477 = vsel %vm1099, %v3475, %v3476
        %v3478 = vrot.slane %v3436, 5
        %v3479 = vrot.slane %v3478, 4
        %v3480 = vrot.slane %v3315, 5
        %v3481 = vsel %vm1099, %v3479, %v3480
        %v3482 = vrot.slane %v3437, 5
        %v3483 = vrot.slane %v3482, 4
        %v3484 = vrot.slane %v3317, 5
        %v3485 = vsel %vm1099, %v3483, %v3484
        %v3486 = vld [vmem:[%s2947 + $0x4] sm:$0x3]
        %v3487 = vld [vmem:[%s2947 + $0xc] sm:$0x3]
        %v3488 = vld [vmem:[%s2947 + $0x14] sm:$0x3]
        %v3489 = vld [vmem:[%s2947 + $0x1c] sm:$0x3]
        %v3490 = vld [vmem:[%s2947 + $0x24] sm:$0x3]
        %v3491 = vld [vmem:[%s2947 + $0x2c] sm:$0x3]
        %v3492 = vld [vmem:[%s2947 + $0x34] sm:$0x3]
        %v3493 = vld [vmem:[%s2947 + $0x3c] sm:$0x3]
        %v3495 = vshrl.u32 %v3430, 16
        %v3497 = vrot.slane %v3495, 5
        %v3498 = vshll.u32 %v3430, 16
        %v3500 = vrot.slane %v3498, 6
        %v3501 = vor.u32 %v3497, %v3500
        %v3502 = vrot.slane %v3501, 4
        %v3504 = vshrl.u32 %v3486, 16
        %v3506 = vrot.slane %v3504, 5
        %v3507 = vshll.u32 %v3486, 16
        %v3509 = vrot.slane %v3507, 6
        %v3510 = vor.u32 %v3506, %v3509
        %v3511 = vsel %vm1142, %v3502, %v3510
        %v3513 = vshrl.u32 %v3431, 16
        %v3515 = vrot.slane %v3513, 5
        %v3516 = vshll.u32 %v3431, 16
        %v3518 = vrot.slane %v3516, 6
        %v3519 = vor.u32 %v3515, %v3518
        %v3520 = vrot.slane %v3519, 4
        %v3522 = vshrl.u32 %v3487, 16
        %v3524 = vrot.slane %v3522, 5
        %v3525 = vshll.u32 %v3487, 16
        %v3527 = vrot.slane %v3525, 6
        %v3528 = vor.u32 %v3524, %v3527
        %v3529 = vsel %vm1142, %v3520, %v3528
        %v3531 = vshrl.u32 %v3432, 16
        %v3533 = vrot.slane %v3531, 5
        %v3534 = vshll.u32 %v3432, 16
        %v3536 = vrot.slane %v3534, 6
        %v3537 = vor.u32 %v3533, %v3536
        %v3538 = vrot.slane %v3537, 4
        %v3540 = vshrl.u32 %v3488, 16
        %v3542 = vrot.slane %v3540, 5
        %v3543 = vshll.u32 %v3488, 16
        %v3545 = vrot.slane %v3543, 6
        %v3546 = vor.u32 %v3542, %v3545
        %v3547 = vsel %vm1142, %v3538, %v3546
        %v3549 = vshrl.u32 %v3433, 16
        %v3551 = vrot.slane %v3549, 5
        %v3552 = vshll.u32 %v3433, 16
        %v3554 = vrot.slane %v3552, 6
        %v3555 = vor.u32 %v3551, %v3554
        %v3556 = vrot.slane %v3555, 4
        %v3558 = vshrl.u32 %v3489, 16
        %v3560 = vrot.slane %v3558, 5
        %v3561 = vshll.u32 %v3489, 16
        %v3563 = vrot.slane %v3561, 6
        %v3564 = vor.u32 %v3560, %v3563
        %v3565 = vsel %vm1142, %v3556, %v3564
        %v3567 = vshrl.u32 %v3434, 16
        %v3569 = vrot.slane %v3567, 5
        %v3570 = vshll.u32 %v3434, 16
        %v3572 = vrot.slane %v3570, 6
        %v3573 = vor.u32 %v3569, %v3572
        %v3574 = vrot.slane %v3573, 4
        %v3576 = vshrl.u32 %v3490, 16
        %v3578 = vrot.slane %v3576, 5
        %v3579 = vshll.u32 %v3490, 16
        %v3581 = vrot.slane %v3579, 6
        %v3582 = vor.u32 %v3578, %v3581
        %v3583 = vsel %vm1142, %v3574, %v3582
        %v3585 = vshrl.u32 %v3435, 16
        %v3587 = vrot.slane %v3585, 5
        %v3588 = vshll.u32 %v3435, 16
        %v3590 = vrot.slane %v3588, 6
        %v3591 = vor.u32 %v3587, %v3590
        %v3592 = vrot.slane %v3591, 4
        %v3594 = vshrl.u32 %v3491, 16
        %v3596 = vrot.slane %v3594, 5
        %v3597 = vshll.u32 %v3491, 16
        %v3599 = vrot.slane %v3597, 6
        %v3600 = vor.u32 %v3596, %v3599
        %v3601 = vsel %vm1142, %v3592, %v3600
        %v3603 = vshrl.u32 %v3436, 16
        %v3605 = vrot.slane %v3603, 5
        %v3606 = vshll.u32 %v3436, 16
        %v3608 = vrot.slane %v3606, 6
        %v3609 = vor.u32 %v3605, %v3608
        %v3610 = vrot.slane %v3609, 4
        %v3612 = vshrl.u32 %v3492, 16
        %v3614 = vrot.slane %v3612, 5
        %v3615 = vshll.u32 %v3492, 16
        %v3617 = vrot.slane %v3615, 6
        %v3618 = vor.u32 %v3614, %v3617
        %v3619 = vsel %vm1142, %v3610, %v3618
        %v3621 = vshrl.u32 %v3437, 16
        %v3623 = vrot.slane %v3621, 5
        %v3624 = vshll.u32 %v3437, 16
        %v3626 = vrot.slane %v3624, 6
        %v3627 = vor.u32 %v3623, %v3626
        %v3628 = vrot.slane %v3627, 4
        %v3630 = vshrl.u32 %v3493, 16
        %v3632 = vrot.slane %v3630, 5
        %v3633 = vshll.u32 %v3493, 16
        %v3635 = vrot.slane %v3633, 6
        %v3636 = vor.u32 %v3632, %v3635
        %v3637 = vsel %vm1142, %v3628, %v3636
        %s3638 = scalar_lea.vmem [#allocation3], 16
        %v3639 = vld [vmem:[%s3638] sm:$0xf]
        %v3640 = vld [vmem:[%s3638 + $0x4] sm:$0x1]
        %v3641 = vld [vmem:[%s3638 + $0x8] sm:$0xf]
        %v3642 = vld [vmem:[%s3638 + $0xc] sm:$0x1]
        %v3643 = vld [vmem:[%s3638 + $0x10] sm:$0xf]
        %v3644 = vld [vmem:[%s3638 + $0x14] sm:$0x1]
        %v3645 = vld [vmem:[%s3638 + $0x18] sm:$0xf]
        %v3646 = vld [vmem:[%s3638 + $0x1c] sm:$0x1]
        %v3647 = vld [vmem:[%s3638 + $0x20] sm:$0xf]
        %v3648 = vld [vmem:[%s3638 + $0x24] sm:$0x1]
        %v3649 = vld [vmem:[%s3638 + $0x28] sm:$0xf]
        %v3650 = vld [vmem:[%s3638 + $0x2c] sm:$0x1]
        %v3651 = vld [vmem:[%s3638 + $0x30] sm:$0xf]
        %v3652 = vld [vmem:[%s3638 + $0x34] sm:$0x1]
        %v3653 = vld [vmem:[%s3638 + $0x38] sm:$0xf]
        %v3654 = vld [vmem:[%s3638 + $0x3c] sm:$0x1]
        %v3656 = vshrl.u32 %v3639, 16
        %v3658 = vrot.slane %v3656, 4
        %v3659 = vshll.u32 %v3639, 16
        %v3661 = vrot.slane %v3659, 5
        %v3662 = vor.u32 %v3658, %v3661
        %v3663 = vrot.slane %v3662, 4
        %v3665 = vshll.u32 %v3640, 16
        %v3667 = vrot.slane %v3665, 5
        %v3668 = vsel %vm960, %v3663, %v3667
        %v3670 = vshrl.u32 %v3641, 16
        %v3672 = vrot.slane %v3670, 4
        %v3673 = vshll.u32 %v3641, 16
        %v3675 = vrot.slane %v3673, 5
        %v3676 = vor.u32 %v3672, %v3675
        %v3677 = vrot.slane %v3676, 4
        %v3679 = vshll.u32 %v3642, 16
        %v3681 = vrot.slane %v3679, 5
        %v3682 = vsel %vm960, %v3677, %v3681
        %v3684 = vshrl.u32 %v3643, 16
        %v3686 = vrot.slane %v3684, 4
        %v3687 = vshll.u32 %v3643, 16
        %v3689 = vrot.slane %v3687, 5
        %v3690 = vor.u32 %v3686, %v3689
        %v3691 = vrot.slane %v3690, 4
        %v3693 = vshll.u32 %v3644, 16
        %v3695 = vrot.slane %v3693, 5
        %v3696 = vsel %vm960, %v3691, %v3695
        %v3698 = vshrl.u32 %v3645, 16
        %v3700 = vrot.slane %v3698, 4
        %v3701 = vshll.u32 %v3645, 16
        %v3703 = vrot.slane %v3701, 5
        %v3704 = vor.u32 %v3700, %v3703
        %v3705 = vrot.slane %v3704, 4
        %v3707 = vshll.u32 %v3646, 16
        %v3709 = vrot.slane %v3707, 5
        %v3710 = vsel %vm960, %v3705, %v3709
        %v3712 = vshrl.u32 %v3647, 16
        %v3714 = vrot.slane %v3712, 4
        %v3715 = vshll.u32 %v3647, 16
        %v3717 = vrot.slane %v3715, 5
        %v3718 = vor.u32 %v3714, %v3717
        %v3719 = vrot.slane %v3718, 4
        %v3721 = vshll.u32 %v3648, 16
        %v3723 = vrot.slane %v3721, 5
        %v3724 = vsel %vm960, %v3719, %v3723
        %v3726 = vshrl.u32 %v3649, 16
        %v3728 = vrot.slane %v3726, 4
        %v3729 = vshll.u32 %v3649, 16
        %v3731 = vrot.slane %v3729, 5
        %v3732 = vor.u32 %v3728, %v3731
        %v3733 = vrot.slane %v3732, 4
        %v3735 = vshll.u32 %v3650, 16
        %v3737 = vrot.slane %v3735, 5
        %v3738 = vsel %vm960, %v3733, %v3737
        %v3740 = vshrl.u32 %v3651, 16
        %v3742 = vrot.slane %v3740, 4
        %v3743 = vshll.u32 %v3651, 16
        %v3745 = vrot.slane %v3743, 5
        %v3746 = vor.u32 %v3742, %v3745
        %v3747 = vrot.slane %v3746, 4
        %v3749 = vshll.u32 %v3652, 16
        %v3751 = vrot.slane %v3749, 5
        %v3752 = vsel %vm960, %v3747, %v3751
        %v3754 = vshrl.u32 %v3653, 16
        %v3756 = vrot.slane %v3754, 4
        %v3757 = vshll.u32 %v3653, 16
        %v3759 = vrot.slane %v3757, 5
        %v3760 = vor.u32 %v3756, %v3759
        %v3761 = vrot.slane %v3760, 4
        %v3763 = vshll.u32 %v3654, 16
        %v3765 = vrot.slane %v3763, 5
        %v3766 = vsel %vm960, %v3761, %v3765
        %v3767 = vld [vmem:[%s3638] sm:$0xe]
        %v3768 = vld [vmem:[%s3638 + $0x8] sm:$0xe]
        %v3769 = vld [vmem:[%s3638 + $0x10] sm:$0xe]
        %v3770 = vld [vmem:[%s3638 + $0x18] sm:$0xe]
        %v3771 = vld [vmem:[%s3638 + $0x20] sm:$0xe]
        %v3772 = vld [vmem:[%s3638 + $0x28] sm:$0xe]
        %v3773 = vld [vmem:[%s3638 + $0x30] sm:$0xe]
        %v3774 = vld [vmem:[%s3638 + $0x38] sm:$0xe]
        %v3791 = vrot.slane %v3767, 5
        %v3792 = vrot.slane %v3791, 4
        %v3793 = vrot.slane %v3640, 5
        %v3794 = vsel %vm1099, %v3792, %v3793
        %v3795 = vrot.slane %v3768, 5
        %v3796 = vrot.slane %v3795, 4
        %v3797 = vrot.slane %v3642, 5
        %v3798 = vsel %vm1099, %v3796, %v3797
        %v3799 = vrot.slane %v3769, 5
        %v3800 = vrot.slane %v3799, 4
        %v3801 = vrot.slane %v3644, 5
        %v3802 = vsel %vm1099, %v3800, %v3801
        %v3803 = vrot.slane %v3770, 5
        %v3804 = vrot.slane %v3803, 4
        %v3805 = vrot.slane %v3646, 5
        %v3806 = vsel %vm1099, %v3804, %v3805
        %v3807 = vrot.slane %v3771, 5
        %v3808 = vrot.slane %v3807, 4
        %v3809 = vrot.slane %v3648, 5
        %v3810 = vsel %vm1099, %v3808, %v3809
        %v3811 = vrot.slane %v3772, 5
        %v3812 = vrot.slane %v3811, 4
        %v3813 = vrot.slane %v3650, 5
        %v3814 = vsel %vm1099, %v3812, %v3813
        %v3815 = vrot.slane %v3773, 5
        %v3816 = vrot.slane %v3815, 4
        %v3817 = vrot.slane %v3652, 5
        %v3818 = vsel %vm1099, %v3816, %v3817
        %v3819 = vrot.slane %v3774, 5
        %v3820 = vrot.slane %v3819, 4
        %v3821 = vrot.slane %v3654, 5
        %v3822 = vsel %vm1099, %v3820, %v3821
        %v3823 = vld [vmem:[%s3638 + $0x4] sm:$0x3]
        %v3824 = vld [vmem:[%s3638 + $0xc] sm:$0x3]
        %v3825 = vld [vmem:[%s3638 + $0x14] sm:$0x3]
        %v3826 = vld [vmem:[%s3638 + $0x1c] sm:$0x3]
        %v3827 = vld [vmem:[%s3638 + $0x24] sm:$0x3]
        %v3828 = vld [vmem:[%s3638 + $0x2c] sm:$0x3]
        %v3829 = vld [vmem:[%s3638 + $0x34] sm:$0x3]
        %v3830 = vld [vmem:[%s3638 + $0x3c] sm:$0x3]
        %v3832 = vshrl.u32 %v3767, 16
        %v3834 = vrot.slane %v3832, 5
        %v3835 = vshll.u32 %v3767, 16
        %v3837 = vrot.slane %v3835, 6
        %v3838 = vor.u32 %v3834, %v3837
        %v3839 = vrot.slane %v3838, 4
        %v3841 = vshrl.u32 %v3823, 16
        %v3843 = vrot.slane %v3841, 5
        %v3844 = vshll.u32 %v3823, 16
        %v3846 = vrot.slane %v3844, 6
        %v3847 = vor.u32 %v3843, %v3846
        %v3848 = vsel %vm1142, %v3839, %v3847
        %v3850 = vshrl.u32 %v3768, 16
        %v3852 = vrot.slane %v3850, 5
        %v3853 = vshll.u32 %v3768, 16
        %v3855 = vrot.slane %v3853, 6
        %v3856 = vor.u32 %v3852, %v3855
        %v3857 = vrot.slane %v3856, 4
        %v3859 = vshrl.u32 %v3824, 16
        %v3861 = vrot.slane %v3859, 5
        %v3862 = vshll.u32 %v3824, 16
        %v3864 = vrot.slane %v3862, 6
        %v3865 = vor.u32 %v3861, %v3864
        %v3866 = vsel %vm1142, %v3857, %v3865
        %v3868 = vshrl.u32 %v3769, 16
        %v3870 = vrot.slane %v3868, 5
        %v3871 = vshll.u32 %v3769, 16
        %v3873 = vrot.slane %v3871, 6
        %v3874 = vor.u32 %v3870, %v3873
        %v3875 = vrot.slane %v3874, 4
        %v3877 = vshrl.u32 %v3825, 16
        %v3879 = vrot.slane %v3877, 5
        %v3880 = vshll.u32 %v3825, 16
        %v3882 = vrot.slane %v3880, 6
        %v3883 = vor.u32 %v3879, %v3882
        %v3884 = vsel %vm1142, %v3875, %v3883
        %v3886 = vshrl.u32 %v3770, 16
        %v3888 = vrot.slane %v3886, 5
        %v3889 = vshll.u32 %v3770, 16
        %v3891 = vrot.slane %v3889, 6
        %v3892 = vor.u32 %v3888, %v3891
        %v3893 = vrot.slane %v3892, 4
        %v3895 = vshrl.u32 %v3826, 16
        %v3897 = vrot.slane %v3895, 5
        %v3898 = vshll.u32 %v3826, 16
        %v3900 = vrot.slane %v3898, 6
        %v3901 = vor.u32 %v3897, %v3900
        %v3902 = vsel %vm1142, %v3893, %v3901
        %v3904 = vshrl.u32 %v3771, 16
        %v3906 = vrot.slane %v3904, 5
        %v3907 = vshll.u32 %v3771, 16
        %v3909 = vrot.slane %v3907, 6
        %v3910 = vor.u32 %v3906, %v3909
        %v3911 = vrot.slane %v3910, 4
        %v3913 = vshrl.u32 %v3827, 16
        %v3915 = vrot.slane %v3913, 5
        %v3916 = vshll.u32 %v3827, 16
        %v3918 = vrot.slane %v3916, 6
        %v3919 = vor.u32 %v3915, %v3918
        %v3920 = vsel %vm1142, %v3911, %v3919
        %v3922 = vshrl.u32 %v3772, 16
        %v3924 = vrot.slane %v3922, 5
        %v3925 = vshll.u32 %v3772, 16
        %v3927 = vrot.slane %v3925, 6
        %v3928 = vor.u32 %v3924, %v3927
        %v3929 = vrot.slane %v3928, 4
        %v3931 = vshrl.u32 %v3828, 16
        %v3933 = vrot.slane %v3931, 5
        %v3934 = vshll.u32 %v3828, 16
        %v3936 = vrot.slane %v3934, 6
        %v3937 = vor.u32 %v3933, %v3936
        %v3938 = vsel %vm1142, %v3929, %v3937
        %v3940 = vshrl.u32 %v3773, 16
        %v3942 = vrot.slane %v3940, 5
        %v3943 = vshll.u32 %v3773, 16
        %v3945 = vrot.slane %v3943, 6
        %v3946 = vor.u32 %v3942, %v3945
        %v3947 = vrot.slane %v3946, 4
        %v3949 = vshrl.u32 %v3829, 16
        %v3951 = vrot.slane %v3949, 5
        %v3952 = vshll.u32 %v3829, 16
        %v3954 = vrot.slane %v3952, 6
        %v3955 = vor.u32 %v3951, %v3954
        %v3956 = vsel %vm1142, %v3947, %v3955
        %v3958 = vshrl.u32 %v3774, 16
        %v3960 = vrot.slane %v3958, 5
        %v3961 = vshll.u32 %v3774, 16
        %v3963 = vrot.slane %v3961, 6
        %v3964 = vor.u32 %v3960, %v3963
        %v3965 = vrot.slane %v3964, 4
        %v3967 = vshrl.u32 %v3830, 16
        %v3969 = vrot.slane %v3967, 5
        %v3970 = vshll.u32 %v3830, 16
        %v3972 = vrot.slane %v3970, 6
        %v3973 = vor.u32 %v3969, %v3972
        %v3974 = vsel %vm1142, %v3965, %v3973
        %v3975 = vunpack.c.l.b16 %v2995
        %v3976 = vunpack.c.l.b16 %v3009
        %v3977 = vunpack.c.l.b16 %v3023
        %v3978 = vunpack.c.l.b16 %v3037
        %v3979 = vunpack.c.l.b16 %v3051
        %v3980 = vunpack.c.l.b16 %v3065
        %v3981 = vunpack.c.l.b16 %v3079
        %v3982 = vunpack.c.l.b16 %v3093
        %v3983 = vpack.c.b16 %v3976, %v3975
        %v3984 = vpack.c.b16 %v3978, %v3977
        %v3985 = vpack.c.b16 %v3980, %v3979
        %v3986 = vpack.c.b16 %v3982, %v3981
        %v3987 = vunpack.c.l.b16 %v3121
        %v3988 = vunpack.c.l.b16 %v3125
        %v3989 = vunpack.c.l.b16 %v3129
        %v3990 = vunpack.c.l.b16 %v3133
        %v3991 = vunpack.c.l.b16 %v3137
        %v3992 = vunpack.c.l.b16 %v3141
        %v3993 = vunpack.c.l.b16 %v3145
        %v3994 = vunpack.c.l.b16 %v3149
        %v3995 = vpack.c.b16 %v3988, %v3987
        %v3996 = vpack.c.b16 %v3990, %v3989
        %v3997 = vpack.c.b16 %v3992, %v3991
        %v3998 = vpack.c.b16 %v3994, %v3993
        %3999 = vrot.lane.b32.xlu0 %v3995, 64
        %v4000 = vpop.permute.xlu0 %3999
        %4001 = vrot.lane.b32.xlu0 %v3996, 64
        %v4002 = vpop.permute.xlu0 %4001
        %4003 = vrot.lane.b32.xlu0 %v3997, 64
        %v4004 = vpop.permute.xlu0 %4003
        %4005 = vrot.lane.b32.xlu0 %v3998, 64
        %v4006 = vpop.permute.xlu0 %4005
        %v4007 = vunpack.c.l.b16 %v3175
        %v4008 = vunpack.c.l.b16 %v3193
        %v4009 = vunpack.c.l.b16 %v3211
        %v4010 = vunpack.c.l.b16 %v3229
        %v4011 = vunpack.c.l.b16 %v3247
        %v4012 = vunpack.c.l.b16 %v3265
        %v4013 = vunpack.c.l.b16 %v3283
        %v4014 = vunpack.c.l.b16 %v3301
        %v4015 = vpack.c.b16 %v4008, %v4007
        %v4016 = vpack.c.b16 %v4010, %v4009
        %v4017 = vpack.c.b16 %v4012, %v4011
        %v4018 = vpack.c.b16 %v4014, %v4013
        %v4019 = vunpack.c.l.b16 %v3331
        %v4020 = vunpack.c.l.b16 %v3345
        %v4021 = vunpack.c.l.b16 %v3359
        %v4022 = vunpack.c.l.b16 %v3373
        %v4023 = vunpack.c.l.b16 %v3387
        %v4024 = vunpack.c.l.b16 %v3401
        %v4025 = vunpack.c.l.b16 %v3415
        %v4026 = vunpack.c.l.b16 %v3429
        %v4027 = vpack.c.b16 %v4020, %v4019
        %v4028 = vpack.c.b16 %v4022, %v4021
        %v4029 = vpack.c.b16 %v4024, %v4023
        %v4030 = vpack.c.b16 %v4026, %v4025
        %4031 = vrot.lane.b32.xlu0 %v4027, 64
        %v4032 = vpop.permute.xlu0 %4031
        %4033 = vrot.lane.b32.xlu0 %v4028, 64
        %v4034 = vpop.permute.xlu0 %4033
        %4035 = vrot.lane.b32.xlu0 %v4029, 64
        %v4036 = vpop.permute.xlu0 %4035
        %4037 = vrot.lane.b32.xlu0 %v4030, 64
        %v4038 = vpop.permute.xlu0 %4037
        %v4039 = vunpack.c.l.b16 %v3457
        %v4040 = vunpack.c.l.b16 %v3461
        %v4041 = vunpack.c.l.b16 %v3465
        %v4042 = vunpack.c.l.b16 %v3469
        %v4043 = vunpack.c.l.b16 %v3473
        %v4044 = vunpack.c.l.b16 %v3477
        %v4045 = vunpack.c.l.b16 %v3481
        %v4046 = vunpack.c.l.b16 %v3485
        %v4047 = vpack.c.b16 %v4040, %v4039
        %v4048 = vpack.c.b16 %v4042, %v4041
        %v4049 = vpack.c.b16 %v4044, %v4043
        %v4050 = vpack.c.b16 %v4046, %v4045
        %v4051 = vunpack.c.l.b16 %v3511
        %v4052 = vunpack.c.l.b16 %v3529
        %v4053 = vunpack.c.l.b16 %v3547
        %v4054 = vunpack.c.l.b16 %v3565
        %v4055 = vunpack.c.l.b16 %v3583
        %v4056 = vunpack.c.l.b16 %v3601
        %v4057 = vunpack.c.l.b16 %v3619
        %v4058 = vunpack.c.l.b16 %v3637
        %v4059 = vpack.c.b16 %v4052, %v4051
        %v4060 = vpack.c.b16 %v4054, %v4053
        %v4061 = vpack.c.b16 %v4056, %v4055
        %v4062 = vpack.c.b16 %v4058, %v4057
        %4063 = vrot.lane.b32.xlu0 %v4059, 64
        %v4064 = vpop.permute.xlu0 %4063
        %4065 = vrot.lane.b32.xlu0 %v4060, 64
        %v4066 = vpop.permute.xlu0 %4065
        %4067 = vrot.lane.b32.xlu0 %v4061, 64
        %v4068 = vpop.permute.xlu0 %4067
        %4069 = vrot.lane.b32.xlu0 %v4062, 64
        %v4070 = vpop.permute.xlu0 %4069
        %v4071 = vunpack.c.l.b16 %v3668
        %v4072 = vunpack.c.l.b16 %v3682
        %v4073 = vunpack.c.l.b16 %v3696
        %v4074 = vunpack.c.l.b16 %v3710
        %v4075 = vunpack.c.l.b16 %v3724
        %v4076 = vunpack.c.l.b16 %v3738
        %v4077 = vunpack.c.l.b16 %v3752
        %v4078 = vunpack.c.l.b16 %v3766
        %v4079 = vpack.c.b16 %v4072, %v4071
        %v4080 = vpack.c.b16 %v4074, %v4073
        %v4081 = vpack.c.b16 %v4076, %v4075
        %v4082 = vpack.c.b16 %v4078, %v4077
        %v4083 = vunpack.c.l.b16 %v3794
        %v4084 = vunpack.c.l.b16 %v3798
        %v4085 = vunpack.c.l.b16 %v3802
        %v4086 = vunpack.c.l.b16 %v3806
        %v4087 = vunpack.c.l.b16 %v3810
        %v4088 = vunpack.c.l.b16 %v3814
        %v4089 = vunpack.c.l.b16 %v3818
        %v4090 = vunpack.c.l.b16 %v3822
        %v4091 = vpack.c.b16 %v4084, %v4083
        %v4092 = vpack.c.b16 %v4086, %v4085
        %v4093 = vpack.c.b16 %v4088, %v4087
        %v4094 = vpack.c.b16 %v4090, %v4089
        %4095 = vrot.lane.b32.xlu0 %v4091, 64
        %v4096 = vpop.permute.xlu0 %4095
        %4097 = vrot.lane.b32.xlu0 %v4092, 64
        %v4098 = vpop.permute.xlu0 %4097
        %4099 = vrot.lane.b32.xlu0 %v4093, 64
        %v4100 = vpop.permute.xlu0 %4099
        %4101 = vrot.lane.b32.xlu0 %v4094, 64
        %v4102 = vpop.permute.xlu0 %4101
        %v4103 = vunpack.c.l.b16 %v3848
        %v4104 = vunpack.c.l.b16 %v3866
        %v4105 = vunpack.c.l.b16 %v3884
        %v4106 = vunpack.c.l.b16 %v3902
        %v4107 = vunpack.c.l.b16 %v3920
        %v4108 = vunpack.c.l.b16 %v3938
        %v4109 = vunpack.c.l.b16 %v3956
        %v4110 = vunpack.c.l.b16 %v3974
        %v4111 = vpack.c.b16 %v4104, %v4103
        %v4112 = vpack.c.b16 %v4106, %v4105
        %v4113 = vpack.c.b16 %v4108, %v4107
        %v4114 = vpack.c.b16 %v4110, %v4109
        %v4117 = vsel %vm2128, %v3983, %v4000
        %v4121 = vsel %vm2128, %v3984, %v4002
        %v4125 = vsel %vm2128, %v3985, %v4004
        %v4129 = vsel %vm2128, %v3986, %v4006
        %v4133 = vsel %vm2128, %v4015, %v4032
        %v4137 = vsel %vm2128, %v4016, %v4034
        %v4141 = vsel %vm2128, %v4017, %v4036
        %v4145 = vsel %vm2128, %v4018, %v4038
        %v4149 = vsel %vm2128, %v4047, %v4064
        %v4153 = vsel %vm2128, %v4048, %v4066
        %v4157 = vsel %vm2128, %v4049, %v4068
        %v4161 = vsel %vm2128, %v4050, %v4070
        %v4165 = vsel %vm2128, %v4079, %v4096
        %v4169 = vsel %vm2128, %v4080, %v4098
        %v4173 = vsel %vm2128, %v4081, %v4100
        %v4177 = vsel %vm2128, %v4082, %v4102
        %v4179 = vld [vmem:[%s12] sm:$0xf]
        %v4180 = vld [vmem:[%s12 + $0x4] sm:$0xf]
        %v4181 = vld [vmem:[%s12 + $0x8] sm:$0xf]
        %v4182 = vld [vmem:[%s12 + $0xc] sm:$0xf]
        %v4183 = vld [vmem:[%s12 + $0x10] sm:$0xf]
        %v4184 = vld [vmem:[%s12 + $0x14] sm:$0xf]
        %v4185 = vld [vmem:[%s12 + $0x18] sm:$0xf]
        %v4186 = vld [vmem:[%s12 + $0x1c] sm:$0xf]
        %v4187 = vld [vmem:[%s12 + $0x20] sm:$0xf]
        %v4188 = vld [vmem:[%s12 + $0x24] sm:$0xf]
        %v4189 = vld [vmem:[%s12 + $0x28] sm:$0xf]
        %v4190 = vld [vmem:[%s12 + $0x2c] sm:$0xf]
        %v4191 = vld [vmem:[%s12 + $0x30] sm:$0xf]
        %v4192 = vld [vmem:[%s12 + $0x34] sm:$0xf]
        %v4193 = vld [vmem:[%s12 + $0x38] sm:$0xf]
        %v4194 = vld [vmem:[%s12 + $0x3c] sm:$0xf]
        %v4195 = vld [vmem:[%s12 + $0x40] sm:$0xf]
        %v4196 = vld [vmem:[%s12 + $0x44] sm:$0xf]
        %v4197 = vld [vmem:[%s12 + $0x48] sm:$0xf]
        %v4198 = vld [vmem:[%s12 + $0x4c] sm:$0xf]
        %v4199 = vld [vmem:[%s12 + $0x50] sm:$0xf]
        %v4200 = vld [vmem:[%s12 + $0x54] sm:$0xf]
        %v4201 = vld [vmem:[%s12 + $0x58] sm:$0xf]
        %v4202 = vld [vmem:[%s12 + $0x5c] sm:$0xf]
        %v4203 = vld [vmem:[%s12 + $0x60] sm:$0xf]
        %v4204 = vld [vmem:[%s12 + $0x64] sm:$0xf]
        %v4205 = vld [vmem:[%s12 + $0x68] sm:$0xf]
        %v4206 = vld [vmem:[%s12 + $0x6c] sm:$0xf]
        %v4207 = vld [vmem:[%s12 + $0x70] sm:$0xf]
        %v4208 = vld [vmem:[%s12 + $0x74] sm:$0xf]
        %v4209 = vld [vmem:[%s12 + $0x78] sm:$0xf]
        %v4210 = vld [vmem:[%s12 + $0x7c] sm:$0xf]
        %v4211 = vld [vmem:[%s12 + $0x80] sm:$0xf]
        %v4212 = vld [vmem:[%s12 + $0x84] sm:$0xf]
        %v4213 = vld [vmem:[%s12 + $0x88] sm:$0xf]
        %v4214 = vld [vmem:[%s12 + $0x8c] sm:$0xf]
        %v4215 = vld [vmem:[%s12 + $0x90] sm:$0xf]
        %v4216 = vld [vmem:[%s12 + $0x94] sm:$0xf]
        %v4217 = vld [vmem:[%s12 + $0x98] sm:$0xf]
        %v4218 = vld [vmem:[%s12 + $0x9c] sm:$0xf]
        %v4219 = vld [vmem:[%s12 + $0xa0] sm:$0xf]
        %v4220 = vld [vmem:[%s12 + $0xa4] sm:$0xf]
        %v4221 = vld [vmem:[%s12 + $0xa8] sm:$0xf]
        %v4222 = vld [vmem:[%s12 + $0xac] sm:$0xf]
        %v4223 = vld [vmem:[%s12 + $0xb0] sm:$0xf]
        %v4224 = vld [vmem:[%s12 + $0xb4] sm:$0xf]
        %v4225 = vld [vmem:[%s12 + $0xb8] sm:$0xf]
        %v4226 = vld [vmem:[%s12 + $0xbc] sm:$0xf]
        %v4227 = vld [vmem:[%s12 + $0xc0] sm:$0xf]
        %v4228 = vld [vmem:[%s12 + $0xc4] sm:$0xf]
        %v4229 = vld [vmem:[%s12 + $0xc8] sm:$0xf]
        %v4230 = vld [vmem:[%s12 + $0xcc] sm:$0xf]
        %v4231 = vld [vmem:[%s12 + $0xd0] sm:$0xf]
        %v4232 = vld [vmem:[%s12 + $0xd4] sm:$0xf]
        %v4233 = vld [vmem:[%s12 + $0xd8] sm:$0xf]
        %v4234 = vld [vmem:[%s12 + $0xdc] sm:$0xf]
        %v4235 = vld [vmem:[%s12 + $0xe0] sm:$0xf]
        %v4236 = vld [vmem:[%s12 + $0xe4] sm:$0xf]
        %v4237 = vld [vmem:[%s12 + $0xe8] sm:$0xf]
        %v4238 = vld [vmem:[%s12 + $0xec] sm:$0xf]
        %v4239 = vld [vmem:[%s12 + $0xf0] sm:$0xf]
        %v4240 = vld [vmem:[%s12 + $0xf4] sm:$0xf]
        %v4241 = vld [vmem:[%s12 + $0xf8] sm:$0xf]
        %v4242 = vld [vmem:[%s12 + $0xfc] sm:$0xf]
        %v4243 = vld [vmem:[%s12 + $0x100] sm:$0xf]
        %v4244 = vld [vmem:[%s12 + $0x104] sm:$0xf]
        %v4245 = vld [vmem:[%s12 + $0x108] sm:$0xf]
        %v4246 = vld [vmem:[%s12 + $0x10c] sm:$0xf]
        %v4247 = vld [vmem:[%s12 + $0x110] sm:$0xf]
        %v4248 = vld [vmem:[%s12 + $0x114] sm:$0xf]
        %v4249 = vld [vmem:[%s12 + $0x118] sm:$0xf]
        %v4250 = vld [vmem:[%s12 + $0x11c] sm:$0xf]
        %v4323 = vunpack.c.l.b16 %v4179
        %v4324 = vunpack.c.l.b16 %v4180
        %v4325 = vunpack.c.l.b16 %v4181
        %v4326 = vunpack.c.l.b16 %v4182
        %v4327 = vunpack.c.l.b16 %v4183
        %v4328 = vunpack.c.l.b16 %v4184
        %v4329 = vunpack.c.l.b16 %v4185
        %v4330 = vunpack.c.l.b16 %v4186
        %v4331 = vunpack.c.l.b16 %v4187
        %v4332 = vunpack.c.l.b16 %v4188
        %v4333 = vunpack.c.l.b16 %v4189
        %v4334 = vunpack.c.l.b16 %v4190
        %v4335 = vunpack.c.l.b16 %v4191
        %v4336 = vunpack.c.l.b16 %v4192
        %v4337 = vunpack.c.l.b16 %v4193
        %v4338 = vunpack.c.l.b16 %v4194
        %v4339 = vunpack.c.l.b16 %v4195
        %v4340 = vunpack.c.l.b16 %v4196
        %v4341 = vunpack.c.l.b16 %v4197
        %v4342 = vunpack.c.l.b16 %v4198
        %v4343 = vunpack.c.l.b16 %v4199
        %v4344 = vunpack.c.l.b16 %v4200
        %v4345 = vunpack.c.l.b16 %v4201
        %v4346 = vunpack.c.l.b16 %v4202
        %v4347 = vunpack.c.l.b16 %v4203
        %v4348 = vunpack.c.l.b16 %v4204
        %v4349 = vunpack.c.l.b16 %v4205
        %v4350 = vunpack.c.l.b16 %v4206
        %v4351 = vunpack.c.l.b16 %v4207
        %v4352 = vunpack.c.l.b16 %v4208
        %v4353 = vunpack.c.l.b16 %v4209
        %v4354 = vunpack.c.l.b16 %v4210
        %v4355 = vunpack.c.l.b16 %v4211
        %v4356 = vunpack.c.l.b16 %v4212
        %v4357 = vunpack.c.l.b16 %v4213
        %v4358 = vunpack.c.l.b16 %v4214
        %v4359 = vunpack.c.l.b16 %v4215
        %v4360 = vunpack.c.l.b16 %v4216
        %v4361 = vunpack.c.l.b16 %v4217
        %v4362 = vunpack.c.l.b16 %v4218
        %v4363 = vunpack.c.l.b16 %v4219
        %v4364 = vunpack.c.l.b16 %v4220
        %v4365 = vunpack.c.l.b16 %v4221
        %v4366 = vunpack.c.l.b16 %v4222
        %v4367 = vunpack.c.l.b16 %v4223
        %v4368 = vunpack.c.l.b16 %v4224
        %v4369 = vunpack.c.l.b16 %v4225
        %v4370 = vunpack.c.l.b16 %v4226
        %v4371 = vunpack.c.l.b16 %v4227
        %v4372 = vunpack.c.l.b16 %v4228
        %v4373 = vunpack.c.l.b16 %v4229
        %v4374 = vunpack.c.l.b16 %v4230
        %v4375 = vunpack.c.l.b16 %v4231
        %v4376 = vunpack.c.l.b16 %v4232
        %v4377 = vunpack.c.l.b16 %v4233
        %v4378 = vunpack.c.l.b16 %v4234
        %v4379 = vunpack.c.l.b16 %v4235
        %v4380 = vunpack.c.l.b16 %v4236
        %v4381 = vunpack.c.l.b16 %v4237
        %v4382 = vunpack.c.l.b16 %v4238
        %v4383 = vunpack.c.l.b16 %v4239
        %v4384 = vunpack.c.l.b16 %v4240
        %v4385 = vunpack.c.l.b16 %v4241
        %v4386 = vunpack.c.l.b16 %v4242
        %v4387 = vunpack.c.l.b16 %v4243
        %v4388 = vunpack.c.l.b16 %v4244
        %v4389 = vunpack.c.l.b16 %v4245
        %v4390 = vunpack.c.l.b16 %v4246
        %v4391 = vunpack.c.l.b16 %v4247
        %v4392 = vunpack.c.l.b16 %v4248
        %v4393 = vunpack.c.l.b16 %v4249
        %v4394 = vunpack.c.l.b16 %v4250
        %v4395 = vpack.c.b16 %v4324, %v4323
        %v4396 = vpack.c.b16 %v4326, %v4325
        %v4397 = vpack.c.b16 %v4328, %v4327
        %v4398 = vpack.c.b16 %v4330, %v4329
        %v4399 = vpack.c.b16 %v4332, %v4331
        %v4400 = vpack.c.b16 %v4334, %v4333
        %v4401 = vpack.c.b16 %v4336, %v4335
        %v4402 = vpack.c.b16 %v4338, %v4337
        %v4403 = vpack.c.b16 %v4340, %v4339
        %v4404 = vpack.c.b16 %v4342, %v4341
        %v4405 = vpack.c.b16 %v4344, %v4343
        %v4406 = vpack.c.b16 %v4346, %v4345
        %v4407 = vpack.c.b16 %v4348, %v4347
        %v4408 = vpack.c.b16 %v4350, %v4349
        %v4409 = vpack.c.b16 %v4352, %v4351
        %v4410 = vpack.c.b16 %v4354, %v4353
        %v4411 = vpack.c.b16 %v4356, %v4355
        %v4412 = vpack.c.b16 %v4358, %v4357
        %v4413 = vpack.c.b16 %v4360, %v4359
        %v4414 = vpack.c.b16 %v4362, %v4361
        %v4415 = vpack.c.b16 %v4364, %v4363
        %v4416 = vpack.c.b16 %v4366, %v4365
        %v4417 = vpack.c.b16 %v4368, %v4367
        %v4418 = vpack.c.b16 %v4370, %v4369
        %v4419 = vpack.c.b16 %v4372, %v4371
        %v4420 = vpack.c.b16 %v4374, %v4373
        %v4421 = vpack.c.b16 %v4376, %v4375
        %v4422 = vpack.c.b16 %v4378, %v4377
        %v4423 = vpack.c.b16 %v4380, %v4379
        %v4424 = vpack.c.b16 %v4382, %v4381
        %v4425 = vpack.c.b16 %v4384, %v4383
        %v4426 = vpack.c.b16 %v4386, %v4385
        %v4427 = vpack.c.b16 %v4388, %v4387
        %v4428 = vpack.c.b16 %v4390, %v4389
        %v4429 = vpack.c.b16 %v4392, %v4391
        %v4430 = vpack.c.b16 %v4394, %v4393
        %v4468 = vsel %vm2128, %v4111, 0
        %v4471 = vsel %vm2128, %v4112, 0
        %v4474 = vsel %vm2128, %v4113, 0
        %v4477 = vsel %vm2128, %v4114, 0
        %4479 = vmatprep.subr.bf16.mxu0 0
        %4480 = vmatpush1.bf16.msra.mxu0 %v4402
        %4481 = vmatprep.subr.bf16.mxu0 0
        %4482 = vmatpush1.bf16.msra.mxu0 %v4401
        %4483 = vmatprep.subr.bf16.mxu0 0
        %4484 = vmatpush1.bf16.msra.mxu0 %v4400
        %4485 = vmatprep.subr.bf16.mxu0 0
        %4486 = vmatpush1.bf16.msra.mxu0 %v4399
        %4487 = vmatprep.subr.bf16.mxu0 0
        %4488 = vmatpush1.bf16.msra.mxu0 %v4398
        %4489 = vmatprep.subr.bf16.mxu0 0
        %4490 = vmatpush1.bf16.msra.mxu0 %v4397
        %4491 = vmatprep.subr.bf16.mxu0 0
        %4492 = vmatpush1.bf16.msra.mxu0 %v4396
        %4493 = vmatprep.subr.bf16.mxu0 0
        %4494 = vmatpush1.bf16.msra.mxu0 %v4395
        %4495 = vmatprep.subr.bf16.mxu0 0
        %4496 = vmatpush2.bf16.msra.mxu0 %v4410
        %4497 = vmatprep.subr.bf16.mxu0 0
        %4498 = vmatpush2.bf16.msra.mxu0 %v4409
        %4499 = vmatprep.subr.bf16.mxu0 0
        %4500 = vmatpush2.bf16.msra.mxu0 %v4408
        %4501 = vmatprep.subr.bf16.mxu0 0
        %4502 = vmatpush2.bf16.msra.mxu0 %v4407
        %4503 = vmatprep.subr.bf16.mxu0 0
        %4504 = vmatpush2.bf16.msra.mxu0 %v4406
        %4505 = vmatprep.subr.bf16.mxu0 0
        %4506 = vmatpush2.bf16.msra.mxu0 %v4405
        %4507 = vmatprep.subr.bf16.mxu0 0
        %4508 = vmatpush2.bf16.msra.mxu0 %v4404
        %4509 = vmatprep.subr.bf16.mxu0 0
        %4510 = vmatpush2.bf16.msra.mxu0 %v4403
        %4511 = vmatprep.mubr.bf16.mxu0 %v4133
        %4512 = vmatmul.mubr.bf16.gmra.mxu0 %v4117
        %v4513 = vpop.f32.mrf.mxu0
        %v4514 = vadd.f32 0.0, %v4513
        %v4515 = vpop.f32.mrf.mxu0
        %v4516 = vpop.f32.mrf.mxu0
        %v4517 = vadd.f32 0.0, %v4516
        %v4518 = vpop.f32.mrf.mxu0
        %4519 = vmatprep.mubr.bf16.mxu0 %v4137
        %4520 = vmatmul.mubr.bf16.gmra.mxu0 %v4121
        %v4521 = vpop.f32.mrf.mxu0
        %v4522 = vadd.f32 0.0, %v4521
        %v4523 = vpop.f32.mrf.mxu0
        %v4524 = vpop.f32.mrf.mxu0
        %v4525 = vadd.f32 0.0, %v4524
        %v4526 = vpop.f32.mrf.mxu0
        %4527 = vmatprep.mubr.bf16.mxu0 %v4141
        %4528 = vmatmul.mubr.bf16.gmra.mxu0 %v4125
        %v4529 = vpop.f32.mrf.mxu0
        %v4530 = vadd.f32 0.0, %v4529
        %v4531 = vpop.f32.mrf.mxu0
        %v4532 = vpop.f32.mrf.mxu0
        %v4533 = vadd.f32 0.0, %v4532
        %v4534 = vpop.f32.mrf.mxu0
        %4535 = vmatprep.mubr.bf16.mxu0 %v4145
        %4536 = vmatmul.mubr.bf16.gmra.mxu0 %v4129
        %v4537 = vpop.f32.mrf.mxu0
        %v4538 = vadd.f32 0.0, %v4537
        %v4539 = vpop.f32.mrf.mxu0
        %v4540 = vpop.f32.mrf.mxu0
        %v4541 = vadd.f32 0.0, %v4540
        %v4542 = vpop.f32.mrf.mxu0
        %4543 = vdwg.mxu0
        %4544 = vmatprep.subr.bf16.mxu0 0
        %4545 = vmatpush1.bf16.msra.mxu0 %v4418
        %4546 = vmatprep.subr.bf16.mxu0 0
        %4547 = vmatpush1.bf16.msra.mxu0 %v4417
        %4548 = vmatprep.subr.bf16.mxu0 0
        %4549 = vmatpush1.bf16.msra.mxu0 %v4416
        %4550 = vmatprep.subr.bf16.mxu0 0
        %4551 = vmatpush1.bf16.msra.mxu0 %v4415
        %4552 = vmatprep.subr.bf16.mxu0 0
        %4553 = vmatpush1.bf16.msra.mxu0 %v4414
        %4554 = vmatprep.subr.bf16.mxu0 0
        %4555 = vmatpush1.bf16.msra.mxu0 %v4413
        %4556 = vmatprep.subr.bf16.mxu0 0
        %4557 = vmatpush1.bf16.msra.mxu0 %v4412
        %4558 = vmatprep.subr.bf16.mxu0 0
        %4559 = vmatpush1.bf16.msra.mxu0 %v4411
        %4560 = vmatprep.subr.bf16.mxu0 0
        %4561 = vmatpush2.bf16.msra.mxu0 %v4426
        %4562 = vmatprep.subr.bf16.mxu0 0
        %4563 = vmatpush2.bf16.msra.mxu0 %v4425
        %4564 = vmatprep.subr.bf16.mxu0 0
        %4565 = vmatpush2.bf16.msra.mxu0 %v4424
        %4566 = vmatprep.subr.bf16.mxu0 0
        %4567 = vmatpush2.bf16.msra.mxu0 %v4423
        %4568 = vmatprep.subr.bf16.mxu0 0
        %4569 = vmatpush2.bf16.msra.mxu0 %v4422
        %4570 = vmatprep.subr.bf16.mxu0 0
        %4571 = vmatpush2.bf16.msra.mxu0 %v4421
        %4572 = vmatprep.subr.bf16.mxu0 0
        %4573 = vmatpush2.bf16.msra.mxu0 %v4420
        %4574 = vmatprep.subr.bf16.mxu0 0
        %4575 = vmatpush2.bf16.msra.mxu0 %v4419
        %4576 = vmatprep.mubr.bf16.mxu0 %v4165
        %4577 = vmatmul.mubr.bf16.gmra.mxu0 %v4149
        %v4578 = vpop.f32.mrf.mxu0
        %v4579 = vadd.f32 %v4514, %v4578
        %v4580 = vpop.f32.mrf.mxu0
        %v4581 = vpop.f32.mrf.mxu0
        %v4582 = vadd.f32 %v4517, %v4581
        %v4583 = vpop.f32.mrf.mxu0
        %4584 = vmatprep.mubr.bf16.mxu0 %v4169
        %4585 = vmatmul.mubr.bf16.gmra.mxu0 %v4153
        %v4586 = vpop.f32.mrf.mxu0
        %v4587 = vadd.f32 %v4522, %v4586
        %v4588 = vpop.f32.mrf.mxu0
        %v4589 = vpop.f32.mrf.mxu0
        %v4590 = vadd.f32 %v4525, %v4589
        %v4591 = vpop.f32.mrf.mxu0
        %4592 = vmatprep.mubr.bf16.mxu0 %v4173
        %4593 = vmatmul.mubr.bf16.gmra.mxu0 %v4157
        %v4594 = vpop.f32.mrf.mxu0
        %v4595 = vadd.f32 %v4530, %v4594
        %v4596 = vpop.f32.mrf.mxu0
        %v4597 = vpop.f32.mrf.mxu0
        %v4598 = vadd.f32 %v4533, %v4597
        %v4599 = vpop.f32.mrf.mxu0
        %4600 = vmatprep.mubr.bf16.mxu0 %v4177
        %4601 = vmatmul.mubr.bf16.gmra.mxu0 %v4161
        %v4602 = vpop.f32.mrf.mxu0
        %v4603 = vadd.f32 %v4538, %v4602
        %v4604 = vpop.f32.mrf.mxu0
        %v4605 = vpop.f32.mrf.mxu0
        %v4606 = vadd.f32 %v4541, %v4605
        %v4607 = vpop.f32.mrf.mxu0
        %4608 = vdwg.mxu0
        %4609 = vmatprep.subr.bf16.mxu0 0
        %4610 = vmatpush1.bf16.msra.mxu0 0
        %4611 = vmatprep.subr.bf16.mxu0 0
        %4612 = vmatpush1.bf16.msra.mxu0 0
        %4613 = vmatprep.subr.bf16.mxu0 0
        %4614 = vmatpush1.bf16.msra.mxu0 0
        %4615 = vmatprep.subr.bf16.mxu0 0
        %4616 = vmatpush1.bf16.msra.mxu0 0
        %4617 = vmatprep.subr.bf16.mxu0 0
        %4618 = vmatpush1.bf16.msra.mxu0 %v4430
        %4619 = vmatprep.subr.bf16.mxu0 0
        %4620 = vmatpush1.bf16.msra.mxu0 %v4429
        %4621 = vmatprep.subr.bf16.mxu0 0
        %4622 = vmatpush1.bf16.msra.mxu0 %v4428
        %4623 = vmatprep.subr.bf16.mxu0 0
        %4624 = vmatpush1.bf16.msra.mxu0 %v4427
        %4625 = vmatprep.subr.bf16.mxu0 0
        %4626 = vmatpush2.bf16.msra.mxu0 0
        %4627 = vmatprep.subr.bf16.mxu0 0
        %4628 = vmatpush2.bf16.msra.mxu0 0
        %4629 = vmatprep.subr.bf16.mxu0 0
        %4630 = vmatpush2.bf16.msra.mxu0 0
        %4631 = vmatprep.subr.bf16.mxu0 0
        %4632 = vmatpush2.bf16.msra.mxu0 0
        %4633 = vmatprep.subr.bf16.mxu0 0
        %4634 = vmatpush2.bf16.msra.mxu0 0
        %4635 = vmatprep.subr.bf16.mxu0 0
        %4636 = vmatpush2.bf16.msra.mxu0 0
        %4637 = vmatprep.subr.bf16.mxu0 0
        %4638 = vmatpush2.bf16.msra.mxu0 0
        %4639 = vmatprep.subr.bf16.mxu0 0
        %4640 = vmatpush2.bf16.msra.mxu0 0
        %4641 = vmatprep.mubr.bf16.mxu0 0
        %4642 = vmatmul.mubr.bf16.gmra.mxu0 %v4468
        %v4643 = vpop.f32.mrf.mxu0
        %v4644 = vadd.f32 %v4579, %v4643
        %v4645 = vpop.f32.mrf.mxu0
        %v4646 = vpop.f32.mrf.mxu0
        %v4647 = vadd.f32 %v4582, %v4646
        %v4648 = vpop.f32.mrf.mxu0
        %4649 = vmatprep.mubr.bf16.mxu0 0
        %4650 = vmatmul.mubr.bf16.gmra.mxu0 %v4471
        %v4651 = vpop.f32.mrf.mxu0
        %v4652 = vadd.f32 %v4587, %v4651
        %v4653 = vpop.f32.mrf.mxu0
        %v4654 = vpop.f32.mrf.mxu0
        %v4655 = vadd.f32 %v4590, %v4654
        %v4656 = vpop.f32.mrf.mxu0
        %4657 = vmatprep.mubr.bf16.mxu0 0
        %4658 = vmatmul.mubr.bf16.gmra.mxu0 %v4474
        %v4659 = vpop.f32.mrf.mxu0
        %v4660 = vadd.f32 %v4595, %v4659
        %v4661 = vpop.f32.mrf.mxu0
        %v4662 = vpop.f32.mrf.mxu0
        %v4663 = vadd.f32 %v4598, %v4662
        %v4664 = vpop.f32.mrf.mxu0
        %4665 = vmatprep.mubr.bf16.mxu0 0
        %4666 = vmatmul.mubr.bf16.gmra.mxu0 %v4477
        %v4667 = vpop.f32.mrf.mxu0
        %v4668 = vadd.f32 %v4603, %v4667
        %v4669 = vpop.f32.mrf.mxu0
        %v4670 = vpop.f32.mrf.mxu0
        %v4671 = vadd.f32 %v4606, %v4670
        %v4672 = vpop.f32.mrf.mxu0
        %4673 = vdwg.mxu0
        %v4674 = vld [vmem:[%s13] sm:$0x1]
        %v4676 = vlaneseq
        %v4677 = vshrl.u32 %v4676, 7
        %v4678 = vsub.s32 0, %v4677
        %v4679 = vrot.slane %v4674, %v4678
        %v4681 = vadd.f32 %v4644, %v4679
        %v4682 = vadd.f32 %v4647, %v4679
        %v4683 = vadd.f32 %v4652, %v4679
        %v4684 = vadd.f32 %v4655, %v4679
        %v4685 = vadd.f32 %v4660, %v4679
        %v4686 = vadd.f32 %v4663, %v4679
        %v4687 = vadd.f32 %v4668, %v4679
        %v4688 = vadd.f32 %v4671, %v4679
        %v4689 = vpack.c.bf16 %v536, %v535
        %v4690 = vpack.c.bf16 %v538, %v537
        %v4691 = vpack.c.bf16 %v540, %v539
        %v4692 = vpack.c.bf16 %v542, %v541
        %v4693 = vld [vmem:[%s14] sm:$0xf]
        %v4694 = vld [vmem:[%s14 + $0x4] sm:$0xf]
        %v4695 = vld [vmem:[%s14 + $0x8] sm:$0xf]
        %v4696 = vld [vmem:[%s14 + $0xc] sm:$0xf]
        %v4701 = vunpack.c.l.b16 %v4693
        %v4702 = vunpack.c.l.b16 %v4694
        %v4703 = vunpack.c.l.b16 %v4695
        %v4704 = vunpack.c.l.b16 %v4696
        %v4705 = vpack.c.b16 %v4702, %v4701
        %v4706 = vpack.c.b16 %v4704, %v4703
        %v4710 = vsel %vm543, %v4689, 0
        %v4713 = vsel %vm543, %v4690, 0
        %v4716 = vsel %vm543, %v4691, 0
        %v4719 = vsel %vm543, %v4692, 0
        %4721 = vmatprep.subr.bf16.mxu0 0
        %4722 = vmatpush1.bf16.msra.mxu0 0
        %4723 = vmatprep.subr.bf16.mxu0 0
        %4724 = vmatpush1.bf16.msra.mxu0 0
        %4725 = vmatprep.subr.bf16.mxu0 0
        %4726 = vmatpush1.bf16.msra.mxu0 0
        %4727 = vmatprep.subr.bf16.mxu0 0
        %4728 = vmatpush1.bf16.msra.mxu0 0
        %4729 = vmatprep.subr.bf16.mxu0 0
        %4730 = vmatpush1.bf16.msra.mxu0 0
        %4731 = vmatprep.subr.bf16.mxu0 0
        %4732 = vmatpush1.bf16.msra.mxu0 0
        %4733 = vmatprep.subr.bf16.mxu0 0
        %4734 = vmatpush1.bf16.msra.mxu0 %v4706
        %4735 = vmatprep.subr.bf16.mxu0 0
        %4736 = vmatpush1.bf16.msra.mxu0 %v4705
        %4737 = vmatprep.subr.bf16.mxu0 0
        %4738 = vmatpush2.bf16.msra.mxu0 0
        %4739 = vmatprep.subr.bf16.mxu0 0
        %4740 = vmatpush2.bf16.msra.mxu0 0
        %4741 = vmatprep.subr.bf16.mxu0 0
        %4742 = vmatpush2.bf16.msra.mxu0 0
        %4743 = vmatprep.subr.bf16.mxu0 0
        %4744 = vmatpush2.bf16.msra.mxu0 0
        %4745 = vmatprep.subr.bf16.mxu0 0
        %4746 = vmatpush2.bf16.msra.mxu0 0
        %4747 = vmatprep.subr.bf16.mxu0 0
        %4748 = vmatpush2.bf16.msra.mxu0 0
        %4749 = vmatprep.subr.bf16.mxu0 0
        %4750 = vmatpush2.bf16.msra.mxu0 0
        %4751 = vmatprep.subr.bf16.mxu0 0
        %4752 = vmatpush2.bf16.msra.mxu0 0
        %4753 = vmatprep.mubr.bf16.mxu0 0
        %4754 = vmatmul.mubr.bf16.gmra.mxu0 %v4710
        %v4755 = vpop.f32.mrf.mxu0
        %v4756 = vadd.f32 0.0, %v4755
        %v4757 = vpop.f32.mrf.mxu0
        %v4758 = vpop.f32.mrf.mxu0
        %v4759 = vadd.f32 0.0, %v4758
        %v4760 = vpop.f32.mrf.mxu0
        %4761 = vmatprep.mubr.bf16.mxu0 0
        %4762 = vmatmul.mubr.bf16.gmra.mxu0 %v4713
        %v4763 = vpop.f32.mrf.mxu0
        %v4764 = vadd.f32 0.0, %v4763
        %v4765 = vpop.f32.mrf.mxu0
        %v4766 = vpop.f32.mrf.mxu0
        %v4767 = vadd.f32 0.0, %v4766
        %v4768 = vpop.f32.mrf.mxu0
        %4769 = vmatprep.mubr.bf16.mxu0 0
        %4770 = vmatmul.mubr.bf16.gmra.mxu0 %v4716
        %v4771 = vpop.f32.mrf.mxu0
        %v4772 = vadd.f32 0.0, %v4771
        %v4773 = vpop.f32.mrf.mxu0
        %v4774 = vpop.f32.mrf.mxu0
        %v4775 = vadd.f32 0.0, %v4774
        %v4776 = vpop.f32.mrf.mxu0
        %4777 = vmatprep.mubr.bf16.mxu0 0
        %4778 = vmatmul.mubr.bf16.gmra.mxu0 %v4719
        %v4779 = vpop.f32.mrf.mxu0
        %v4780 = vadd.f32 0.0, %v4779
        %v4781 = vpop.f32.mrf.mxu0
        %v4782 = vpop.f32.mrf.mxu0
        %v4783 = vadd.f32 0.0, %v4782
        %v4784 = vpop.f32.mrf.mxu0
        %4785 = vdwg.mxu0
        %v4786 = vadd.f32 %v4681, %v4756
        %v4787 = vadd.f32 %v4682, %v4759
        %v4788 = vadd.f32 %v4683, %v4764
        %v4789 = vadd.f32 %v4684, %v4767
        %v4790 = vadd.f32 %v4685, %v4772
        %v4791 = vadd.f32 %v4686, %v4775
        %v4792 = vadd.f32 %v4687, %v4780
        %v4793 = vadd.f32 %v4688, %v4783
        %v4794 = vld [vmem:[%s15] sm:$0x1]
        %v4796 = vlaneseq
        %v4797 = vshrl.u32 %v4796, 7
        %v4798 = vsub.s32 0, %v4797
        %v4799 = vrot.slane %v4794, %v4798
        %v4801 = vadd.f32 %v4786, %v4799
        %v4802 = vadd.f32 %v4787, %v4799
        %v4803 = vadd.f32 %v4788, %v4799
        %v4804 = vadd.f32 %v4789, %v4799
        %v4805 = vadd.f32 %v4790, %v4799
        %v4806 = vadd.f32 %v4791, %v4799
        %v4807 = vadd.f32 %v4792, %v4799
        %v4808 = vadd.f32 %v4793, %v4799
        %v4817 = vrot.slane %v4802, 7
        %vm4818 = vcmask 1041409
        %v4819 = vsel %vm4818, %v4817, %v4801
        %v4820 = vrot.slane %v4803, 6
        %vm4821 = vcmask 1042434
        %v4822 = vsel %vm4821, %v4820, %v4819
        %v4823 = vrot.slane %v4804, 5
        %vm4824 = vcmask 1043459
        %v4825 = vsel %vm4824, %v4823, %v4822
        %v4826 = vrot.slane %v4805, 4
        %vm4827 = vcmask 1044484
        %v4828 = vsel %vm4827, %v4826, %v4825
        %v4829 = vrot.slane %v4806, 3
        %vm4830 = vcmask 1045509
        %v4831 = vsel %vm4830, %v4829, %v4828
        %v4832 = vrot.slane %v4807, 2
        %vm4833 = vcmask 1046534
        %v4834 = vsel %vm4833, %v4832, %v4831
        %v4835 = vrot.slane %v4808, 1
        %vm4836 = vcmask 1047559
        %v4837 = vsel %vm4836, %v4835, %v4834
        %v4839 = vrot.slane %v4801, 1
        %v4840 = vsel %vm4818, %v4802, %v4839
        %v4841 = vrot.slane %v4803, 7
        %v4842 = vsel %vm4821, %v4841, %v4840
        %v4843 = vrot.slane %v4804, 6
        %v4844 = vsel %vm4824, %v4843, %v4842
        %v4845 = vrot.slane %v4805, 5
        %v4846 = vsel %vm4827, %v4845, %v4844
        %v4847 = vrot.slane %v4806, 4
        %v4848 = vsel %vm4830, %v4847, %v4846
        %v4849 = vrot.slane %v4807, 3
        %v4850 = vsel %vm4833, %v4849, %v4848
        %v4851 = vrot.slane %v4808, 2
        %v4852 = vsel %vm4836, %v4851, %v4850
        %4853 = vrot.lane.b32.xlu0 %v4852, 64
        %v4854 = vpop.permute.xlu0 %4853
        %v4856 = vrot.slane %v4801, 2
        %v4857 = vrot.slane %v4802, 1
        %v4858 = vsel %vm4818, %v4857, %v4856
        %v4859 = vsel %vm4821, %v4803, %v4858
        %v4860 = vrot.slane %v4804, 7
        %v4861 = vsel %vm4824, %v4860, %v4859
        %v4862 = vrot.slane %v4805, 6
        %v4863 = vsel %vm4827, %v4862, %v4861
        %v4864 = vrot.slane %v4806, 5
        %v4865 = vsel %vm4830, %v4864, %v4863
        %v4866 = vrot.slane %v4807, 4
        %v4867 = vsel %vm4833, %v4866, %v4865
        %v4868 = vrot.slane %v4808, 3
        %v4869 = vsel %vm4836, %v4868, %v4867
        %v4871 = vrot.slane %v4801, 3
        %v4872 = vrot.slane %v4802, 2
        %v4873 = vsel %vm4818, %v4872, %v4871
        %v4874 = vrot.slane %v4803, 1
        %v4875 = vsel %vm4821, %v4874, %v4873
        %v4876 = vsel %vm4824, %v4804, %v4875
        %v4877 = vrot.slane %v4805, 7
        %v4878 = vsel %vm4827, %v4877, %v4876
        %v4879 = vrot.slane %v4806, 6
        %v4880 = vsel %vm4830, %v4879, %v4878
        %v4881 = vrot.slane %v4807, 5
        %v4882 = vsel %vm4833, %v4881, %v4880
        %v4883 = vrot.slane %v4808, 4
        %v4884 = vsel %vm4836, %v4883, %v4882
        %4885 = vrot.lane.b32.xlu0 %v4884, 64
        %v4886 = vpop.permute.xlu0 %4885
        %v4888 = vrot.slane %v4801, 4
        %v4889 = vrot.slane %v4802, 3
        %v4890 = vsel %vm4818, %v4889, %v4888
        %v4891 = vrot.slane %v4803, 2
        %v4892 = vsel %vm4821, %v4891, %v4890
        %v4893 = vrot.slane %v4804, 1
        %v4894 = vsel %vm4824, %v4893, %v4892
        %v4895 = vsel %vm4827, %v4805, %v4894
        %v4896 = vrot.slane %v4806, 7
        %v4897 = vsel %vm4830, %v4896, %v4895
        %v4898 = vrot.slane %v4807, 6
        %v4899 = vsel %vm4833, %v4898, %v4897
        %v4900 = vrot.slane %v4808, 5
        %v4901 = vsel %vm4836, %v4900, %v4899
        %v4903 = vrot.slane %v4801, 5
        %v4904 = vrot.slane %v4802, 4
        %v4905 = vsel %vm4818, %v4904, %v4903
        %v4906 = vrot.slane %v4803, 3
        %v4907 = vsel %vm4821, %v4906, %v4905
        %v4908 = vrot.slane %v4804, 2
        %v4909 = vsel %vm4824, %v4908, %v4907
        %v4910 = vrot.slane %v4805, 1
        %v4911 = vsel %vm4827, %v4910, %v4909
        %v4912 = vsel %vm4830, %v4806, %v4911
        %v4913 = vrot.slane %v4807, 7
        %v4914 = vsel %vm4833, %v4913, %v4912
        %v4915 = vrot.slane %v4808, 6
        %v4916 = vsel %vm4836, %v4915, %v4914
        %4917 = vrot.lane.b32.xlu0 %v4916, 64
        %v4918 = vpop.permute.xlu0 %4917
        %v4920 = vrot.slane %v4801, 6
        %v4921 = vrot.slane %v4802, 5
        %v4922 = vsel %vm4818, %v4921, %v4920
        %v4923 = vrot.slane %v4803, 4
        %v4924 = vsel %vm4821, %v4923, %v4922
        %v4925 = vrot.slane %v4804, 3
        %v4926 = vsel %vm4824, %v4925, %v4924
        %v4927 = vrot.slane %v4805, 2
        %v4928 = vsel %vm4827, %v4927, %v4926
        %v4929 = vrot.slane %v4806, 1
        %v4930 = vsel %vm4830, %v4929, %v4928
        %v4931 = vsel %vm4833, %v4807, %v4930
        %v4932 = vrot.slane %v4808, 7
        %v4933 = vsel %vm4836, %v4932, %v4931
        %v4935 = vrot.slane %v4801, 7
        %v4936 = vrot.slane %v4802, 6
        %v4937 = vsel %vm4818, %v4936, %v4935
        %v4938 = vrot.slane %v4803, 5
        %v4939 = vsel %vm4821, %v4938, %v4937
        %v4940 = vrot.slane %v4804, 4
        %v4941 = vsel %vm4824, %v4940, %v4939
        %v4942 = vrot.slane %v4805, 3
        %v4943 = vsel %vm4827, %v4942, %v4941
        %v4944 = vrot.slane %v4806, 2
        %v4945 = vsel %vm4830, %v4944, %v4943
        %v4946 = vrot.slane %v4807, 1
        %v4947 = vsel %vm4833, %v4946, %v4945
        %v4948 = vsel %vm4836, %v4808, %v4947
        %4949 = vrot.lane.b32.xlu0 %v4948, 64
        %v4950 = vpop.permute.xlu0 %4949
        %v4952 = vsel %vm2128, %v4837, %v4854
        %v4953 = vsel %vm2128, %v4869, %v4886
        %v4954 = vsel %vm2128, %v4901, %v4918
        %v4955 = vsel %vm2128, %v4933, %v4950
        %4956 = vst [vmem:[%s525] sm:$0xff] %v4952
        %4957 = vst [vmem:[%s525 + $0x8] sm:$0xff] %v4953
        %4958 = vst [vmem:[%s525 + $0x10] sm:$0xff] %v4954
        %4959 = vst [vmem:[%s525 + $0x18] sm:$0xff] %v4955
        %s4960 = sand.u32 %s384, 1
        %s4961 = scalar_lea.sflag [#allocation5], %s4960
        %s4962 = sand.u32 %s384, 1
        %s4963 = smul.addr %s4962, 32
        %s4964 = scalar_lea.vmem [#allocation4], %s4963
        // Predicated region
        $region85: #{tpu_custom_call.1} parent=83 // pred_check
          %p4965 = pneg %p394
        $region86: #{tpu_custom_call.1} parent=83 // pred_check_branch
          %4967 = sbr.rel (%p4965) target = $region88
        $region87: #{tpu_custom_call.1} parent=83 // pred_region
          %s4969 = ssub.s32 512, 512
          %4970 = vsyncadd %s4961, %s4969
          %s4971 = smul.addr %s30, 4
          %s4972 = smul.addr %s4971, 128
          %s4973 = scalar_lea.hbm %s16, %s4972
          %s4975 = sshll.u32 %s4964, 4
          %s4976 = int_to_ptr.vmem [resolvable:$true] %s4975
          %4978 = dma.vmem_to_hbm [thread:$0]  %s4976, 512, %s4973, %s4961
        $region88: #{tpu_custom_call.1} parent=83 // pred_fallthru
          _
      $region84: #{tpu_custom_call.1} parent=5 // pred_fallthru
        _
      %p4979 = scmp.le.s32.totalorder 2, %s25
      // Predicated region
      $region89: #{tpu_custom_call.1} parent=5 // pred_check
        %p4980 = pneg %p4979
      $region90: #{tpu_custom_call.1} parent=5 // pred_check_branch
        %4982 = sbr.rel (%p4980) target = $region92
      $region91: #{tpu_custom_call.1} parent=5 // pred_region
        %s4983 = ssub.s32 %s25, 2
        // Predicated region
        $region93: #{tpu_custom_call.1} parent=91 // pred_check
          %p4984 = pneg %p400
        $region94: #{tpu_custom_call.1} parent=91 // pred_check_branch
          %4986 = sbr.rel (%p4984) target = $region96
        $region95: #{tpu_custom_call.1} parent=91 // pred_region
          %s4987 = sand.u32 %s385, 1
          %s4988 = scalar_lea.sflag [#allocation5], %s4987
          %s4989 = sand.u32 %s385, 1
          %s4990 = smul.addr %s4989, 32
          %s4991 = scalar_lea.vmem [#allocation4], %s4990
          %4992 = dma.done %s4988, 512
        $region96: #{tpu_custom_call.1} parent=91 // pred_fallthru
          _
      $region92: #{tpu_custom_call.1} parent=5 // pred_fallthru
        _
    $region6: #{tpu_custom_call.1} parent=1 // loop_footer
      %s29 = sadd.s32 1, %s25
    $region7: #{tpu_custom_call.1} parent=1 // loop_footer_branch
      %24 = sbr.rel target = $region3
    $region8: #{tpu_custom_call.1} parent=1 // loop_exit
      _
    %4993 = vsyncpa [#allocation5], 1
    %s4994 = scalar_lea.sflag [#allocation5], 1
    %4995 = vsyncpa %s4994, 1

</llo_original>
